<compile_context>
chip_gen: v5e
topology: v5e:2x2
jax: 0.10.0
libtpu: 0.0.40
codegen_flags: <defaults>
</compile_context>

<pallas_src>
import jax
import jax.numpy as jnp
from jax.experimental import pallas as pl
from jax.experimental.pallas import tpu as pltpu


def _round_up(n, m):
    return ((n + m - 1) // m) * m


def _make_tcn_kernel(dilations, kernel_size, d_real, pad, ln_eps):
    """Fused TCN kernel body. `dilations`, `kernel_size`, `pad` are static."""
    K = int(kernel_size)
    inv_d = 1.0 / float(d_real)   # LN stats over the REAL channel count

    def kernel(x_ref, wp_ref, bp_ref, w1_ref, b1_ref, w2_ref, b2_ref,
               g_ref, beta_ref, o_ref, pbuf):
        # Padded shapes seen here:
        #   x_ref: (1, S, Fp) bf16     wp_ref: (Fp, Dp) bf16   bp_ref: (1, Dp) f32
        #   w{1,2}_ref: (L, K*Dp, Dp) bf16   b{1,2}/g/beta_ref: (L, 1, Dp) f32
        #   o_ref: (1, S, Dp) f32      pbuf: (pad + S, Dp) bf16 scratch
        S = x_ref.shape[1]
        Dp = wp_ref.shape[1]

        # ---- input projection: one (S, Fp) @ (Fp, Dp) MXU matmul, f32 acc ----
        h = jnp.dot(x_ref[0], wp_ref[...],
                    preferred_element_type=jnp.float32) + bp_ref[...]   # (S, Dp) f32

        # Zero the left halo of the tap buffer once; it is never written again.
        pbuf[pl.ds(0, pad), :] = jnp.zeros((pad, Dp), jnp.bfloat16)

        def fused_causal_conv(inp_f32, w, b_row, dilation):
            # Write the conv input (bf16) into the zero-padded scratch, gather
            # the K dilated taps as static slices, and do ONE wide matmul:
            #   (S, K*Dp) @ (K*Dp, Dp)  with f32 accumulation.
            pbuf[pl.ds(pad, S), :] = inp_f32.astype(jnp.bfloat16)
            taps = [pbuf[pl.ds(pad - (K - 1 - k) * dilation, S), :]
                    for k in range(K)]
            slab = jnp.concatenate(taps, axis=1)              # (S, K*Dp) bf16
            return jnp.dot(slab, w,
                           preferred_element_type=jnp.float32) + b_row

        # ---- residual blocks (static python loop over layers) ----
        for i, dilation in enumerate(dilations):
            res = h
            y = jnp.maximum(
                fused_causal_conv(h, w1_ref[i], b1_ref[i], dilation), 0.0)
            # dropout: identity (eval mode)
            # TODO(synk): training-mode dropout (pltpu.prng_*) not implemented.
            z = fused_causal_conv(y, w2_ref[i], b2_ref[i], dilation)

            # LayerNorm over the real channel count, one-pass statistics.
            # Padded channels of z are exactly zero, so full-lane sums equal
            # real-channel sums; padded gamma/beta are zero so padded lanes
            # stay zero after the affine transform.
            mean = jnp.sum(z, axis=-1, keepdims=True) * inv_d
            ex2 = jnp.sum(z * z, axis=-1, keepdims=True) * inv_d
            var = jnp.maximum(ex2 - mean * mean, 0.0)
            zn = (z - mean) * jax.lax.rsqrt(var + ln_eps) * g_ref[i] + beta_ref[i]
            h = jnp.maximum(zn + res, 0.0)                    # residual + ReLU

        o_ref[0] = h.astype(o_ref.dtype)

    return kernel


def tcn_encoder_pallas(x, params, dilations, *, ln_eps=1e-5):
    """x: (B, S, F) float32.  Returns (B, S, D) float32 (eval-mode forward)."""
    wp, bp, w1, b1, w2, b2, gamma, beta = params
    B, S, F = x.shape
    D = wp.shape[1]
    L, K = int(w1.shape[0]), int(w1.shape[1])
    dilations = tuple(int(d) for d in dilations)
    assert len(dilations) == L

    # ---- lane/sublane-dense padding (layout plumbing only) ----
    Fp = _round_up(F, 128)
    Dp = _round_up(D, 128)
    Sp = _round_up(S, 8)
    pad = _round_up((K - 1) * max(dilations), 16)   # left halo for dilated taps

    def pad_to(a, shape):
        return jnp.zeros(shape, a.dtype).at[
            tuple(slice(0, s) for s in a.shape)].set(a)

    x_p = pad_to(x, (B, Sp, Fp)).astype(jnp.bfloat16)
    wp_p = pad_to(wp, (Fp, Dp)).astype(jnp.bfloat16)
    bp_p = pad_to(bp, (1, Dp)).astype(jnp.float32)
    # conv weights: (L, K, Din, Dout) -> pad -> (L, K*Dp, Dp) for the fused tap matmul
    w1_p = pad_to(w1, (L, K, Dp, Dp)).reshape(L, K * Dp, Dp).astype(jnp.bfloat16)
    w2_p = pad_to(w2, (L, K, Dp, Dp)).reshape(L, K * Dp, Dp).astype(jnp.bfloat16)
    b1_p = pad_to(b1, (L, 1, Dp)).astype(jnp.float32)
    b2_p = pad_to(b2, (L, 1, Dp)).astype(jnp.float32)
    g_p = pad_to(gamma, (L, 1, Dp)).astype(jnp.float32)   # padded gamma == 0
    bt_p = pad_to(beta, (L, 1, Dp)).astype(jnp.float32)   # padded beta  == 0

    kernel = _make_tcn_kernel(dilations, K, D, pad, ln_eps)

    # Explicit scoped-VMEM budget: single-buffered weights + double-buffered
    # x/out blocks + tap scratch + live activation slabs, with headroom.
    bytes_weights = 2 * (Fp * Dp + 2 * L * K * Dp * Dp) + 4 * Dp * (4 * L + 1)
    bytes_io = 2 * (Sp * Fp * 2) + 2 * (Sp * Dp * 4)
    bytes_scratch = (pad + Sp) * Dp * 2
    bytes_act = 8 * Sp * Dp * 4
    est = int(1.5 * (bytes_weights + bytes_io + bytes_scratch + bytes_act)) + (4 << 20)
    vmem_limit = int(min(max(est, 32 << 20), 96 << 20))

    # TODO(synk): for very long sequences, add a second "parallel" grid axis
    # tiling S with a full-receptive-field left halo (1 + 2*(K-1)*sum(dilations))
    # to bound VMEM / vreg pressure and keep both v7x TensorCores busy.

    def run(single_buffer_weights):
        def cspec(shape):
            idx = (lambda b, _n=len(shape): (0,) * _n)
            if single_buffer_weights:
                # grid-invariant params: single-buffer (halves their VMEM footprint)
                return pl.BlockSpec(shape, idx, pipeline_mode=pl.Buffered(1))
            return pl.BlockSpec(shape, idx)

        grid_spec = pltpu.PrefetchScalarGridSpec(
            num_scalar_prefetch=0,
            grid=(B,),
            in_specs=[
                pl.BlockSpec((1, Sp, Fp), lambda b: (b, 0, 0)),   # x
                cspec((Fp, Dp)),                                  # proj W
                cspec((1, Dp)),                                   # proj b
                cspec((L, K * Dp, Dp)),                           # conv1 W (fused)
                cspec((L, 1, Dp)),                                # conv1 b
                cspec((L, K * Dp, Dp)),                           # conv2 W (fused)
                cspec((L, 1, Dp)),                                # conv2 b
                cspec((L, 1, Dp)),                                # LN gamma
                cspec((L, 1, Dp)),                                # LN beta
            ],
            out_specs=pl.BlockSpec((1, Sp, Dp), lambda b: (b, 0, 0)),
            scratch_shapes=[pltpu.VMEM((pad + Sp, Dp), jnp.bfloat16)],
        )
        return pl.pallas_call(
            kernel,
            grid_spec=grid_spec,
            out_shape=jax.ShapeDtypeStruct((B, Sp, Dp), jnp.float32),
            compiler_params=pltpu.CompilerParams(
                dimension_semantics=("parallel",),
                vmem_limit_bytes=vmem_limit),
        )(x_p, wp_p, bp_p, w1_p, b1_p, w2_p, b2_p, g_p, bt_p)

    try:
        out = run(True)
    except Exception:
        # Fallback if pl.Buffered(1) single-buffering is rejected by this jax.
        out = run(False)

    return out[:, :S, :D]


def tcn_encoder_ref(x, params, dilations, ln_eps=1e-5, mxu_bf16=False):
    """Pure-JAX reference mirroring the PyTorch forward (eval mode).

    mxu_bf16=True mirrors the kernel's bf16-operand / f32-accumulate matmuls
    for a tight numerical comparison; False is full-f32 PyTorch semantics."""
    wp, bp, w1, b1, w2, b2, gamma, beta = params

    def mm(a, w):
        if mxu_bf16:
            a = a.astype(jnp.bfloat16)
            w = w.astype(jnp.bfloat16)
        return jnp.einsum('bsf,fd->bsd', a, w,
                          preferred_element_type=jnp.float32)

    h = mm(x, wp) + bp
    B, S, D = h.shape

    def causal_conv(inp, w, b, d):
        K = w.shape[0]
        out = jnp.broadcast_to(b, (B, S, w.shape[2])).astype(jnp.float32)
        for k in range(K):
            shift = (K - 1 - k) * d
            sh = inp if shift == 0 else jnp.concatenate(
                [jnp.zeros_like(inp[:, :shift]), inp[:, :S - shift]], axis=1)
            out = out + mm(sh, w[k])
        return out

    for i, d in enumerate(dilations):
        res = h
        y = jax.nn.relu(causal_conv(h, w1[i], b1[i], d))
        z = causal_conv(y, w2[i], b2[i], d)
        mean = jnp.mean(z, axis=-1, keepdims=True)
        var = jnp.mean((z - mean) ** 2, axis=-1, keepdims=True)
        z = (z - mean) * jax.lax.rsqrt(var + ln_eps) * gamma[i] + beta[i]
        h = jax.nn.relu(z + res)
    return h


def init_params(key, input_size, d_model, num_layers, kernel_size):
    """Deterministic synthetic parameters (shapes match the PyTorch module)."""
    ks = jax.random.split(key, 6)
    scale = 0.1
    wp = scale * jax.random.normal(ks[0], (input_size, d_model), jnp.float32)
    bp = scale * jax.random.normal(ks[1], (1, d_model), jnp.float32)
    # PyTorch Conv1d weights are (out, in, K); stored here as (L, K, in, out).
    w1 = scale * jax.random.normal(
        ks[2], (num_layers, kernel_size, d_model, d_model), jnp.float32)
    b1 = scale * jax.random.normal(ks[3], (num_layers, 1, d_model), jnp.float32)
    w2 = scale * jax.random.normal(
        ks[4], (num_layers, kernel_size, d_model, d_model), jnp.float32)
    b2 = scale * jax.random.normal(ks[5], (num_layers, 1, d_model), jnp.float32)
    gamma = jnp.ones((num_layers, 1, d_model), jnp.float32)
    beta = jnp.zeros((num_layers, 1, d_model), jnp.float32)
    return (wp, bp, w1, b1, w2, b2, gamma, beta)


if __name__ == "__main__":
    batch, seq_len, input_size = 2, 16, 8
    d_model, num_layers, kernel_size = 32, 2, 3
    dilations = tuple(2 ** i for i in range(num_layers))   # (1, 2)

    key = jax.random.PRNGKey(0)
    kx, kp = jax.random.split(key)
    x = jax.random.normal(kx, (batch, seq_len, input_size), jnp.float32)
    params = init_params(kp, input_size, d_model, num_layers, kernel_size)

    out = tcn_encoder_pallas(x, params, dilations)
    out = jax.block_until_ready(out)
    assert out.shape == (batch, seq_len, d_model)

    # Tight check vs a reference that mirrors the kernel's bf16 MXU operands.
    ref_bf16 = tcn_encoder_ref(x, params, dilations, mxu_bf16=True)
    assert jnp.allclose(out, ref_bf16, rtol=2e-3, atol=2e-3), "mismatch (bf16 ref)"

    # Semantic check vs full-f32 PyTorch-equivalent math (bf16-MXU tolerance).
    ref_f32 = tcn_encoder_ref(x, params, dilations, mxu_bf16=False)
    assert jnp.allclose(out, ref_f32, rtol=1e-1, atol=1e-1), "mismatch (f32 ref)"

    print("KERNEL_OK")
</pallas_src>

<mosaic_0001>
module attributes {stable_mosaic.version = 11 : i64} {
  func.func @kernel(%arg0: i32, %arg1: memref<1x16x128xbf16, #tpu.memory_space<vmem>>, %arg2: memref<128x128xbf16, #tpu.memory_space<vmem>>, %arg3: memref<1x128xf32, #tpu.memory_space<vmem>>, %arg4: memref<2x384x128xbf16, #tpu.memory_space<vmem>>, %arg5: memref<2x1x128xf32, #tpu.memory_space<vmem>>, %arg6: memref<2x384x128xbf16, #tpu.memory_space<vmem>>, %arg7: memref<2x1x128xf32, #tpu.memory_space<vmem>>, %arg8: memref<2x1x128xf32, #tpu.memory_space<vmem>>, %arg9: memref<2x1x128xf32, #tpu.memory_space<vmem>>, %arg10: memref<1x16x128xf32, #tpu.memory_space<vmem>>, %arg11: memref<32x128xbf16, #tpu.memory_space<vmem>>) attributes {dimension_semantics = [#tpu.dimension_semantics<parallel>], iteration_bounds = array<i64: 2>, scalar_prefetch = 0 : i64, scratch_operands = 1 : i64, tpu.core_type = #tpu.core_type<tc>, window_params = [{transform_indices = @transform_0, window_bounds = array<i64: 1, 16, 128>}, {pipeline_mode = #tpu.pipeline_mode<synchronous>, transform_indices = @transform_1, window_bounds = array<i64: 128, 128>}, {pipeline_mode = #tpu.pipeline_mode<synchronous>, transform_indices = @transform_2, window_bounds = array<i64: 1, 128>}, {pipeline_mode = #tpu.pipeline_mode<synchronous>, transform_indices = @transform_3, window_bounds = array<i64: 2, 384, 128>}, {pipeline_mode = #tpu.pipeline_mode<synchronous>, transform_indices = @transform_4, window_bounds = array<i64: 2, 1, 128>}, {pipeline_mode = #tpu.pipeline_mode<synchronous>, transform_indices = @transform_5, window_bounds = array<i64: 2, 384, 128>}, {pipeline_mode = #tpu.pipeline_mode<synchronous>, transform_indices = @transform_6, window_bounds = array<i64: 2, 1, 128>}, {pipeline_mode = #tpu.pipeline_mode<synchronous>, transform_indices = @transform_7, window_bounds = array<i64: 2, 1, 128>}, {pipeline_mode = #tpu.pipeline_mode<synchronous>, transform_indices = @transform_8, window_bounds = array<i64: 2, 1, 128>}, {transform_indices = @transform_9, window_bounds = array<i64: 1, 16, 128>}]} {
    %c0 = arith.constant 0 : index
    %c0_0 = arith.constant 0 : index
    %c0_1 = arith.constant 0 : index
    %0 = vector.load %arg1[%c0, %c0_0, %c0_1] : memref<1x16x128xbf16, #tpu.memory_space<vmem>>, vector<1x16x128xbf16>
    %1 = vector.shape_cast %0 : vector<1x16x128xbf16> to vector<16x128xbf16>
    %c0_2 = arith.constant 0 : index
    %c0_3 = arith.constant 0 : index
    %2 = vector.load %arg2[%c0_2, %c0_3] : memref<128x128xbf16, #tpu.memory_space<vmem>>, vector<128x128xbf16>
    %cst = arith.constant dense<0.000000e+00> : vector<16x128xf32>
    %3 = tpu.matmul %1, %2, %cst {dimension_numbers = #tpu.dot_dimension_numbers<[1], [0], [0], [1], [0, 0, 1, 1], [], []>} : vector<16x128xbf16>, vector<128x128xbf16>, vector<16x128xf32> -> vector<16x128xf32>
    %c0_4 = arith.constant 0 : index
    %c0_5 = arith.constant 0 : index
    %4 = vector.load %arg3[%c0_4, %c0_5] : memref<1x128xf32, #tpu.memory_space<vmem>>, vector<1x128xf32>
    %5 = vector.broadcast %4 : vector<1x128xf32> to vector<16x128xf32>
    %6 = arith.addf %3, %5 : vector<16x128xf32>
    %cst_6 = arith.constant 0.000000e+00 : bf16
    %7 = vector.broadcast %cst_6 : bf16 to vector<16x128xbf16>
    %c0_7 = arith.constant 0 : index
    %c0_8 = arith.constant 0 : index
    %8 = vector.load %arg11[%c0_7, %c0_8] : memref<32x128xbf16, #tpu.memory_space<vmem>>, vector<16x128xbf16>
    tpu.vector_store %arg11[%c0_7, %c0_8], %7 {strides = array<i32>} : memref<32x128xbf16, #tpu.memory_space<vmem>>, vector<16x128xbf16>,
    %c0_9 = arith.constant 0 : index
    %c0_10 = arith.constant 0 : index
    %c0_11 = arith.constant 0 : index
    %9 = vector.load %arg4[%c0_9, %c0_10, %c0_11] : memref<2x384x128xbf16, #tpu.memory_space<vmem>>, vector<1x384x128xbf16>
    %10 = vector.shape_cast %9 : vector<1x384x128xbf16> to vector<384x128xbf16>
    %c0_12 = arith.constant 0 : index
    %c0_13 = arith.constant 0 : index
    %c0_14 = arith.constant 0 : index
    %11 = vector.load %arg5[%c0_12, %c0_13, %c0_14] : memref<2x1x128xf32, #tpu.memory_space<vmem>>, vector<1x1x128xf32>
    %12 = vector.shape_cast %11 : vector<1x1x128xf32> to vector<1x128xf32>
    %13 = arith.truncf %6 : vector<16x128xf32> to vector<16x128xbf16>
    %c16 = arith.constant 16 : index
    %c0_15 = arith.constant 0 : index
    %14 = vector.load %arg11[%c16, %c0_15] : memref<32x128xbf16, #tpu.memory_space<vmem>>, vector<16x128xbf16>
    tpu.vector_store %arg11[%c16, %c0_15], %13 {strides = array<i32>} : memref<32x128xbf16, #tpu.memory_space<vmem>>, vector<16x128xbf16>,
    %c14 = arith.constant 14 : index
    %c0_16 = arith.constant 0 : index
    %15 = vector.load %arg11[%c14, %c0_16] : memref<32x128xbf16, #tpu.memory_space<vmem>>, vector<16x128xbf16>
    %c15 = arith.constant 15 : index
    %c0_17 = arith.constant 0 : index
    %16 = vector.load %arg11[%c15, %c0_17] : memref<32x128xbf16, #tpu.memory_space<vmem>>, vector<16x128xbf16>
    %c16_18 = arith.constant 16 : index
    %c0_19 = arith.constant 0 : index
    %17 = vector.load %arg11[%c16_18, %c0_19] : memref<32x128xbf16, #tpu.memory_space<vmem>>, vector<16x128xbf16>
    %18 = tpu.concatenate %15, %16, %17 in 1 : vector<16x128xbf16>, vector<16x128xbf16>, vector<16x128xbf16> -> vector<16x384xbf16>
    %cst_20 = arith.constant dense<0.000000e+00> : vector<16x128xf32>
    %19 = tpu.matmul %18, %10, %cst_20 {dimension_numbers = #tpu.dot_dimension_numbers<[1], [0], [0], [1], [0, 0, 1, 1], [], []>} : vector<16x384xbf16>, vector<384x128xbf16>, vector<16x128xf32> -> vector<16x128xf32>
    %20 = vector.broadcast %12 : vector<1x128xf32> to vector<16x128xf32>
    %21 = arith.addf %19, %20 : vector<16x128xf32>
    %cst_21 = arith.constant 0.000000e+00 : f32
    %22 = vector.broadcast %cst_21 : f32 to vector<16x128xf32>
    %23 = arith.maximumf %21, %22 : vector<16x128xf32>
    %c0_22 = arith.constant 0 : index
    %c0_23 = arith.constant 0 : index
    %c0_24 = arith.constant 0 : index
    %24 = vector.load %arg6[%c0_22, %c0_23, %c0_24] : memref<2x384x128xbf16, #tpu.memory_space<vmem>>, vector<1x384x128xbf16>
    %25 = vector.shape_cast %24 : vector<1x384x128xbf16> to vector<384x128xbf16>
    %c0_25 = arith.constant 0 : index
    %c0_26 = arith.constant 0 : index
    %c0_27 = arith.constant 0 : index
    %26 = vector.load %arg7[%c0_25, %c0_26, %c0_27] : memref<2x1x128xf32, #tpu.memory_space<vmem>>, vector<1x1x128xf32>
    %27 = vector.shape_cast %26 : vector<1x1x128xf32> to vector<1x128xf32>
    %28 = arith.truncf %23 : vector<16x128xf32> to vector<16x128xbf16>
    %c16_28 = arith.constant 16 : index
    %c0_29 = arith.constant 0 : index
    %29 = vector.load %arg11[%c16_28, %c0_29] : memref<32x128xbf16, #tpu.memory_space<vmem>>, vector<16x128xbf16>
    tpu.vector_store %arg11[%c16_28, %c0_29], %28 {strides = array<i32>} : memref<32x128xbf16, #tpu.memory_space<vmem>>, vector<16x128xbf16>,
    %c14_30 = arith.constant 14 : index
    %c0_31 = arith.constant 0 : index
    %30 = vector.load %arg11[%c14_30, %c0_31] : memref<32x128xbf16, #tpu.memory_space<vmem>>, vector<16x128xbf16>
    %c15_32 = arith.constant 15 : index
    %c0_33 = arith.constant 0 : index
    %31 = vector.load %arg11[%c15_32, %c0_33] : memref<32x128xbf16, #tpu.memory_space<vmem>>, vector<16x128xbf16>
    %c16_34 = arith.constant 16 : index
    %c0_35 = arith.constant 0 : index
    %32 = vector.load %arg11[%c16_34, %c0_35] : memref<32x128xbf16, #tpu.memory_space<vmem>>, vector<16x128xbf16>
    %33 = tpu.concatenate %30, %31, %32 in 1 : vector<16x128xbf16>, vector<16x128xbf16>, vector<16x128xbf16> -> vector<16x384xbf16>
    %cst_36 = arith.constant dense<0.000000e+00> : vector<16x128xf32>
    %34 = tpu.matmul %33, %25, %cst_36 {dimension_numbers = #tpu.dot_dimension_numbers<[1], [0], [0], [1], [0, 0, 1, 1], [], []>} : vector<16x384xbf16>, vector<384x128xbf16>, vector<16x128xf32> -> vector<16x128xf32>
    %35 = vector.broadcast %27 : vector<1x128xf32> to vector<16x128xf32>
    %36 = arith.addf %34, %35 : vector<16x128xf32>
    %cst_37 = arith.constant dense<0.000000e+00> : vector<16xf32>
    %37 = vector.multi_reduction <add>, %36, %cst_37 [1] : vector<16x128xf32> to vector<16xf32>
    %38 = vector.shape_cast %37 : vector<16xf32> to vector<16x1xf32>
    %cst_38 = arith.constant 3.125000e-02 : f32
    %39 = vector.broadcast %cst_38 : f32 to vector<16x1xf32>
    %40 = arith.mulf %38, %39 : vector<16x1xf32>
    %41 = arith.mulf %36, %36 : vector<16x128xf32>
    %cst_39 = arith.constant dense<0.000000e+00> : vector<16xf32>
    %42 = vector.multi_reduction <add>, %41, %cst_39 [1] : vector<16x128xf32> to vector<16xf32>
    %43 = vector.shape_cast %42 : vector<16xf32> to vector<16x1xf32>
    %cst_40 = arith.constant 3.125000e-02 : f32
    %44 = vector.broadcast %cst_40 : f32 to vector<16x1xf32>
    %45 = arith.mulf %43, %44 : vector<16x1xf32>
    %46 = arith.mulf %40, %40 : vector<16x1xf32>
    %47 = arith.subf %45, %46 : vector<16x1xf32>
    %cst_41 = arith.constant 0.000000e+00 : f32
    %48 = vector.broadcast %cst_41 : f32 to vector<16x1xf32>
    %49 = arith.maximumf %47, %48 : vector<16x1xf32>
    %50 = vector.broadcast %40 : vector<16x1xf32> to vector<16x128xf32>
    %51 = arith.subf %36, %50 : vector<16x128xf32>
    %cst_42 = arith.constant 9.99999974E-6 : f32
    %52 = vector.broadcast %cst_42 : f32 to vector<16x1xf32>
    %53 = arith.addf %49, %52 : vector<16x1xf32>
    %54 = math.rsqrt %53 : vector<16x1xf32>
    %55 = vector.broadcast %54 : vector<16x1xf32> to vector<16x128xf32>
    %56 = arith.mulf %51, %55 : vector<16x128xf32>
    %c0_43 = arith.constant 0 : index
    %c0_44 = arith.constant 0 : index
    %c0_45 = arith.constant 0 : index
    %57 = vector.load %arg8[%c0_43, %c0_44, %c0_45] : memref<2x1x128xf32, #tpu.memory_space<vmem>>, vector<1x1x128xf32>
    %58 = vector.shape_cast %57 : vector<1x1x128xf32> to vector<1x128xf32>
    %59 = vector.broadcast %58 : vector<1x128xf32> to vector<16x128xf32>
    %60 = arith.mulf %56, %59 : vector<16x128xf32>
    %c0_46 = arith.constant 0 : index
    %c0_47 = arith.constant 0 : index
    %c0_48 = arith.constant 0 : index
    %61 = vector.load %arg9[%c0_46, %c0_47, %c0_48] : memref<2x1x128xf32, #tpu.memory_space<vmem>>, vector<1x1x128xf32>
    %62 = vector.shape_cast %61 : vector<1x1x128xf32> to vector<1x128xf32>
    %63 = vector.broadcast %62 : vector<1x128xf32> to vector<16x128xf32>
    %64 = arith.addf %60, %63 : vector<16x128xf32>
    %65 = arith.addf %64, %6 : vector<16x128xf32>
    %cst_49 = arith.constant 0.000000e+00 : f32
    %66 = vector.broadcast %cst_49 : f32 to vector<16x128xf32>
    %67 = arith.maximumf %65, %66 : vector<16x128xf32>
    %c1 = arith.constant 1 : index
    %c0_50 = arith.constant 0 : index
    %c0_51 = arith.constant 0 : index
    %68 = vector.load %arg4[%c1, %c0_50, %c0_51] : memref<2x384x128xbf16, #tpu.memory_space<vmem>>, vector<1x384x128xbf16>
    %69 = vector.shape_cast %68 : vector<1x384x128xbf16> to vector<384x128xbf16>
    %c1_52 = arith.constant 1 : index
    %c0_53 = arith.constant 0 : index
    %c0_54 = arith.constant 0 : index
    %70 = vector.load %arg5[%c1_52, %c0_53, %c0_54] : memref<2x1x128xf32, #tpu.memory_space<vmem>>, vector<1x1x128xf32>
    %71 = vector.shape_cast %70 : vector<1x1x128xf32> to vector<1x128xf32>
    %72 = arith.truncf %67 : vector<16x128xf32> to vector<16x128xbf16>
    %c16_55 = arith.constant 16 : index
    %c0_56 = arith.constant 0 : index
    %73 = vector.load %arg11[%c16_55, %c0_56] : memref<32x128xbf16, #tpu.memory_space<vmem>>, vector<16x128xbf16>
    tpu.vector_store %arg11[%c16_55, %c0_56], %72 {strides = array<i32>} : memref<32x128xbf16, #tpu.memory_space<vmem>>, vector<16x128xbf16>,
    %c12 = arith.constant 12 : index
    %c0_57 = arith.constant 0 : index
    %74 = vector.load %arg11[%c12, %c0_57] : memref<32x128xbf16, #tpu.memory_space<vmem>>, vector<16x128xbf16>
    %c14_58 = arith.constant 14 : index
    %c0_59 = arith.constant 0 : index
    %75 = vector.load %arg11[%c14_58, %c0_59] : memref<32x128xbf16, #tpu.memory_space<vmem>>, vector<16x128xbf16>
    %c16_60 = arith.constant 16 : index
    %c0_61 = arith.constant 0 : index
    %76 = vector.load %arg11[%c16_60, %c0_61] : memref<32x128xbf16, #tpu.memory_space<vmem>>, vector<16x128xbf16>
    %77 = tpu.concatenate %74, %75, %76 in 1 : vector<16x128xbf16>, vector<16x128xbf16>, vector<16x128xbf16> -> vector<16x384xbf16>
    %cst_62 = arith.constant dense<0.000000e+00> : vector<16x128xf32>
    %78 = tpu.matmul %77, %69, %cst_62 {dimension_numbers = #tpu.dot_dimension_numbers<[1], [0], [0], [1], [0, 0, 1, 1], [], []>} : vector<16x384xbf16>, vector<384x128xbf16>, vector<16x128xf32> -> vector<16x128xf32>
    %79 = vector.broadcast %71 : vector<1x128xf32> to vector<16x128xf32>
    %80 = arith.addf %78, %79 : vector<16x128xf32>
    %cst_63 = arith.constant 0.000000e+00 : f32
    %81 = vector.broadcast %cst_63 : f32 to vector<16x128xf32>
    %82 = arith.maximumf %80, %81 : vector<16x128xf32>
    %c1_64 = arith.constant 1 : index
    %c0_65 = arith.constant 0 : index
    %c0_66 = arith.constant 0 : index
    %83 = vector.load %arg6[%c1_64, %c0_65, %c0_66] : memref<2x384x128xbf16, #tpu.memory_space<vmem>>, vector<1x384x128xbf16>
    %84 = vector.shape_cast %83 : vector<1x384x128xbf16> to vector<384x128xbf16>
    %c1_67 = arith.constant 1 : index
    %c0_68 = arith.constant 0 : index
    %c0_69 = arith.constant 0 : index
    %85 = vector.load %arg7[%c1_67, %c0_68, %c0_69] : memref<2x1x128xf32, #tpu.memory_space<vmem>>, vector<1x1x128xf32>
    %86 = vector.shape_cast %85 : vector<1x1x128xf32> to vector<1x128xf32>
    %87 = arith.truncf %82 : vector<16x128xf32> to vector<16x128xbf16>
    %c16_70 = arith.constant 16 : index
    %c0_71 = arith.constant 0 : index
    %88 = vector.load %arg11[%c16_70, %c0_71] : memref<32x128xbf16, #tpu.memory_space<vmem>>, vector<16x128xbf16>
    tpu.vector_store %arg11[%c16_70, %c0_71], %87 {strides = array<i32>} : memref<32x128xbf16, #tpu.memory_space<vmem>>, vector<16x128xbf16>,
    %c12_72 = arith.constant 12 : index
    %c0_73 = arith.constant 0 : index
    %89 = vector.load %arg11[%c12_72, %c0_73] : memref<32x128xbf16, #tpu.memory_space<vmem>>, vector<16x128xbf16>
    %c14_74 = arith.constant 14 : index
    %c0_75 = arith.constant 0 : index
    %90 = vector.load %arg11[%c14_74, %c0_75] : memref<32x128xbf16, #tpu.memory_space<vmem>>, vector<16x128xbf16>
    %c16_76 = arith.constant 16 : index
    %c0_77 = arith.constant 0 : index
    %91 = vector.load %arg11[%c16_76, %c0_77] : memref<32x128xbf16, #tpu.memory_space<vmem>>, vector<16x128xbf16>
    %92 = tpu.concatenate %89, %90, %91 in 1 : vector<16x128xbf16>, vector<16x128xbf16>, vector<16x128xbf16> -> vector<16x384xbf16>
    %cst_78 = arith.constant dense<0.000000e+00> : vector<16x128xf32>
    %93 = tpu.matmul %92, %84, %cst_78 {dimension_numbers = #tpu.dot_dimension_numbers<[1], [0], [0], [1], [0, 0, 1, 1], [], []>} : vector<16x384xbf16>, vector<384x128xbf16>, vector<16x128xf32> -> vector<16x128xf32>
    %94 = vector.broadcast %86 : vector<1x128xf32> to vector<16x128xf32>
    %95 = arith.addf %93, %94 : vector<16x128xf32>
    %cst_79 = arith.constant dense<0.000000e+00> : vector<16xf32>
    %96 = vector.multi_reduction <add>, %95, %cst_79 [1] : vector<16x128xf32> to vector<16xf32>
    %97 = vector.shape_cast %96 : vector<16xf32> to vector<16x1xf32>
    %cst_80 = arith.constant 3.125000e-02 : f32
    %98 = vector.broadcast %cst_80 : f32 to vector<16x1xf32>
    %99 = arith.mulf %97, %98 : vector<16x1xf32>
    %100 = arith.mulf %95, %95 : vector<16x128xf32>
    %cst_81 = arith.constant dense<0.000000e+00> : vector<16xf32>
    %101 = vector.multi_reduction <add>, %100, %cst_81 [1] : vector<16x128xf32> to vector<16xf32>
    %102 = vector.shape_cast %101 : vector<16xf32> to vector<16x1xf32>
    %cst_82 = arith.constant 3.125000e-02 : f32
    %103 = vector.broadcast %cst_82 : f32 to vector<16x1xf32>
    %104 = arith.mulf %102, %103 : vector<16x1xf32>
    %105 = arith.mulf %99, %99 : vector<16x1xf32>
    %106 = arith.subf %104, %105 : vector<16x1xf32>
    %cst_83 = arith.constant 0.000000e+00 : f32
    %107 = vector.broadcast %cst_83 : f32 to vector<16x1xf32>
    %108 = arith.maximumf %106, %107 : vector<16x1xf32>
    %109 = vector.broadcast %99 : vector<16x1xf32> to vector<16x128xf32>
    %110 = arith.subf %95, %109 : vector<16x128xf32>
    %cst_84 = arith.constant 9.99999974E-6 : f32
    %111 = vector.broadcast %cst_84 : f32 to vector<16x1xf32>
    %112 = arith.addf %108, %111 : vector<16x1xf32>
    %113 = math.rsqrt %112 : vector<16x1xf32>
    %114 = vector.broadcast %113 : vector<16x1xf32> to vector<16x128xf32>
    %115 = arith.mulf %110, %114 : vector<16x128xf32>
    %c1_85 = arith.constant 1 : index
    %c0_86 = arith.constant 0 : index
    %c0_87 = arith.constant 0 : index
    %116 = vector.load %arg8[%c1_85, %c0_86, %c0_87] : memref<2x1x128xf32, #tpu.memory_space<vmem>>, vector<1x1x128xf32>
    %117 = vector.shape_cast %116 : vector<1x1x128xf32> to vector<1x128xf32>
    %118 = vector.broadcast %117 : vector<1x128xf32> to vector<16x128xf32>
    %119 = arith.mulf %115, %118 : vector<16x128xf32>
    %c1_88 = arith.constant 1 : index
    %c0_89 = arith.constant 0 : index
    %c0_90 = arith.constant 0 : index
    %120 = vector.load %arg9[%c1_88, %c0_89, %c0_90] : memref<2x1x128xf32, #tpu.memory_space<vmem>>, vector<1x1x128xf32>
    %121 = vector.shape_cast %120 : vector<1x1x128xf32> to vector<1x128xf32>
    %122 = vector.broadcast %121 : vector<1x128xf32> to vector<16x128xf32>
    %123 = arith.addf %119, %122 : vector<16x128xf32>
    %124 = arith.addf %123, %67 : vector<16x128xf32>
    %cst_91 = arith.constant 0.000000e+00 : f32
    %125 = vector.broadcast %cst_91 : f32 to vector<16x128xf32>
    %126 = arith.maximumf %124, %125 : vector<16x128xf32>
    %c0_92 = arith.constant 0 : index
    %c0_93 = arith.constant 0 : index
    %c0_94 = arith.constant 0 : index
    %127 = vector.load %arg10[%c0_92, %c0_93, %c0_94] : memref<1x16x128xf32, #tpu.memory_space<vmem>>, vector<1x16x128xf32>
    %128 = vector.shape_cast %127 : vector<1x16x128xf32> to vector<16x128xf32>
    %129 = vector.shape_cast %126 : vector<16x128xf32> to vector<1x16x128xf32>
    tpu.vector_store %arg10[%c0_92, %c0_93, %c0_94], %129 {strides = array<i32>} : memref<1x16x128xf32, #tpu.memory_space<vmem>>, vector<1x16x128xf32>,
    return
  }
  func.func @transform_0(%arg0: i32) -> (i32, i32, i32) {
    %c0_i32 = arith.constant 0 : i32
    %c0_i32_0 = arith.constant 0 : i32
    %c0_i32_1 = arith.constant 0 : i32
    return %arg0, %c0_i32, %c0_i32_0 : i32, i32, i32
  }
  func.func @transform_1(%arg0: i32) -> (i32, i32) {
    %c0_i32 = arith.constant 0 : i32
    %c0_i32_0 = arith.constant 0 : i32
    %c0_i32_1 = arith.constant 0 : i32
    return %c0_i32, %c0_i32_0 : i32, i32
  }
  func.func @transform_2(%arg0: i32) -> (i32, i32) {
    %c0_i32 = arith.constant 0 : i32
    %c0_i32_0 = arith.constant 0 : i32
    %c0_i32_1 = arith.constant 0 : i32
    return %c0_i32, %c0_i32_0 : i32, i32
  }
  func.func @transform_3(%arg0: i32) -> (i32, i32, i32) {
    %c0_i32 = arith.constant 0 : i32
    %c0_i32_0 = arith.constant 0 : i32
    %c0_i32_1 = arith.constant 0 : i32
    %c0_i32_2 = arith.constant 0 : i32
    return %c0_i32, %c0_i32_0, %c0_i32_1 : i32, i32, i32
  }
  func.func @transform_4(%arg0: i32) -> (i32, i32, i32) {
    %c0_i32 = arith.constant 0 : i32
    %c0_i32_0 = arith.constant 0 : i32
    %c0_i32_1 = arith.constant 0 : i32
    %c0_i32_2 = arith.constant 0 : i32
    return %c0_i32, %c0_i32_0, %c0_i32_1 : i32, i32, i32
  }
  func.func @transform_5(%arg0: i32) -> (i32, i32, i32) {
    %c0_i32 = arith.constant 0 : i32
    %c0_i32_0 = arith.constant 0 : i32
    %c0_i32_1 = arith.constant 0 : i32
    %c0_i32_2 = arith.constant 0 : i32
    return %c0_i32, %c0_i32_0, %c0_i32_1 : i32, i32, i32
  }
  func.func @transform_6(%arg0: i32) -> (i32, i32, i32) {
    %c0_i32 = arith.constant 0 : i32
    %c0_i32_0 = arith.constant 0 : i32
    %c0_i32_1 = arith.constant 0 : i32
    %c0_i32_2 = arith.constant 0 : i32
    return %c0_i32, %c0_i32_0, %c0_i32_1 : i32, i32, i32
  }
  func.func @transform_7(%arg0: i32) -> (i32, i32, i32) {
    %c0_i32 = arith.constant 0 : i32
    %c0_i32_0 = arith.constant 0 : i32
    %c0_i32_1 = arith.constant 0 : i32
    %c0_i32_2 = arith.constant 0 : i32
    return %c0_i32, %c0_i32_0, %c0_i32_1 : i32, i32, i32
  }
  func.func @transform_8(%arg0: i32) -> (i32, i32, i32) {
    %c0_i32 = arith.constant 0 : i32
    %c0_i32_0 = arith.constant 0 : i32
    %c0_i32_1 = arith.constant 0 : i32
    %c0_i32_2 = arith.constant 0 : i32
    return %c0_i32, %c0_i32_0, %c0_i32_1 : i32, i32, i32
  }
  func.func @transform_9(%arg0: i32) -> (i32, i32, i32) {
    %c0_i32 = arith.constant 0 : i32
    %c0_i32_0 = arith.constant 0 : i32
    %c0_i32_1 = arith.constant 0 : i32
    return %arg0, %c0_i32, %c0_i32_0 : i32, i32, i32
  }
}

module attributes {stable_mosaic.version = 11 : i64} {
  func.func @kernel(%arg0: i32, %arg1: memref<1x16x128xbf16, #tpu.memory_space<vmem>>, %arg2: memref<128x128xbf16, #tpu.memory_space<vmem>>, %arg3: memref<1x128xf32, #tpu.memory_space<vmem>>, %arg4: memref<2x384x128xbf16, #tpu.memory_space<vmem>>, %arg5: memref<2x1x128xf32, #tpu.memory_space<vmem>>, %arg6: memref<2x384x128xbf16, #tpu.memory_space<vmem>>, %arg7: memref<2x1x128xf32, #tpu.memory_space<vmem>>, %arg8: memref<2x1x128xf32, #tpu.memory_space<vmem>>, %arg9: memref<2x1x128xf32, #tpu.memory_space<vmem>>, %arg10: memref<1x16x128xf32, #tpu.memory_space<vmem>>, %arg11: memref<32x128xbf16, #tpu.memory_space<vmem>>) attributes {dimension_semantics = [#tpu.dimension_semantics<parallel>], iteration_bounds = array<i64: 2>, scalar_prefetch = 0 : i64, scratch_operands = 1 : i64, tpu.core_type = #tpu.core_type<tc>, window_params = [{transform_indices = @transform_0, window_bounds = array<i64: 1, 16, 128>}, {pipeline_mode = #tpu.pipeline_mode<synchronous>, transform_indices = @transform_1, window_bounds = array<i64: 128, 128>}, {pipeline_mode = #tpu.pipeline_mode<synchronous>, transform_indices = @transform_2, window_bounds = array<i64: 1, 128>}, {pipeline_mode = #tpu.pipeline_mode<synchronous>, transform_indices = @transform_3, window_bounds = array<i64: 2, 384, 128>}, {pipeline_mode = #tpu.pipeline_mode<synchronous>, transform_indices = @transform_4, window_bounds = array<i64: 2, 1, 128>}, {pipeline_mode = #tpu.pipeline_mode<synchronous>, transform_indices = @transform_5, window_bounds = array<i64: 2, 384, 128>}, {pipeline_mode = #tpu.pipeline_mode<synchronous>, transform_indices = @transform_6, window_bounds = array<i64: 2, 1, 128>}, {pipeline_mode = #tpu.pipeline_mode<synchronous>, transform_indices = @transform_7, window_bounds = array<i64: 2, 1, 128>}, {pipeline_mode = #tpu.pipeline_mode<synchronous>, transform_indices = @transform_8, window_bounds = array<i64: 2, 1, 128>}, {transform_indices = @transform_9, window_bounds = array<i64: 1, 16, 128>}]} {
    %c0 = arith.constant 0 : index
    %c0_0 = arith.constant 0 : index
    %c0_1 = arith.constant 0 : index
    %0 = vector.load %arg1[%c0, %c0_0, %c0_1] : memref<1x16x128xbf16, #tpu.memory_space<vmem>>, vector<1x16x128xbf16>
    %1 = vector.shape_cast %0 : vector<1x16x128xbf16> to vector<16x128xbf16>
    %c0_2 = arith.constant 0 : index
    %c0_3 = arith.constant 0 : index
    %2 = vector.load %arg2[%c0_2, %c0_3] : memref<128x128xbf16, #tpu.memory_space<vmem>>, vector<128x128xbf16>
    %cst = arith.constant dense<0.000000e+00> : vector<16x128xf32>
    %3 = tpu.matmul %1, %2, %cst {dimension_numbers = #tpu.dot_dimension_numbers<[1], [0], [0], [1], [0, 0, 1, 1], [], []>} : vector<16x128xbf16>, vector<128x128xbf16>, vector<16x128xf32> -> vector<16x128xf32>
    %c0_4 = arith.constant 0 : index
    %c0_5 = arith.constant 0 : index
    %4 = vector.load %arg3[%c0_4, %c0_5] : memref<1x128xf32, #tpu.memory_space<vmem>>, vector<1x128xf32>
    %5 = vector.broadcast %4 : vector<1x128xf32> to vector<16x128xf32>
    %6 = arith.addf %3, %5 : vector<16x128xf32>
    %cst_6 = arith.constant 0.000000e+00 : bf16
    %7 = vector.broadcast %cst_6 : bf16 to vector<16x128xbf16>
    %c0_7 = arith.constant 0 : index
    %c0_8 = arith.constant 0 : index
    %8 = vector.load %arg11[%c0_7, %c0_8] : memref<32x128xbf16, #tpu.memory_space<vmem>>, vector<16x128xbf16>
    tpu.vector_store %arg11[%c0_7, %c0_8], %7 {strides = array<i32>} : memref<32x128xbf16, #tpu.memory_space<vmem>>, vector<16x128xbf16>,
    %c0_9 = arith.constant 0 : index
    %c0_10 = arith.constant 0 : index
    %c0_11 = arith.constant 0 : index
    %9 = vector.load %arg4[%c0_9, %c0_10, %c0_11] : memref<2x384x128xbf16, #tpu.memory_space<vmem>>, vector<1x384x128xbf16>
    %10 = vector.shape_cast %9 : vector<1x384x128xbf16> to vector<384x128xbf16>
    %c0_12 = arith.constant 0 : index
    %c0_13 = arith.constant 0 : index
    %c0_14 = arith.constant 0 : index
    %11 = vector.load %arg5[%c0_12, %c0_13, %c0_14] : memref<2x1x128xf32, #tpu.memory_space<vmem>>, vector<1x1x128xf32>
    %12 = vector.shape_cast %11 : vector<1x1x128xf32> to vector<1x128xf32>
    %13 = arith.truncf %6 : vector<16x128xf32> to vector<16x128xbf16>
    %c16 = arith.constant 16 : index
    %c0_15 = arith.constant 0 : index
    %14 = vector.load %arg11[%c16, %c0_15] : memref<32x128xbf16, #tpu.memory_space<vmem>>, vector<16x128xbf16>
    tpu.vector_store %arg11[%c16, %c0_15], %13 {strides = array<i32>} : memref<32x128xbf16, #tpu.memory_space<vmem>>, vector<16x128xbf16>,
    %c14 = arith.constant 14 : index
    %c0_16 = arith.constant 0 : index
    %15 = vector.load %arg11[%c14, %c0_16] : memref<32x128xbf16, #tpu.memory_space<vmem>>, vector<16x128xbf16>
    %c15 = arith.constant 15 : index
    %c0_17 = arith.constant 0 : index
    %16 = vector.load %arg11[%c15, %c0_17] : memref<32x128xbf16, #tpu.memory_space<vmem>>, vector<16x128xbf16>
    %c16_18 = arith.constant 16 : index
    %c0_19 = arith.constant 0 : index
    %17 = vector.load %arg11[%c16_18, %c0_19] : memref<32x128xbf16, #tpu.memory_space<vmem>>, vector<16x128xbf16>
    %18 = tpu.concatenate %15, %16, %17 in 1 : vector<16x128xbf16>, vector<16x128xbf16>, vector<16x128xbf16> -> vector<16x384xbf16>
    %cst_20 = arith.constant dense<0.000000e+00> : vector<16x128xf32>
    %19 = tpu.matmul %18, %10, %cst_20 {dimension_numbers = #tpu.dot_dimension_numbers<[1], [0], [0], [1], [0, 0, 1, 1], [], []>} : vector<16x384xbf16>, vector<384x128xbf16>, vector<16x128xf32> -> vector<16x128xf32>
    %20 = vector.broadcast %12 : vector<1x128xf32> to vector<16x128xf32>
    %21 = arith.addf %19, %20 : vector<16x128xf32>
    %cst_21 = arith.constant 0.000000e+00 : f32
    %22 = vector.broadcast %cst_21 : f32 to vector<16x128xf32>
    %23 = arith.maximumf %21, %22 : vector<16x128xf32>
    %c0_22 = arith.constant 0 : index
    %c0_23 = arith.constant 0 : index
    %c0_24 = arith.constant 0 : index
    %24 = vector.load %arg6[%c0_22, %c0_23, %c0_24] : memref<2x384x128xbf16, #tpu.memory_space<vmem>>, vector<1x384x128xbf16>
    %25 = vector.shape_cast %24 : vector<1x384x128xbf16> to vector<384x128xbf16>
    %c0_25 = arith.constant 0 : index
    %c0_26 = arith.constant 0 : index
    %c0_27 = arith.constant 0 : index
    %26 = vector.load %arg7[%c0_25, %c0_26, %c0_27] : memref<2x1x128xf32, #tpu.memory_space<vmem>>, vector<1x1x128xf32>
    %27 = vector.shape_cast %26 : vector<1x1x128xf32> to vector<1x128xf32>
    %28 = arith.truncf %23 : vector<16x128xf32> to vector<16x128xbf16>
    %c16_28 = arith.constant 16 : index
    %c0_29 = arith.constant 0 : index
    %29 = vector.load %arg11[%c16_28, %c0_29] : memref<32x128xbf16, #tpu.memory_space<vmem>>, vector<16x128xbf16>
    tpu.vector_store %arg11[%c16_28, %c0_29], %28 {strides = array<i32>} : memref<32x128xbf16, #tpu.memory_space<vmem>>, vector<16x128xbf16>,
    %c14_30 = arith.constant 14 : index
    %c0_31 = arith.constant 0 : index
    %30 = vector.load %arg11[%c14_30, %c0_31] : memref<32x128xbf16, #tpu.memory_space<vmem>>, vector<16x128xbf16>
    %c15_32 = arith.constant 15 : index
    %c0_33 = arith.constant 0 : index
    %31 = vector.load %arg11[%c15_32, %c0_33] : memref<32x128xbf16, #tpu.memory_space<vmem>>, vector<16x128xbf16>
    %c16_34 = arith.constant 16 : index
    %c0_35 = arith.constant 0 : index
    %32 = vector.load %arg11[%c16_34, %c0_35] : memref<32x128xbf16, #tpu.memory_space<vmem>>, vector<16x128xbf16>
    %33 = tpu.concatenate %30, %31, %32 in 1 : vector<16x128xbf16>, vector<16x128xbf16>, vector<16x128xbf16> -> vector<16x384xbf16>
    %cst_36 = arith.constant dense<0.000000e+00> : vector<16x128xf32>
    %34 = tpu.matmul %33, %25, %cst_36 {dimension_numbers = #tpu.dot_dimension_numbers<[1], [0], [0], [1], [0, 0, 1, 1], [], []>} : vector<16x384xbf16>, vector<384x128xbf16>, vector<16x128xf32> -> vector<16x128xf32>
    %35 = vector.broadcast %27 : vector<1x128xf32> to vector<16x128xf32>
    %36 = arith.addf %34, %35 : vector<16x128xf32>
    %cst_37 = arith.constant dense<0.000000e+00> : vector<16xf32>
    %37 = vector.multi_reduction <add>, %36, %cst_37 [1] : vector<16x128xf32> to vector<16xf32>
    %38 = vector.shape_cast %37 : vector<16xf32> to vector<16x1xf32>
    %cst_38 = arith.constant 3.125000e-02 : f32
    %39 = vector.broadcast %cst_38 : f32 to vector<16x1xf32>
    %40 = arith.mulf %38, %39 : vector<16x1xf32>
    %41 = arith.mulf %36, %36 : vector<16x128xf32>
    %cst_39 = arith.constant dense<0.000000e+00> : vector<16xf32>
    %42 = vector.multi_reduction <add>, %41, %cst_39 [1] : vector<16x128xf32> to vector<16xf32>
    %43 = vector.shape_cast %42 : vector<16xf32> to vector<16x1xf32>
    %cst_40 = arith.constant 3.125000e-02 : f32
    %44 = vector.broadcast %cst_40 : f32 to vector<16x1xf32>
    %45 = arith.mulf %43, %44 : vector<16x1xf32>
    %46 = arith.mulf %40, %40 : vector<16x1xf32>
    %47 = arith.subf %45, %46 : vector<16x1xf32>
    %cst_41 = arith.constant 0.000000e+00 : f32
    %48 = vector.broadcast %cst_41 : f32 to vector<16x1xf32>
    %49 = arith.maximumf %47, %48 : vector<16x1xf32>
    %50 = vector.broadcast %40 : vector<16x1xf32> to vector<16x128xf32>
    %51 = arith.subf %36, %50 : vector<16x128xf32>
    %cst_42 = arith.constant 9.99999974E-6 : f32
    %52 = vector.broadcast %cst_42 : f32 to vector<16x1xf32>
    %53 = arith.addf %49, %52 : vector<16x1xf32>
    %54 = math.rsqrt %53 : vector<16x1xf32>
    %55 = vector.broadcast %54 : vector<16x1xf32> to vector<16x128xf32>
    %56 = arith.mulf %51, %55 : vector<16x128xf32>
    %c0_43 = arith.constant 0 : index
    %c0_44 = arith.constant 0 : index
    %c0_45 = arith.constant 0 : index
    %57 = vector.load %arg8[%c0_43, %c0_44, %c0_45] : memref<2x1x128xf32, #tpu.memory_space<vmem>>, vector<1x1x128xf32>
    %58 = vector.shape_cast %57 : vector<1x1x128xf32> to vector<1x128xf32>
    %59 = vector.broadcast %58 : vector<1x128xf32> to vector<16x128xf32>
    %60 = arith.mulf %56, %59 : vector<16x128xf32>
    %c0_46 = arith.constant 0 : index
    %c0_47 = arith.constant 0 : index
    %c0_48 = arith.constant 0 : index
    %61 = vector.load %arg9[%c0_46, %c0_47, %c0_48] : memref<2x1x128xf32, #tpu.memory_space<vmem>>, vector<1x1x128xf32>
    %62 = vector.shape_cast %61 : vector<1x1x128xf32> to vector<1x128xf32>
    %63 = vector.broadcast %62 : vector<1x128xf32> to vector<16x128xf32>
    %64 = arith.addf %60, %63 : vector<16x128xf32>
    %65 = arith.addf %64, %6 : vector<16x128xf32>
    %cst_49 = arith.constant 0.000000e+00 : f32
    %66 = vector.broadcast %cst_49 : f32 to vector<16x128xf32>
    %67 = arith.maximumf %65, %66 : vector<16x128xf32>
    %c1 = arith.constant 1 : index
    %c0_50 = arith.constant 0 : index
    %c0_51 = arith.constant 0 : index
    %68 = vector.load %arg4[%c1, %c0_50, %c0_51] : memref<2x384x128xbf16, #tpu.memory_space<vmem>>, vector<1x384x128xbf16>
    %69 = vector.shape_cast %68 : vector<1x384x128xbf16> to vector<384x128xbf16>
    %c1_52 = arith.constant 1 : index
    %c0_53 = arith.constant 0 : index
    %c0_54 = arith.constant 0 : index
    %70 = vector.load %arg5[%c1_52, %c0_53, %c0_54] : memref<2x1x128xf32, #tpu.memory_space<vmem>>, vector<1x1x128xf32>
    %71 = vector.shape_cast %70 : vector<1x1x128xf32> to vector<1x128xf32>
    %72 = arith.truncf %67 : vector<16x128xf32> to vector<16x128xbf16>
    %c16_55 = arith.constant 16 : index
    %c0_56 = arith.constant 0 : index
    %73 = vector.load %arg11[%c16_55, %c0_56] : memref<32x128xbf16, #tpu.memory_space<vmem>>, vector<16x128xbf16>
    tpu.vector_store %arg11[%c16_55, %c0_56], %72 {strides = array<i32>} : memref<32x128xbf16, #tpu.memory_space<vmem>>, vector<16x128xbf16>,
    %c12 = arith.constant 12 : index
    %c0_57 = arith.constant 0 : index
    %74 = vector.load %arg11[%c12, %c0_57] : memref<32x128xbf16, #tpu.memory_space<vmem>>, vector<16x128xbf16>
    %c14_58 = arith.constant 14 : index
    %c0_59 = arith.constant 0 : index
    %75 = vector.load %arg11[%c14_58, %c0_59] : memref<32x128xbf16, #tpu.memory_space<vmem>>, vector<16x128xbf16>
    %c16_60 = arith.constant 16 : index
    %c0_61 = arith.constant 0 : index
    %76 = vector.load %arg11[%c16_60, %c0_61] : memref<32x128xbf16, #tpu.memory_space<vmem>>, vector<16x128xbf16>
    %77 = tpu.concatenate %74, %75, %76 in 1 : vector<16x128xbf16>, vector<16x128xbf16>, vector<16x128xbf16> -> vector<16x384xbf16>
    %cst_62 = arith.constant dense<0.000000e+00> : vector<16x128xf32>
    %78 = tpu.matmul %77, %69, %cst_62 {dimension_numbers = #tpu.dot_dimension_numbers<[1], [0], [0], [1], [0, 0, 1, 1], [], []>} : vector<16x384xbf16>, vector<384x128xbf16>, vector<16x128xf32> -> vector<16x128xf32>
    %79 = vector.broadcast %71 : vector<1x128xf32> to vector<16x128xf32>
    %80 = arith.addf %78, %79 : vector<16x128xf32>
    %cst_63 = arith.constant 0.000000e+00 : f32
    %81 = vector.broadcast %cst_63 : f32 to vector<16x128xf32>
    %82 = arith.maximumf %80, %81 : vector<16x128xf32>
    %c1_64 = arith.constant 1 : index
    %c0_65 = arith.constant 0 : index
    %c0_66 = arith.constant 0 : index
    %83 = vector.load %arg6[%c1_64, %c0_65, %c0_66] : memref<2x384x128xbf16, #tpu.memory_space<vmem>>, vector<1x384x128xbf16>
    %84 = vector.shape_cast %83 : vector<1x384x128xbf16> to vector<384x128xbf16>
    %c1_67 = arith.constant 1 : index
    %c0_68 = arith.constant 0 : index
    %c0_69 = arith.constant 0 : index
    %85 = vector.load %arg7[%c1_67, %c0_68, %c0_69] : memref<2x1x128xf32, #tpu.memory_space<vmem>>, vector<1x1x128xf32>
    %86 = vector.shape_cast %85 : vector<1x1x128xf32> to vector<1x128xf32>
    %87 = arith.truncf %82 : vector<16x128xf32> to vector<16x128xbf16>
    %c16_70 = arith.constant 16 : index
    %c0_71 = arith.constant 0 : index
    %88 = vector.load %arg11[%c16_70, %c0_71] : memref<32x128xbf16, #tpu.memory_space<vmem>>, vector<16x128xbf16>
    tpu.vector_store %arg11[%c16_70, %c0_71], %87 {strides = array<i32>} : memref<32x128xbf16, #tpu.memory_space<vmem>>, vector<16x128xbf16>,
    %c12_72 = arith.constant 12 : index
    %c0_73 = arith.constant 0 : index
    %89 = vector.load %arg11[%c12_72, %c0_73] : memref<32x128xbf16, #tpu.memory_space<vmem>>, vector<16x128xbf16>
    %c14_74 = arith.constant 14 : index
    %c0_75 = arith.constant 0 : index
    %90 = vector.load %arg11[%c14_74, %c0_75] : memref<32x128xbf16, #tpu.memory_space<vmem>>, vector<16x128xbf16>
    %c16_76 = arith.constant 16 : index
    %c0_77 = arith.constant 0 : index
    %91 = vector.load %arg11[%c16_76, %c0_77] : memref<32x128xbf16, #tpu.memory_space<vmem>>, vector<16x128xbf16>
    %92 = tpu.concatenate %89, %90, %91 in 1 : vector<16x128xbf16>, vector<16x128xbf16>, vector<16x128xbf16> -> vector<16x384xbf16>
    %cst_78 = arith.constant dense<0.000000e+00> : vector<16x128xf32>
    %93 = tpu.matmul %92, %84, %cst_78 {dimension_numbers = #tpu.dot_dimension_numbers<[1], [0], [0], [1], [0, 0, 1, 1], [], []>} : vector<16x384xbf16>, vector<384x128xbf16>, vector<16x128xf32> -> vector<16x128xf32>
    %94 = vector.broadcast %86 : vector<1x128xf32> to vector<16x128xf32>
    %95 = arith.addf %93, %94 : vector<16x128xf32>
    %cst_79 = arith.constant dense<0.000000e+00> : vector<16xf32>
    %96 = vector.multi_reduction <add>, %95, %cst_79 [1] : vector<16x128xf32> to vector<16xf32>
    %97 = vector.shape_cast %96 : vector<16xf32> to vector<16x1xf32>
    %cst_80 = arith.constant 3.125000e-02 : f32
    %98 = vector.broadcast %cst_80 : f32 to vector<16x1xf32>
    %99 = arith.mulf %97, %98 : vector<16x1xf32>
    %100 = arith.mulf %95, %95 : vector<16x128xf32>
    %cst_81 = arith.constant dense<0.000000e+00> : vector<16xf32>
    %101 = vector.multi_reduction <add>, %100, %cst_81 [1] : vector<16x128xf32> to vector<16xf32>
    %102 = vector.shape_cast %101 : vector<16xf32> to vector<16x1xf32>
    %cst_82 = arith.constant 3.125000e-02 : f32
    %103 = vector.broadcast %cst_82 : f32 to vector<16x1xf32>
    %104 = arith.mulf %102, %103 : vector<16x1xf32>
    %105 = arith.mulf %99, %99 : vector<16x1xf32>
    %106 = arith.subf %104, %105 : vector<16x1xf32>
    %cst_83 = arith.constant 0.000000e+00 : f32
    %107 = vector.broadcast %cst_83 : f32 to vector<16x1xf32>
    %108 = arith.maximumf %106, %107 : vector<16x1xf32>
    %109 = vector.broadcast %99 : vector<16x1xf32> to vector<16x128xf32>
    %110 = arith.subf %95, %109 : vector<16x128xf32>
    %cst_84 = arith.constant 9.99999974E-6 : f32
    %111 = vector.broadcast %cst_84 : f32 to vector<16x1xf32>
    %112 = arith.addf %108, %111 : vector<16x1xf32>
    %113 = math.rsqrt %112 : vector<16x1xf32>
    %114 = vector.broadcast %113 : vector<16x1xf32> to vector<16x128xf32>
    %115 = arith.mulf %110, %114 : vector<16x128xf32>
    %c1_85 = arith.constant 1 : index
    %c0_86 = arith.constant 0 : index
    %c0_87 = arith.constant 0 : index
    %116 = vector.load %arg8[%c1_85, %c0_86, %c0_87] : memref<2x1x128xf32, #tpu.memory_space<vmem>>, vector<1x1x128xf32>
    %117 = vector.shape_cast %116 : vector<1x1x128xf32> to vector<1x128xf32>
    %118 = vector.broadcast %117 : vector<1x128xf32> to vector<16x128xf32>
    %119 = arith.mulf %115, %118 : vector<16x128xf32>
    %c1_88 = arith.constant 1 : index
    %c0_89 = arith.constant 0 : index
    %c0_90 = arith.constant 0 : index
    %120 = vector.load %arg9[%c1_88, %c0_89, %c0_90] : memref<2x1x128xf32, #tpu.memory_space<vmem>>, vector<1x1x128xf32>
    %121 = vector.shape_cast %120 : vector<1x1x128xf32> to vector<1x128xf32>
    %122 = vector.broadcast %121 : vector<1x128xf32> to vector<16x128xf32>
    %123 = arith.addf %119, %122 : vector<16x128xf32>
    %124 = arith.addf %123, %67 : vector<16x128xf32>
    %cst_91 = arith.constant 0.000000e+00 : f32
    %125 = vector.broadcast %cst_91 : f32 to vector<16x128xf32>
    %126 = arith.maximumf %124, %125 : vector<16x128xf32>
    %c0_92 = arith.constant 0 : index
    %c0_93 = arith.constant 0 : index
    %c0_94 = arith.constant 0 : index
    %127 = vector.load %arg10[%c0_92, %c0_93, %c0_94] : memref<1x16x128xf32, #tpu.memory_space<vmem>>, vector<1x16x128xf32>
    %128 = vector.shape_cast %127 : vector<1x16x128xf32> to vector<16x128xf32>
    %129 = vector.shape_cast %126 : vector<16x128xf32> to vector<1x16x128xf32>
    tpu.vector_store %arg10[%c0_92, %c0_93, %c0_94], %129 {strides = array<i32>} : memref<1x16x128xf32, #tpu.memory_space<vmem>>, vector<1x16x128xf32>,
    return
  }
  func.func @transform_0(%arg0: i32) -> (i32, i32, i32) {
    %c0_i32 = arith.constant 0 : i32
    %c0_i32_0 = arith.constant 0 : i32
    %c0_i32_1 = arith.constant 0 : i32
    return %arg0, %c0_i32, %c0_i32_0 : i32, i32, i32
  }
  func.func @transform_1(%arg0: i32) -> (i32, i32) {
    %c0_i32 = arith.constant 0 : i32
    %c0_i32_0 = arith.constant 0 : i32
    %c0_i32_1 = arith.constant 0 : i32
    return %c0_i32, %c0_i32_0 : i32, i32
  }
  func.func @transform_2(%arg0: i32) -> (i32, i32) {
    %c0_i32 = arith.constant 0 : i32
    %c0_i32_0 = arith.constant 0 : i32
    %c0_i32_1 = arith.constant 0 : i32
    return %c0_i32, %c0_i32_0 : i32, i32
  }
  func.func @transform_3(%arg0: i32) -> (i32, i32, i32) {
    %c0_i32 = arith.constant 0 : i32
    %c0_i32_0 = arith.constant 0 : i32
    %c0_i32_1 = arith.constant 0 : i32
    %c0_i32_2 = arith.constant 0 : i32
    return %c0_i32, %c0_i32_0, %c0_i32_1 : i32, i32, i32
  }
  func.func @transform_4(%arg0: i32) -> (i32, i32, i32) {
    %c0_i32 = arith.constant 0 : i32
    %c0_i32_0 = arith.constant 0 : i32
    %c0_i32_1 = arith.constant 0 : i32
    %c0_i32_2 = arith.constant 0 : i32
    return %c0_i32, %c0_i32_0, %c0_i32_1 : i32, i32, i32
  }
  func.func @transform_5(%arg0: i32) -> (i32, i32, i32) {
    %c0_i32 = arith.constant 0 : i32
    %c0_i32_0 = arith.constant 0 : i32
    %c0_i32_1 = arith.constant 0 : i32
    %c0_i32_2 = arith.constant 0 : i32
    return %c0_i32, %c0_i32_0, %c0_i32_1 : i32, i32, i32
  }
  func.func @transform_6(%arg0: i32) -> (i32, i32, i32) {
    %c0_i32 = arith.constant 0 : i32
    %c0_i32_0 = arith.constant 0 : i32
    %c0_i32_1 = arith.constant 0 : i32
    %c0_i32_2 = arith.constant 0 : i32
    return %c0_i32, %c0_i32_0, %c0_i32_1 : i32, i32, i32
  }
  func.func @transform_7(%arg0: i32) -> (i32, i32, i32) {
    %c0_i32 = arith.constant 0 : i32
    %c0_i32_0 = arith.constant 0 : i32
    %c0_i32_1 = arith.constant 0 : i32
    %c0_i32_2 = arith.constant 0 : i32
    return %c0_i32, %c0_i32_0, %c0_i32_1 : i32, i32, i32
  }
  func.func @transform_8(%arg0: i32) -> (i32, i32, i32) {
    %c0_i32 = arith.constant 0 : i32
    %c0_i32_0 = arith.constant 0 : i32
    %c0_i32_1 = arith.constant 0 : i32
    %c0_i32_2 = arith.constant 0 : i32
    return %c0_i32, %c0_i32_0, %c0_i32_1 : i32, i32, i32
  }
  func.func @transform_9(%arg0: i32) -> (i32, i32, i32) {
    %c0_i32 = arith.constant 0 : i32
    %c0_i32_0 = arith.constant 0 : i32
    %c0_i32_1 = arith.constant 0 : i32
    return %arg0, %c0_i32, %c0_i32_0 : i32, i32, i32
  }
}

</mosaic_0001>

<llo_original>
// kernel: tpu_custom_call.1
$region0: #{tpu_custom_call.1}
  #allocation0 [shape = 'u32[]', space=smem, size = 0x4, offset = 0x4, fixed_abs, tag = 'smem constant byte address 0x4 - core index']
  #allocation1 [shape = 'u32[72,128]{1,0:T(1,128)}', space=vmem, size = 0x9000, scoped, tag = 'internal scratch']
  #allocation2 [shape = 'bf16[32,128]{1,0:T(8,128)(2,1)}', space=vmem, size = 0x2000, scoped, tag = 'scratch operand']
  %s0 = inlined_call_operand.hbm [shape: bf16[2,16,128], index: 0, kind: input, shape index: {}]
  %s1 = inlined_call_operand.hbm [shape: bf16[128,128], index: 1, kind: input, shape index: {}]
  %s2 = inlined_call_operand.hbm [shape: f32[1,128], index: 2, kind: input, shape index: {}]
  %s3 = inlined_call_operand.hbm [shape: bf16[2,384,128], index: 3, kind: input, shape index: {}]
  %s4 = inlined_call_operand.vmem [shape: f32[2,1,128], index: 4, kind: input, shape index: {}]
  %s5 = inlined_call_operand.hbm [shape: bf16[2,384,128], index: 5, kind: input, shape index: {}]
  %s6 = inlined_call_operand.vmem [shape: f32[2,1,128], index: 6, kind: input, shape index: {}]
  %s7 = inlined_call_operand.vmem [shape: f32[2,1,128], index: 7, kind: input, shape index: {}]
  %s8 = inlined_call_operand.hbm [shape: f32[2,1,128], index: 8, kind: input, shape index: {}]
  %s9 = inlined_call_operand.hbm [shape: f32[2,16,128], index: 9, kind: output, shape index: {}]
  %s10 = sld [smem:[#allocation0]]
  $region93: #{tpu_custom_call.1} parent=0
    _
  %s12 = ssub.s32 1, %s10
  %s13 = scalar_select 0, %s12, %s10
  $region1: #{tpu_custom_call.1} parent=0
    #allocation3 [shape = 'u8[8192]{0}', space=vmem, size = 0x2000, scoped, tag = 'input window, operand 0']
    #allocation4 [shape = 's32[2]{0}', space=sflag, size = 0x8, scoped, tag = 'scoped memory for tpu_custom_call.1']
    #allocation5 [shape = 's32[2]{0}', space=sflag, size = 0x8, scoped, tag = 'scoped memory for tpu_custom_call.1']
    #allocation6 [shape = 'u8[32768]{0}', space=vmem, size = 0x8000, scoped, tag = 'input window, operand 1, single buffered']
    #allocation7 [shape = 's32[1]{0}', space=sflag, size = 0x4, scoped, tag = 'scoped memory for tpu_custom_call.1']
    #allocation8 [shape = 'u8[512]{0}', space=vmem, size = 0x400, scoped, tag = 'input window, operand 2, single buffered']
    #allocation9 [shape = 'u8[196608]{0}', space=vmem, size = 0x30000, scoped, tag = 'input window, operand 3, single buffered']
    #allocation10 [shape = 's32[1]{0}', space=sflag, size = 0x4, scoped, tag = 'scoped memory for tpu_custom_call.1']
    #allocation11 [shape = 'u8[196608]{0}', space=vmem, size = 0x30000, scoped, tag = 'input window, operand 5, single buffered']
    #allocation12 [shape = 'u8[1024]{0}', space=vmem, size = 0x400, scoped, tag = 'input window, operand 8, single buffered']
    #allocation13 [shape = 's32[1]{0}', space=sflag, size = 0x4, scoped, tag = 'scoped memory for tpu_custom_call.1']
    #allocation14 [shape = 'u8[16384]{0}', space=vmem, size = 0x4000, scoped, tag = 'output window, operand 0']
    %14 = vsyncpa [#allocation4], 0
    %s15 = scalar_lea.sflag [#allocation4], 1
    %16 = vsyncpa %s15, 0
    %17 = vsyncpa [#allocation7], 0
    %18 = vsyncpa [#allocation10], 0
    %19 = vsyncpa [#allocation13], 0
    %20 = vsyncpa [#allocation5], 0
    %s21 = scalar_lea.sflag [#allocation5], 1
    %22 = vsyncpa %s21, 0
    loop: start=0, step=1, limit=4
    $region2: #{tpu_custom_call.1} parent=1 // loop_pre_header
      _
    $region3: #{tpu_custom_call.1} parent=1 // loop_header
      %s24 = sphi 0, %s28
      %p25 = scmp.ge.s32.totalorder %s24, 4
      %s34 = sphi 0, %s36
      %s37 = sphi 0, %s34
      %s38 = sphi 0, %s37
      %s54 = sphi 0, %s38
      %s58 = sphi 0, %s58
      %s60 = sphi 0, %s58
      %s61 = sphi 0, %s60
      %s75 = sphi 0, %s61
      %s79 = sphi 0, %s79
      %s81 = sphi 0, %s79
      %s82 = sphi 0, %s81
      %s96 = sphi 0, %s82
      %s100 = sphi 0, %s100
      %s102 = sphi 0, %s100
      %s103 = sphi 0, %s102
      %s117 = sphi 0, %s103
      %s121 = sphi 0, %s121
      %s123 = sphi 0, %s121
      %s124 = sphi 0, %s123
      %s138 = sphi 0, %s124
      %s142 = sphi 0, %s142
      %s144 = sphi 0, %s142
      %s145 = sphi 0, %s144
      %s159 = sphi 0, %s145
      %s163 = sphi 0, %s163
      %s165 = sphi 0, %s163
      %s166 = sphi 0, %s165
      %s180 = sphi 0, %s166
      %s184 = sphi 0, %s184
      %s186 = sphi 0, %s184
      %s187 = sphi 0, %s186
      %s201 = sphi 0, %s187
      %s205 = sphi 0, %s205
      %s207 = sphi 0, %s205
      %s208 = sphi 0, %s207
      %s222 = sphi 0, %s208
      %s228 = sphi 0, %s230
      %s231 = sphi 0, %s228
      %s232 = sphi 0, %s231
      %s248 = sphi 0, %s232
    $region4: #{tpu_custom_call.1} parent=1 // loop_header_branch
      %27 = sbr.rel (%p25) target = $region8
    $region5: #{tpu_custom_call.1} parent=1 // loop_body
      %s29 = ssub.s32 %s24, 1
      %s30 = ssub.s32 %s24, 2
      %s31 = sadd.s32 %s24, 1
      %s32 = ssub.s32 %s24, %s31
      %p33 = scmp.eq.s32.totalorder %s32, 0
      %s35 = sadd.s32 %s34, 1
      %s36 = scalar_select %p33, %s34, %s35
      %p39 = pneg %p33
      %p40 = scmp.eq.s32.totalorder %s24, 1
      %p41 = por %p39, %p40
      %p42 = scmp.ne.s32.totalorder %s34, %s37
      %p43 = scmp.eq.s32.totalorder %s24, 0
      %p44 = por %p42, %p43
      %p45 = scmp.ne.s32.totalorder %s34, %s37
      %p46 = scmp.eq.s32.totalorder %s29, 1
      %p47 = por %p45, %p46
      %p48 = scmp.ne.s32.totalorder %s37, %s38
      %p49 = scmp.eq.s32.totalorder %s29, 0
      %p50 = por %p48, %p49
      %p51 = scmp.ne.s32.totalorder %s37, %s38
      %p52 = scmp.eq.s32.totalorder %s30, 1
      %p53 = por %p51, %p52
      %p55 = scmp.ne.s32.totalorder %s38, %s54
      %p56 = scmp.eq.s32.totalorder %s30, 0
      %p57 = por %p55, %p56
      %s59 = sadd.s32 %s58, 1
      %p62 = scmp.eq.s32.totalorder %s24, 1
      %p63 = scmp.ne.s32.totalorder %s58, %s60
      %p64 = scmp.eq.s32.totalorder %s24, 0
      %p65 = por %p63, %p64
      %p66 = scmp.ne.s32.totalorder %s58, %s60
      %p67 = scmp.eq.s32.totalorder %s29, 1
      %p68 = por %p66, %p67
      %p69 = scmp.ne.s32.totalorder %s60, %s61
      %p70 = scmp.eq.s32.totalorder %s29, 0
      %p71 = por %p69, %p70
      %p72 = scmp.ne.s32.totalorder %s60, %s61
      %p73 = scmp.eq.s32.totalorder %s30, 1
      %p74 = por %p72, %p73
      %p76 = scmp.ne.s32.totalorder %s61, %s75
      %p77 = scmp.eq.s32.totalorder %s30, 0
      %p78 = por %p76, %p77
      %s80 = sadd.s32 %s79, 1
      %p83 = scmp.eq.s32.totalorder %s24, 1
      %p84 = scmp.ne.s32.totalorder %s79, %s81
      %p85 = scmp.eq.s32.totalorder %s24, 0
      %p86 = por %p84, %p85
      %p87 = scmp.ne.s32.totalorder %s79, %s81
      %p88 = scmp.eq.s32.totalorder %s29, 1
      %p89 = por %p87, %p88
      %p90 = scmp.ne.s32.totalorder %s81, %s82
      %p91 = scmp.eq.s32.totalorder %s29, 0
      %p92 = por %p90, %p91
      %p93 = scmp.ne.s32.totalorder %s81, %s82
      %p94 = scmp.eq.s32.totalorder %s30, 1
      %p95 = por %p93, %p94
      %p97 = scmp.ne.s32.totalorder %s82, %s96
      %p98 = scmp.eq.s32.totalorder %s30, 0
      %p99 = por %p97, %p98
      %s101 = sadd.s32 %s100, 1
      %p104 = scmp.eq.s32.totalorder %s24, 1
      %p105 = scmp.ne.s32.totalorder %s100, %s102
      %p106 = scmp.eq.s32.totalorder %s24, 0
      %p107 = por %p105, %p106
      %p108 = scmp.ne.s32.totalorder %s100, %s102
      %p109 = scmp.eq.s32.totalorder %s29, 1
      %p110 = por %p108, %p109
      %p111 = scmp.ne.s32.totalorder %s102, %s103
      %p112 = scmp.eq.s32.totalorder %s29, 0
      %p113 = por %p111, %p112
      %p114 = scmp.ne.s32.totalorder %s102, %s103
      %p115 = scmp.eq.s32.totalorder %s30, 1
      %p116 = por %p114, %p115
      %p118 = scmp.ne.s32.totalorder %s103, %s117
      %p119 = scmp.eq.s32.totalorder %s30, 0
      %p120 = por %p118, %p119
      %s122 = sadd.s32 %s121, 1
      %p125 = scmp.eq.s32.totalorder %s24, 1
      %p126 = scmp.ne.s32.totalorder %s121, %s123
      %p127 = scmp.eq.s32.totalorder %s24, 0
      %p128 = por %p126, %p127
      %p129 = scmp.ne.s32.totalorder %s121, %s123
      %p130 = scmp.eq.s32.totalorder %s29, 1
      %p131 = por %p129, %p130
      %p132 = scmp.ne.s32.totalorder %s123, %s124
      %p133 = scmp.eq.s32.totalorder %s29, 0
      %p134 = por %p132, %p133
      %p135 = scmp.ne.s32.totalorder %s123, %s124
      %p136 = scmp.eq.s32.totalorder %s30, 1
      %p137 = por %p135, %p136
      %p139 = scmp.ne.s32.totalorder %s124, %s138
      %p140 = scmp.eq.s32.totalorder %s30, 0
      %p141 = por %p139, %p140
      %s143 = sadd.s32 %s142, 1
      %p146 = scmp.eq.s32.totalorder %s24, 1
      %p147 = scmp.ne.s32.totalorder %s142, %s144
      %p148 = scmp.eq.s32.totalorder %s24, 0
      %p149 = por %p147, %p148
      %p150 = scmp.ne.s32.totalorder %s142, %s144
      %p151 = scmp.eq.s32.totalorder %s29, 1
      %p152 = por %p150, %p151
      %p153 = scmp.ne.s32.totalorder %s144, %s145
      %p154 = scmp.eq.s32.totalorder %s29, 0
      %p155 = por %p153, %p154
      %p156 = scmp.ne.s32.totalorder %s144, %s145
      %p157 = scmp.eq.s32.totalorder %s30, 1
      %p158 = por %p156, %p157
      %p160 = scmp.ne.s32.totalorder %s145, %s159
      %p161 = scmp.eq.s32.totalorder %s30, 0
      %p162 = por %p160, %p161
      %s164 = sadd.s32 %s163, 1
      %p167 = scmp.eq.s32.totalorder %s24, 1
      %p168 = scmp.ne.s32.totalorder %s163, %s165
      %p169 = scmp.eq.s32.totalorder %s24, 0
      %p170 = por %p168, %p169
      %p171 = scmp.ne.s32.totalorder %s163, %s165
      %p172 = scmp.eq.s32.totalorder %s29, 1
      %p173 = por %p171, %p172
      %p174 = scmp.ne.s32.totalorder %s165, %s166
      %p175 = scmp.eq.s32.totalorder %s29, 0
      %p176 = por %p174, %p175
      %p177 = scmp.ne.s32.totalorder %s165, %s166
      %p178 = scmp.eq.s32.totalorder %s30, 1
      %p179 = por %p177, %p178
      %p181 = scmp.ne.s32.totalorder %s166, %s180
      %p182 = scmp.eq.s32.totalorder %s30, 0
      %p183 = por %p181, %p182
      %s185 = sadd.s32 %s184, 1
      %p188 = scmp.eq.s32.totalorder %s24, 1
      %p189 = scmp.ne.s32.totalorder %s184, %s186
      %p190 = scmp.eq.s32.totalorder %s24, 0
      %p191 = por %p189, %p190
      %p192 = scmp.ne.s32.totalorder %s184, %s186
      %p193 = scmp.eq.s32.totalorder %s29, 1
      %p194 = por %p192, %p193
      %p195 = scmp.ne.s32.totalorder %s186, %s187
      %p196 = scmp.eq.s32.totalorder %s29, 0
      %p197 = por %p195, %p196
      %p198 = scmp.ne.s32.totalorder %s186, %s187
      %p199 = scmp.eq.s32.totalorder %s30, 1
      %p200 = por %p198, %p199
      %p202 = scmp.ne.s32.totalorder %s187, %s201
      %p203 = scmp.eq.s32.totalorder %s30, 0
      %p204 = por %p202, %p203
      %s206 = sadd.s32 %s205, 1
      %p209 = scmp.eq.s32.totalorder %s24, 1
      %p210 = scmp.ne.s32.totalorder %s205, %s207
      %p211 = scmp.eq.s32.totalorder %s24, 0
      %p212 = por %p210, %p211
      %p213 = scmp.ne.s32.totalorder %s205, %s207
      %p214 = scmp.eq.s32.totalorder %s29, 1
      %p215 = por %p213, %p214
      %p216 = scmp.ne.s32.totalorder %s207, %s208
      %p217 = scmp.eq.s32.totalorder %s29, 0
      %p218 = por %p216, %p217
      %p219 = scmp.ne.s32.totalorder %s207, %s208
      %p220 = scmp.eq.s32.totalorder %s30, 1
      %p221 = por %p219, %p220
      %p223 = scmp.ne.s32.totalorder %s208, %s222
      %p224 = scmp.eq.s32.totalorder %s30, 0
      %p225 = por %p223, %p224
      %s226 = ssub.s32 %s24, %s31
      %p227 = scmp.eq.s32.totalorder %s226, 0
      %s229 = sadd.s32 %s228, 1
      %s230 = scalar_select %p227, %s228, %s229
      %p233 = pneg %p227
      %p234 = scmp.eq.s32.totalorder %s24, 1
      %p235 = por %p233, %p234
      %p236 = scmp.ne.s32.totalorder %s228, %s231
      %p237 = scmp.eq.s32.totalorder %s24, 0
      %p238 = por %p236, %p237
      %p239 = scmp.ne.s32.totalorder %s228, %s231
      %p240 = scmp.eq.s32.totalorder %s29, 1
      %p241 = por %p239, %p240
      %p242 = scmp.ne.s32.totalorder %s231, %s232
      %p243 = scmp.eq.s32.totalorder %s29, 0
      %p244 = por %p242, %p243
      %p245 = scmp.ne.s32.totalorder %s231, %s232
      %p246 = scmp.eq.s32.totalorder %s30, 1
      %p247 = por %p245, %p246
      %p249 = scmp.ne.s32.totalorder %s232, %s248
      %p250 = scmp.eq.s32.totalorder %s30, 0
      %p251 = por %p249, %p250
      %p252 = scmp.le.s32.totalorder 1, %s24
      %p253 = scmp.lt.s32.totalorder %s24, 3
      %p254 = pnand %p252, %p253
      %p255 = pneg %p254
      // Predicated region
      $region9: #{tpu_custom_call.1} parent=5 // pred_check
        _
      $region10: #{tpu_custom_call.1} parent=5 // pred_check_branch
        %257 = sbr.rel (%p254) target = $region12
      $region11: #{tpu_custom_call.1} parent=5 // pred_region
        %s258 = ssub.s32 %s24, 1
        // Predicated region
        $region13: #{tpu_custom_call.1} parent=11 // pred_check
          %p259 = pneg %p71
        $region14: #{tpu_custom_call.1} parent=11 // pred_check_branch
          %261 = sbr.rel (%p259) target = $region16
        $region15: #{tpu_custom_call.1} parent=11 // pred_region
          %263 = vsyncadd [#allocation7], 0
          %s264 = sshll.u32 %s1, 4
          %s265 = int_to_ptr.hbm [resolvable:$true] %s264
          %s266 = sshll.u32 [#allocation6], 4
          %s267 = int_to_ptr.vmem [resolvable:$true] %s266
          %272 = dma.hbm_to_vmem [thread:$0]  %s265, 1024, %s267, [#allocation7], 64, 64, 4
        $region16: #{tpu_custom_call.1} parent=11 // pred_fallthru
          _
        // Predicated region
        $region17: #{tpu_custom_call.1} parent=11 // pred_check
          %p273 = pneg %p92
        $region18: #{tpu_custom_call.1} parent=11 // pred_check_branch
          %275 = sbr.rel (%p273) target = $region20
        $region19: #{tpu_custom_call.1} parent=11 // pred_region
          %277 = vsyncadd [#allocation7], 0
          %s279 = sshll.u32 %s2, 4
          %s280 = int_to_ptr.hbm [resolvable:$true] %s279
          %s281 = sshll.u32 [#allocation8], 4
          %s282 = int_to_ptr.vmem [resolvable:$true] %s281
          %284 = dma.hbm_to_vmem [thread:$0]  %s280, 16, %s282, [#allocation7]
        $region20: #{tpu_custom_call.1} parent=11 // pred_fallthru
          _
        // Predicated region
        $region21: #{tpu_custom_call.1} parent=11 // pred_check
          %p285 = pneg %p113
        $region22: #{tpu_custom_call.1} parent=11 // pred_check_branch
          %287 = sbr.rel (%p285) target = $region24
        $region23: #{tpu_custom_call.1} parent=11 // pred_region
          %289 = vsyncadd [#allocation10], 0
          %s290 = sshll.u32 %s3, 4
          %s291 = int_to_ptr.hbm [resolvable:$true] %s290
          %s292 = sshll.u32 [#allocation9], 4
          %s293 = int_to_ptr.vmem [resolvable:$true] %s292
          %298 = dma.hbm_to_vmem [thread:$0]  %s291, 6144, %s293, [#allocation10], 64, 64, 4
        $region24: #{tpu_custom_call.1} parent=11 // pred_fallthru
          _
        // Predicated region
        $region25: #{tpu_custom_call.1} parent=11 // pred_check
          %p299 = pneg %p134
        $region26: #{tpu_custom_call.1} parent=11 // pred_check_branch
          %301 = sbr.rel (%p299) target = $region28
        $region27: #{tpu_custom_call.1} parent=11 // pred_region
          _
        $region28: #{tpu_custom_call.1} parent=11 // pred_fallthru
          _
        // Predicated region
        $region29: #{tpu_custom_call.1} parent=11 // pred_check
          %p302 = pneg %p155
        $region30: #{tpu_custom_call.1} parent=11 // pred_check_branch
          %304 = sbr.rel (%p302) target = $region32
        $region31: #{tpu_custom_call.1} parent=11 // pred_region
          %306 = vsyncadd [#allocation10], 0
          %s307 = sshll.u32 %s5, 4
          %s308 = int_to_ptr.hbm [resolvable:$true] %s307
          %s309 = sshll.u32 [#allocation11], 4
          %s310 = int_to_ptr.vmem [resolvable:$true] %s309
          %315 = dma.hbm_to_vmem [thread:$0]  %s308, 6144, %s310, [#allocation10], 64, 64, 4
        $region32: #{tpu_custom_call.1} parent=11 // pred_fallthru
          _
        // Predicated region
        $region33: #{tpu_custom_call.1} parent=11 // pred_check
          %p316 = pneg %p176
        $region34: #{tpu_custom_call.1} parent=11 // pred_check_branch
          %318 = sbr.rel (%p316) target = $region36
        $region35: #{tpu_custom_call.1} parent=11 // pred_region
          _
        $region36: #{tpu_custom_call.1} parent=11 // pred_fallthru
          _
        // Predicated region
        $region37: #{tpu_custom_call.1} parent=11 // pred_check
          %p319 = pneg %p197
        $region38: #{tpu_custom_call.1} parent=11 // pred_check_branch
          %321 = sbr.rel (%p319) target = $region40
        $region39: #{tpu_custom_call.1} parent=11 // pred_region
          _
        $region40: #{tpu_custom_call.1} parent=11 // pred_fallthru
          _
        // Predicated region
        $region41: #{tpu_custom_call.1} parent=11 // pred_check
          %p322 = pneg %p218
        $region42: #{tpu_custom_call.1} parent=11 // pred_check_branch
          %324 = sbr.rel (%p322) target = $region44
        $region43: #{tpu_custom_call.1} parent=11 // pred_region
          %326 = vsyncadd [#allocation13], 0
          %s327 = sshll.u32 %s8, 4
          %s328 = int_to_ptr.hbm [resolvable:$true] %s327
          %s329 = sshll.u32 [#allocation12], 4
          %s330 = int_to_ptr.vmem [resolvable:$true] %s329
          %335 = dma.hbm_to_vmem [thread:$0]  %s328, 32, %s330, [#allocation13], 16, 16, 1
        $region44: #{tpu_custom_call.1} parent=11 // pred_fallthru
          _
      $region12: #{tpu_custom_call.1} parent=5 // pred_fallthru
        _
      %p336 = scmp.lt.s32.totalorder %s24, 2
      // Predicated region
      $region45: #{tpu_custom_call.1} parent=5 // pred_check
        %p337 = pneg %p336
      $region46: #{tpu_custom_call.1} parent=5 // pred_check_branch
        %339 = sbr.rel (%p337) target = $region48
      $region47: #{tpu_custom_call.1} parent=5 // pred_region
        // Predicated region
        $region49: #{tpu_custom_call.1} parent=47 // pred_check
          %p340 = pneg %p44
        $region50: #{tpu_custom_call.1} parent=47 // pred_check_branch
          %342 = sbr.rel (%p340) target = $region52
        $region51: #{tpu_custom_call.1} parent=47 // pred_region
          %s343 = sand.u32 %s34, 1
          %s344 = scalar_lea.sflag [#allocation4], %s343
          %s345 = sand.u32 %s34, 1
          %s346 = smul.addr %s345, 8
          %s347 = scalar_lea.vmem [#allocation3], %s346
          %349 = vsyncadd %s344, 0
          %s350 = smul.addr %s24, 2
          %s351 = smul.addr %s350, 4
          %s352 = scalar_lea.hbm %s0, %s351
          %s353 = sshll.u32 %s352, 4
          %s354 = int_to_ptr.hbm [resolvable:$true] %s353
          %s355 = sshll.u32 %s347, 4
          %s356 = int_to_ptr.vmem [resolvable:$true] %s355
          %361 = dma.hbm_to_vmem [thread:$0]  %s354, 128, %s356, %s344, 64, 64, 4
        $region52: #{tpu_custom_call.1} parent=47 // pred_fallthru
          _
      $region48: #{tpu_custom_call.1} parent=5 // pred_fallthru
        _
      %p362 = scmp.le.s32.totalorder 1, %s24
      %p363 = scmp.lt.s32.totalorder %s24, 3
      %p364 = pnand %p362, %p363
      %p365 = pneg %p364
      // Predicated region
      $region53: #{tpu_custom_call.1} parent=5 // pred_check
        _
      $region54: #{tpu_custom_call.1} parent=5 // pred_check_branch
        %367 = sbr.rel (%p364) target = $region56
      $region55: #{tpu_custom_call.1} parent=5 // pred_region
        %s368 = ssub.s32 %s24, 1
        %s369 = sand.u32 %s37, 1
        %s370 = scalar_lea.sflag [#allocation4], %s369
        %s371 = sand.u32 %s37, 1
        %s372 = smul.addr %s371, 8
        %s373 = scalar_lea.vmem [#allocation3], %s372
        // Predicated region
        $region57: #{tpu_custom_call.1} parent=55 // pred_check
          %p374 = pneg %p50
        $region58: #{tpu_custom_call.1} parent=55 // pred_check_branch
          %376 = sbr.rel (%p374) target = $region60
        $region59: #{tpu_custom_call.1} parent=55 // pred_region
          %378 = dma.done %s370, 128
        $region60: #{tpu_custom_call.1} parent=55 // pred_fallthru
          _
        // Predicated region
        $region61: #{tpu_custom_call.1} parent=55 // pred_check
          %p379 = pneg %p71
        $region62: #{tpu_custom_call.1} parent=55 // pred_check_branch
          %381 = sbr.rel (%p379) target = $region64
        $region63: #{tpu_custom_call.1} parent=55 // pred_region
          %383 = dma.done [#allocation7], 1024
        $region64: #{tpu_custom_call.1} parent=55 // pred_fallthru
          _
        // Predicated region
        $region65: #{tpu_custom_call.1} parent=55 // pred_check
          %p384 = pneg %p92
        $region66: #{tpu_custom_call.1} parent=55 // pred_check_branch
          %386 = sbr.rel (%p384) target = $region68
        $region67: #{tpu_custom_call.1} parent=55 // pred_region
          %388 = dma.done [#allocation7], 16
        $region68: #{tpu_custom_call.1} parent=55 // pred_fallthru
          _
        // Predicated region
        $region69: #{tpu_custom_call.1} parent=55 // pred_check
          %p389 = pneg %p113
        $region70: #{tpu_custom_call.1} parent=55 // pred_check_branch
          %391 = sbr.rel (%p389) target = $region72
        $region71: #{tpu_custom_call.1} parent=55 // pred_region
          %393 = dma.done [#allocation10], 6144
        $region72: #{tpu_custom_call.1} parent=55 // pred_fallthru
          _
        // Predicated region
        $region73: #{tpu_custom_call.1} parent=55 // pred_check
          %p394 = pneg %p155
        $region74: #{tpu_custom_call.1} parent=55 // pred_check_branch
          %396 = sbr.rel (%p394) target = $region76
        $region75: #{tpu_custom_call.1} parent=55 // pred_region
          %398 = dma.done [#allocation10], 6144
        $region76: #{tpu_custom_call.1} parent=55 // pred_fallthru
          _
        // Predicated region
        $region77: #{tpu_custom_call.1} parent=55 // pred_check
          %p399 = pneg %p218
        $region78: #{tpu_custom_call.1} parent=55 // pred_check_branch
          %401 = sbr.rel (%p399) target = $region80
        $region79: #{tpu_custom_call.1} parent=55 // pred_region
          %403 = dma.done [#allocation13], 32
        $region80: #{tpu_custom_call.1} parent=55 // pred_fallthru
          _
        %s404 = sand.u32 %s37, 1
        %s405 = scalar_lea.sflag [#allocation4], %s404
        %s406 = sand.u32 %s37, 1
        %s407 = smul.addr %s406, 8
        %s408 = scalar_lea.vmem [#allocation3], %s407
        %p409 = pneg %p50
        %p410 = pneg %p47
        %p411 = pneg %p71
        %p412 = pneg %p68
        %p413 = pneg %p92
        %p414 = pneg %p89
        %p415 = pneg %p113
        %p416 = pneg %p110
        %p417 = pneg %p134
        %p418 = pneg %p131
        %p419 = pneg %p155
        %p420 = pneg %p152
        %p421 = pneg %p176
        %p422 = pneg %p173
        %p423 = pneg %p197
        %p424 = pneg %p194
        %p425 = pneg %p218
        %p426 = pneg %p215
        %p427 = pneg %p244
        %p428 = pneg %p241
        %s429 = sand.u32 %s231, 1
        %s430 = scalar_lea.sflag [#allocation5], %s429
        %s431 = sand.u32 %s231, 1
        %s432 = smul.addr %s431, 16
        %s433 = scalar_lea.vmem [#allocation14], %s432
        %v435 = vld [vmem:[%s373] sm:$0xf]
        %v436 = vld [vmem:[%s373 + $0x4] sm:$0xf]
        %v437 = vld [vmem:[#allocation6] sm:$0xf]
        %v438 = vld [vmem:[#allocation6 + $0x4] sm:$0xf]
        %v439 = vld [vmem:[#allocation6 + $0x8] sm:$0xf]
        %v440 = vld [vmem:[#allocation6 + $0xc] sm:$0xf]
        %v441 = vld [vmem:[#allocation6 + $0x10] sm:$0xf]
        %v442 = vld [vmem:[#allocation6 + $0x14] sm:$0xf]
        %v443 = vld [vmem:[#allocation6 + $0x18] sm:$0xf]
        %v444 = vld [vmem:[#allocation6 + $0x1c] sm:$0xf]
        %v445 = vld [vmem:[#allocation6 + $0x20] sm:$0xf]
        %v446 = vld [vmem:[#allocation6 + $0x24] sm:$0xf]
        %v447 = vld [vmem:[#allocation6 + $0x28] sm:$0xf]
        %v448 = vld [vmem:[#allocation6 + $0x2c] sm:$0xf]
        %v449 = vld [vmem:[#allocation6 + $0x30] sm:$0xf]
        %v450 = vld [vmem:[#allocation6 + $0x34] sm:$0xf]
        %v451 = vld [vmem:[#allocation6 + $0x38] sm:$0xf]
        %v452 = vld [vmem:[#allocation6 + $0x3c] sm:$0xf]
        %v453 = vld [vmem:[#allocation8] sm:$0x1]
        %v455 = vperm.slane %v453, 0
        %v459 = vunpack.c.l.b16 %v435
        %v460 = vunpack.c.l.b16 %v436
        %v461 = vpack.c.b16 %v460, %v459
        %v479 = vunpack.c.l.b16 %v437
        %v480 = vunpack.c.l.b16 %v438
        %v481 = vunpack.c.l.b16 %v439
        %v482 = vunpack.c.l.b16 %v440
        %v483 = vunpack.c.l.b16 %v441
        %v484 = vunpack.c.l.b16 %v442
        %v485 = vunpack.c.l.b16 %v443
        %v486 = vunpack.c.l.b16 %v444
        %v487 = vunpack.c.l.b16 %v445
        %v488 = vunpack.c.l.b16 %v446
        %v489 = vunpack.c.l.b16 %v447
        %v490 = vunpack.c.l.b16 %v448
        %v491 = vunpack.c.l.b16 %v449
        %v492 = vunpack.c.l.b16 %v450
        %v493 = vunpack.c.l.b16 %v451
        %v494 = vunpack.c.l.b16 %v452
        %v495 = vpack.c.b16 %v480, %v479
        %v496 = vpack.c.b16 %v482, %v481
        %v497 = vpack.c.b16 %v484, %v483
        %v498 = vpack.c.b16 %v486, %v485
        %v499 = vpack.c.b16 %v488, %v487
        %v500 = vpack.c.b16 %v490, %v489
        %v501 = vpack.c.b16 %v492, %v491
        %v502 = vpack.c.b16 %v494, %v493
        %511 = vmatpush.bf16.msra.mxu0 %v502
        %512 = vmatpush.bf16.msra.mxu0 %v501
        %513 = vmatpush.bf16.msra.mxu0 %v500
        %514 = vmatpush.bf16.msra.mxu0 %v499
        %515 = vmatpush.bf16.msra.mxu0 %v498
        %516 = vmatpush.bf16.msra.mxu0 %v497
        %517 = vmatpush.bf16.msra.mxu0 %v496
        %518 = vmatpush.bf16.msra.mxu0 %v495
        %519 = vmatmul.bf16.gmra.mxu0 %v461
        %v520 = vpop.f32.mrf.mxu0
        %v521 = vadd.f32 %v455, %v520
        %v522 = vpop.f32.mrf.mxu0
        %v523 = vadd.f32 %v455, %v522
        %524 = vdwg.mxu0
        %525 = vst [vmem:[#allocation2] sm:$0xf] 0
        %526 = vst [vmem:[#allocation2 + $0x4] sm:$0xf] 0
        %v527 = vld [vmem:[#allocation9] sm:$0xf]
        %v528 = vld [vmem:[#allocation9 + $0x4] sm:$0xf]
        %v529 = vld [vmem:[#allocation9 + $0x8] sm:$0xf]
        %v530 = vld [vmem:[#allocation9 + $0xc] sm:$0xf]
        %v531 = vld [vmem:[#allocation9 + $0x10] sm:$0xf]
        %v532 = vld [vmem:[#allocation9 + $0x14] sm:$0xf]
        %v533 = vld [vmem:[#allocation9 + $0x18] sm:$0xf]
        %v534 = vld [vmem:[#allocation9 + $0x1c] sm:$0xf]
        %v535 = vld [vmem:[#allocation9 + $0x20] sm:$0xf]
        %v536 = vld [vmem:[#allocation9 + $0x24] sm:$0xf]
        %v537 = vld [vmem:[#allocation9 + $0x28] sm:$0xf]
        %v538 = vld [vmem:[#allocation9 + $0x2c] sm:$0xf]
        %v539 = vld [vmem:[#allocation9 + $0x30] sm:$0xf]
        %v540 = vld [vmem:[#allocation9 + $0x34] sm:$0xf]
        %v541 = vld [vmem:[#allocation9 + $0x38] sm:$0xf]
        %v542 = vld [vmem:[#allocation9 + $0x3c] sm:$0xf]
        %v543 = vld [vmem:[#allocation9 + $0x40] sm:$0xf]
        %v544 = vld [vmem:[#allocation9 + $0x44] sm:$0xf]
        %v545 = vld [vmem:[#allocation9 + $0x48] sm:$0xf]
        %v546 = vld [vmem:[#allocation9 + $0x4c] sm:$0xf]
        %v547 = vld [vmem:[#allocation9 + $0x50] sm:$0xf]
        %v548 = vld [vmem:[#allocation9 + $0x54] sm:$0xf]
        %v549 = vld [vmem:[#allocation9 + $0x58] sm:$0xf]
        %v550 = vld [vmem:[#allocation9 + $0x5c] sm:$0xf]
        %v551 = vld [vmem:[#allocation9 + $0x60] sm:$0xf]
        %v552 = vld [vmem:[#allocation9 + $0x64] sm:$0xf]
        %v553 = vld [vmem:[#allocation9 + $0x68] sm:$0xf]
        %v554 = vld [vmem:[#allocation9 + $0x6c] sm:$0xf]
        %v555 = vld [vmem:[#allocation9 + $0x70] sm:$0xf]
        %v556 = vld [vmem:[#allocation9 + $0x74] sm:$0xf]
        %v557 = vld [vmem:[#allocation9 + $0x78] sm:$0xf]
        %v558 = vld [vmem:[#allocation9 + $0x7c] sm:$0xf]
        %v559 = vld [vmem:[#allocation9 + $0x80] sm:$0xf]
        %v560 = vld [vmem:[#allocation9 + $0x84] sm:$0xf]
        %v561 = vld [vmem:[#allocation9 + $0x88] sm:$0xf]
        %v562 = vld [vmem:[#allocation9 + $0x8c] sm:$0xf]
        %v563 = vld [vmem:[#allocation9 + $0x90] sm:$0xf]
        %v564 = vld [vmem:[#allocation9 + $0x94] sm:$0xf]
        %v565 = vld [vmem:[#allocation9 + $0x98] sm:$0xf]
        %v566 = vld [vmem:[#allocation9 + $0x9c] sm:$0xf]
        %v567 = vld [vmem:[#allocation9 + $0xa0] sm:$0xf]
        %v568 = vld [vmem:[#allocation9 + $0xa4] sm:$0xf]
        %v569 = vld [vmem:[#allocation9 + $0xa8] sm:$0xf]
        %v570 = vld [vmem:[#allocation9 + $0xac] sm:$0xf]
        %v571 = vld [vmem:[#allocation9 + $0xb0] sm:$0xf]
        %v572 = vld [vmem:[#allocation9 + $0xb4] sm:$0xf]
        %v573 = vld [vmem:[#allocation9 + $0xb8] sm:$0xf]
        %v574 = vld [vmem:[#allocation9 + $0xbc] sm:$0xf]
        %v575 = vld [vmem:[%s4] sm:$0x1]
        %v576 = vpack.c.bf16 %v521, %v521
        %v577 = vpack.c.bf16 %v523, %v523
        %578 = vst [vmem:[#allocation2 + $0x8] sm:$0xf] %v576
        %579 = vst [vmem:[#allocation2 + $0xc] sm:$0xf] %v577
        %v580 = vld [vmem:[#allocation2 + $0x4] sm:$0x8]
        %v581 = vld [vmem:[#allocation2 + $0x8] sm:$0xf]
        %v582 = vld [vmem:[#allocation2 + $0xc] sm:$0x7]
        %v583 = vld [vmem:[#allocation2 + $0xc] sm:$0xf]
        %v587 = vunpack.c.l.b16 %v580
        %v588 = vunpack.c.l.b16 %v581
        %v589 = vunpack.c.l.b16 %v582
        %v590 = vpack.c.b16 %v588, %v587
        %v591 = vpack.c.b16 %v589, %v589
        %v593 = vunpack.c.l.b16 %v583
        %v594 = vpack.c.b16 %v593, %v593
        %vm595 = vsmask.f32 7424
        %v597 = vshrl.u32 %v590, 16
        %v599 = vshll.u32 %v590, 16
        %v601 = vrot.slane %v599, 1
        %v602 = vor.u32 %v597, %v601
        %v604 = vshll.u32 %v594, 16
        %v606 = vrot.slane %v604, 1
        %v607 = vsel %vm595, %v602, %v606
        %v608 = vshrl.u32 %v594, 16
        %v610 = vor.u32 %v608, %v606
        %v611 = vpack.c.b16 %v593, %v588
        %v612 = vrot.slane %v611, 5
        %v614 = vperm.slane %v575, 0
        %vm616 = vcmask 1044480
        %v617 = vrot.slane %v590, 3
        %v618 = vrot.slane %v591, 3
        %v619 = vsel %vm616, %v617, %v618
        %v620 = vrot.slane %v607, 3
        %v621 = vrot.slane %v610, 3
        %v622 = vsel %vm616, %v620, %v621
        %v623 = vrot.slane %v612, 3
        %v624 = vsel %vm616, %v623, %v623
        %v676 = vunpack.c.l.b16 %v527
        %v677 = vunpack.c.l.b16 %v528
        %v678 = vunpack.c.l.b16 %v529
        %v679 = vunpack.c.l.b16 %v530
        %v680 = vunpack.c.l.b16 %v531
        %v681 = vunpack.c.l.b16 %v532
        %v682 = vunpack.c.l.b16 %v533
        %v683 = vunpack.c.l.b16 %v534
        %v684 = vunpack.c.l.b16 %v535
        %v685 = vunpack.c.l.b16 %v536
        %v686 = vunpack.c.l.b16 %v537
        %v687 = vunpack.c.l.b16 %v538
        %v688 = vunpack.c.l.b16 %v539
        %v689 = vunpack.c.l.b16 %v540
        %v690 = vunpack.c.l.b16 %v541
        %v691 = vunpack.c.l.b16 %v542
        %v692 = vunpack.c.l.b16 %v543
        %v693 = vunpack.c.l.b16 %v544
        %v694 = vunpack.c.l.b16 %v545
        %v695 = vunpack.c.l.b16 %v546
        %v696 = vunpack.c.l.b16 %v547
        %v697 = vunpack.c.l.b16 %v548
        %v698 = vunpack.c.l.b16 %v549
        %v699 = vunpack.c.l.b16 %v550
        %v700 = vunpack.c.l.b16 %v551
        %v701 = vunpack.c.l.b16 %v552
        %v702 = vunpack.c.l.b16 %v553
        %v703 = vunpack.c.l.b16 %v554
        %v704 = vunpack.c.l.b16 %v555
        %v705 = vunpack.c.l.b16 %v556
        %v706 = vunpack.c.l.b16 %v557
        %v707 = vunpack.c.l.b16 %v558
        %v708 = vunpack.c.l.b16 %v559
        %v709 = vunpack.c.l.b16 %v560
        %v710 = vunpack.c.l.b16 %v561
        %v711 = vunpack.c.l.b16 %v562
        %v712 = vunpack.c.l.b16 %v563
        %v713 = vunpack.c.l.b16 %v564
        %v714 = vunpack.c.l.b16 %v565
        %v715 = vunpack.c.l.b16 %v566
        %v716 = vunpack.c.l.b16 %v567
        %v717 = vunpack.c.l.b16 %v568
        %v718 = vunpack.c.l.b16 %v569
        %v719 = vunpack.c.l.b16 %v570
        %v720 = vunpack.c.l.b16 %v571
        %v721 = vunpack.c.l.b16 %v572
        %v722 = vunpack.c.l.b16 %v573
        %v723 = vunpack.c.l.b16 %v574
        %v724 = vpack.c.b16 %v677, %v676
        %v725 = vpack.c.b16 %v679, %v678
        %v726 = vpack.c.b16 %v681, %v680
        %v727 = vpack.c.b16 %v683, %v682
        %v728 = vpack.c.b16 %v685, %v684
        %v729 = vpack.c.b16 %v687, %v686
        %v730 = vpack.c.b16 %v689, %v688
        %v731 = vpack.c.b16 %v691, %v690
        %v732 = vpack.c.b16 %v693, %v692
        %v733 = vpack.c.b16 %v695, %v694
        %v734 = vpack.c.b16 %v697, %v696
        %v735 = vpack.c.b16 %v699, %v698
        %v736 = vpack.c.b16 %v701, %v700
        %v737 = vpack.c.b16 %v703, %v702
        %v738 = vpack.c.b16 %v705, %v704
        %v739 = vpack.c.b16 %v707, %v706
        %v740 = vpack.c.b16 %v709, %v708
        %v741 = vpack.c.b16 %v711, %v710
        %v742 = vpack.c.b16 %v713, %v712
        %v743 = vpack.c.b16 %v715, %v714
        %v744 = vpack.c.b16 %v717, %v716
        %v745 = vpack.c.b16 %v719, %v718
        %v746 = vpack.c.b16 %v721, %v720
        %v747 = vpack.c.b16 %v723, %v722
        %772 = vmatpush.bf16.msra.mxu0 %v731
        %773 = vmatpush.bf16.msra.mxu0 %v730
        %774 = vmatpush.bf16.msra.mxu0 %v729
        %775 = vmatpush.bf16.msra.mxu0 %v728
        %776 = vmatpush.bf16.msra.mxu0 %v727
        %777 = vmatpush.bf16.msra.mxu0 %v726
        %778 = vmatpush.bf16.msra.mxu0 %v725
        %779 = vmatpush.bf16.msra.mxu0 %v724
        %780 = vmatmul.bf16.gmra.mxu0 %v619
        %v781 = vpop.f32.mrf.mxu0
        %v782 = vadd.f32 %v614, %v781
        %v783 = vpop.f32.mrf.mxu0
        %v784 = vadd.f32 %v614, %v783
        %785 = vdwg.mxu0
        %786 = vmatpush.bf16.msra.mxu0 %v739
        %787 = vmatpush.bf16.msra.mxu0 %v738
        %788 = vmatpush.bf16.msra.mxu0 %v737
        %789 = vmatpush.bf16.msra.mxu0 %v736
        %790 = vmatpush.bf16.msra.mxu0 %v735
        %791 = vmatpush.bf16.msra.mxu0 %v734
        %792 = vmatpush.bf16.msra.mxu0 %v733
        %793 = vmatpush.bf16.msra.mxu0 %v732
        %794 = vmatmul.bf16.gmra.mxu0 %v622
        %v795 = vpop.f32.mrf.mxu0
        %v796 = vadd.f32 %v782, %v795
        %v797 = vpop.f32.mrf.mxu0
        %v798 = vadd.f32 %v784, %v797
        %799 = vdwg.mxu0
        %800 = vmatpush.bf16.msra.mxu0 %v747
        %801 = vmatpush.bf16.msra.mxu0 %v746
        %802 = vmatpush.bf16.msra.mxu0 %v745
        %803 = vmatpush.bf16.msra.mxu0 %v744
        %804 = vmatpush.bf16.msra.mxu0 %v743
        %805 = vmatpush.bf16.msra.mxu0 %v742
        %806 = vmatpush.bf16.msra.mxu0 %v741
        %807 = vmatpush.bf16.msra.mxu0 %v740
        %808 = vmatmul.bf16.gmra.mxu0 %v624
        %v809 = vpop.f32.mrf.mxu0
        %v810 = vadd.f32 %v796, %v809
        %v811 = vpop.f32.mrf.mxu0
        %v812 = vadd.f32 %v798, %v811
        %813 = vdwg.mxu0
        %v814 = vmax.f32 %v810, 0.0
        %v815 = vmax.f32 %v812, 0.0
        %v816 = vld [vmem:[#allocation11] sm:$0xf]
        %v817 = vld [vmem:[#allocation11 + $0x4] sm:$0xf]
        %v818 = vld [vmem:[#allocation11 + $0x8] sm:$0xf]
        %v819 = vld [vmem:[#allocation11 + $0xc] sm:$0xf]
        %v820 = vld [vmem:[#allocation11 + $0x10] sm:$0xf]
        %v821 = vld [vmem:[#allocation11 + $0x14] sm:$0xf]
        %v822 = vld [vmem:[#allocation11 + $0x18] sm:$0xf]
        %v823 = vld [vmem:[#allocation11 + $0x1c] sm:$0xf]
        %v824 = vld [vmem:[#allocation11 + $0x20] sm:$0xf]
        %v825 = vld [vmem:[#allocation11 + $0x24] sm:$0xf]
        %v826 = vld [vmem:[#allocation11 + $0x28] sm:$0xf]
        %v827 = vld [vmem:[#allocation11 + $0x2c] sm:$0xf]
        %v828 = vld [vmem:[#allocation11 + $0x30] sm:$0xf]
        %v829 = vld [vmem:[#allocation11 + $0x34] sm:$0xf]
        %v830 = vld [vmem:[#allocation11 + $0x38] sm:$0xf]
        %v831 = vld [vmem:[#allocation11 + $0x3c] sm:$0xf]
        %v832 = vld [vmem:[#allocation11 + $0x40] sm:$0xf]
        %v833 = vld [vmem:[#allocation11 + $0x44] sm:$0xf]
        %v834 = vld [vmem:[#allocation11 + $0x48] sm:$0xf]
        %v835 = vld [vmem:[#allocation11 + $0x4c] sm:$0xf]
        %v836 = vld [vmem:[#allocation11 + $0x50] sm:$0xf]
        %v837 = vld [vmem:[#allocation11 + $0x54] sm:$0xf]
        %v838 = vld [vmem:[#allocation11 + $0x58] sm:$0xf]
        %v839 = vld [vmem:[#allocation11 + $0x5c] sm:$0xf]
        %v840 = vld [vmem:[#allocation11 + $0x60] sm:$0xf]
        %v841 = vld [vmem:[#allocation11 + $0x64] sm:$0xf]
        %v842 = vld [vmem:[#allocation11 + $0x68] sm:$0xf]
        %v843 = vld [vmem:[#allocation11 + $0x6c] sm:$0xf]
        %v844 = vld [vmem:[#allocation11 + $0x70] sm:$0xf]
        %v845 = vld [vmem:[#allocation11 + $0x74] sm:$0xf]
        %v846 = vld [vmem:[#allocation11 + $0x78] sm:$0xf]
        %v847 = vld [vmem:[#allocation11 + $0x7c] sm:$0xf]
        %v848 = vld [vmem:[#allocation11 + $0x80] sm:$0xf]
        %v849 = vld [vmem:[#allocation11 + $0x84] sm:$0xf]
        %v850 = vld [vmem:[#allocation11 + $0x88] sm:$0xf]
        %v851 = vld [vmem:[#allocation11 + $0x8c] sm:$0xf]
        %v852 = vld [vmem:[#allocation11 + $0x90] sm:$0xf]
        %v853 = vld [vmem:[#allocation11 + $0x94] sm:$0xf]
        %v854 = vld [vmem:[#allocation11 + $0x98] sm:$0xf]
        %v855 = vld [vmem:[#allocation11 + $0x9c] sm:$0xf]
        %v856 = vld [vmem:[#allocation11 + $0xa0] sm:$0xf]
        %v857 = vld [vmem:[#allocation11 + $0xa4] sm:$0xf]
        %v858 = vld [vmem:[#allocation11 + $0xa8] sm:$0xf]
        %v859 = vld [vmem:[#allocation11 + $0xac] sm:$0xf]
        %v860 = vld [vmem:[#allocation11 + $0xb0] sm:$0xf]
        %v861 = vld [vmem:[#allocation11 + $0xb4] sm:$0xf]
        %v862 = vld [vmem:[#allocation11 + $0xb8] sm:$0xf]
        %v863 = vld [vmem:[#allocation11 + $0xbc] sm:$0xf]
        %v864 = vld [vmem:[%s6] sm:$0x1]
        %v865 = vpack.c.bf16 %v814, %v814
        %v866 = vpack.c.bf16 %v815, %v815
        %867 = vst [vmem:[#allocation2 + $0x8] sm:$0xf] %v865
        %868 = vst [vmem:[#allocation2 + $0xc] sm:$0xf] %v866
        %v869 = vld [vmem:[#allocation2 + $0x4] sm:$0x8]
        %v870 = vld [vmem:[#allocation2 + $0x8] sm:$0xf]
        %v871 = vld [vmem:[#allocation2 + $0xc] sm:$0x7]
        %v872 = vld [vmem:[#allocation2 + $0xc] sm:$0xf]
        %v876 = vunpack.c.l.b16 %v869
        %v877 = vunpack.c.l.b16 %v870
        %v878 = vunpack.c.l.b16 %v871
        %v879 = vpack.c.b16 %v877, %v876
        %v880 = vpack.c.b16 %v878, %v878
        %v882 = vunpack.c.l.b16 %v872
        %v883 = vpack.c.b16 %v882, %v882
        %v885 = vshrl.u32 %v879, 16
        %v887 = vshll.u32 %v879, 16
        %v889 = vrot.slane %v887, 1
        %v890 = vor.u32 %v885, %v889
        %v892 = vshll.u32 %v883, 16
        %v894 = vrot.slane %v892, 1
        %v895 = vsel %vm595, %v890, %v894
        %v896 = vshrl.u32 %v883, 16
        %v898 = vor.u32 %v896, %v894
        %v899 = vpack.c.b16 %v882, %v877
        %v900 = vrot.slane %v899, 5
        %v902 = vperm.slane %v864, 0
        %v904 = vrot.slane %v879, 3
        %v905 = vrot.slane %v880, 3
        %v906 = vsel %vm616, %v904, %v905
        %v907 = vrot.slane %v895, 3
        %v908 = vrot.slane %v898, 3
        %v909 = vsel %vm616, %v907, %v908
        %v910 = vrot.slane %v900, 3
        %v911 = vsel %vm616, %v910, %v910
        %v963 = vunpack.c.l.b16 %v816
        %v964 = vunpack.c.l.b16 %v817
        %v965 = vunpack.c.l.b16 %v818
        %v966 = vunpack.c.l.b16 %v819
        %v967 = vunpack.c.l.b16 %v820
        %v968 = vunpack.c.l.b16 %v821
        %v969 = vunpack.c.l.b16 %v822
        %v970 = vunpack.c.l.b16 %v823
        %v971 = vunpack.c.l.b16 %v824
        %v972 = vunpack.c.l.b16 %v825
        %v973 = vunpack.c.l.b16 %v826
        %v974 = vunpack.c.l.b16 %v827
        %v975 = vunpack.c.l.b16 %v828
        %v976 = vunpack.c.l.b16 %v829
        %v977 = vunpack.c.l.b16 %v830
        %v978 = vunpack.c.l.b16 %v831
        %v979 = vunpack.c.l.b16 %v832
        %v980 = vunpack.c.l.b16 %v833
        %v981 = vunpack.c.l.b16 %v834
        %v982 = vunpack.c.l.b16 %v835
        %v983 = vunpack.c.l.b16 %v836
        %v984 = vunpack.c.l.b16 %v837
        %v985 = vunpack.c.l.b16 %v838
        %v986 = vunpack.c.l.b16 %v839
        %v987 = vunpack.c.l.b16 %v840
        %v988 = vunpack.c.l.b16 %v841
        %v989 = vunpack.c.l.b16 %v842
        %v990 = vunpack.c.l.b16 %v843
        %v991 = vunpack.c.l.b16 %v844
        %v992 = vunpack.c.l.b16 %v845
        %v993 = vunpack.c.l.b16 %v846
        %v994 = vunpack.c.l.b16 %v847
        %v995 = vunpack.c.l.b16 %v848
        %v996 = vunpack.c.l.b16 %v849
        %v997 = vunpack.c.l.b16 %v850
        %v998 = vunpack.c.l.b16 %v851
        %v999 = vunpack.c.l.b16 %v852
        %v1000 = vunpack.c.l.b16 %v853
        %v1001 = vunpack.c.l.b16 %v854
        %v1002 = vunpack.c.l.b16 %v855
        %v1003 = vunpack.c.l.b16 %v856
        %v1004 = vunpack.c.l.b16 %v857
        %v1005 = vunpack.c.l.b16 %v858
        %v1006 = vunpack.c.l.b16 %v859
        %v1007 = vunpack.c.l.b16 %v860
        %v1008 = vunpack.c.l.b16 %v861
        %v1009 = vunpack.c.l.b16 %v862
        %v1010 = vunpack.c.l.b16 %v863
        %v1011 = vpack.c.b16 %v964, %v963
        %v1012 = vpack.c.b16 %v966, %v965
        %v1013 = vpack.c.b16 %v968, %v967
        %v1014 = vpack.c.b16 %v970, %v969
        %v1015 = vpack.c.b16 %v972, %v971
        %v1016 = vpack.c.b16 %v974, %v973
        %v1017 = vpack.c.b16 %v976, %v975
        %v1018 = vpack.c.b16 %v978, %v977
        %v1019 = vpack.c.b16 %v980, %v979
        %v1020 = vpack.c.b16 %v982, %v981
        %v1021 = vpack.c.b16 %v984, %v983
        %v1022 = vpack.c.b16 %v986, %v985
        %v1023 = vpack.c.b16 %v988, %v987
        %v1024 = vpack.c.b16 %v990, %v989
        %v1025 = vpack.c.b16 %v992, %v991
        %v1026 = vpack.c.b16 %v994, %v993
        %v1027 = vpack.c.b16 %v996, %v995
        %v1028 = vpack.c.b16 %v998, %v997
        %v1029 = vpack.c.b16 %v1000, %v999
        %v1030 = vpack.c.b16 %v1002, %v1001
        %v1031 = vpack.c.b16 %v1004, %v1003
        %v1032 = vpack.c.b16 %v1006, %v1005
        %v1033 = vpack.c.b16 %v1008, %v1007
        %v1034 = vpack.c.b16 %v1010, %v1009
        %1059 = vmatpush.bf16.msra.mxu0 %v1018
        %1060 = vmatpush.bf16.msra.mxu0 %v1017
        %1061 = vmatpush.bf16.msra.mxu0 %v1016
        %1062 = vmatpush.bf16.msra.mxu0 %v1015
        %1063 = vmatpush.bf16.msra.mxu0 %v1014
        %1064 = vmatpush.bf16.msra.mxu0 %v1013
        %1065 = vmatpush.bf16.msra.mxu0 %v1012
        %1066 = vmatpush.bf16.msra.mxu0 %v1011
        %1067 = vmatmul.bf16.gmra.mxu0 %v906
        %v1068 = vpop.f32.mrf.mxu0
        %v1069 = vadd.f32 %v902, %v1068
        %v1070 = vpop.f32.mrf.mxu0
        %v1071 = vadd.f32 %v902, %v1070
        %1072 = vdwg.mxu0
        %1073 = vmatpush.bf16.msra.mxu0 %v1026
        %1074 = vmatpush.bf16.msra.mxu0 %v1025
        %1075 = vmatpush.bf16.msra.mxu0 %v1024
        %1076 = vmatpush.bf16.msra.mxu0 %v1023
        %1077 = vmatpush.bf16.msra.mxu0 %v1022
        %1078 = vmatpush.bf16.msra.mxu0 %v1021
        %1079 = vmatpush.bf16.msra.mxu0 %v1020
        %1080 = vmatpush.bf16.msra.mxu0 %v1019
        %1081 = vmatmul.bf16.gmra.mxu0 %v909
        %v1082 = vpop.f32.mrf.mxu0
        %v1083 = vadd.f32 %v1069, %v1082
        %v1084 = vpop.f32.mrf.mxu0
        %v1085 = vadd.f32 %v1071, %v1084
        %1086 = vdwg.mxu0
        %1087 = vmatpush.bf16.msra.mxu0 %v1034
        %1088 = vmatpush.bf16.msra.mxu0 %v1033
        %1089 = vmatpush.bf16.msra.mxu0 %v1032
        %1090 = vmatpush.bf16.msra.mxu0 %v1031
        %1091 = vmatpush.bf16.msra.mxu0 %v1030
        %1092 = vmatpush.bf16.msra.mxu0 %v1029
        %1093 = vmatpush.bf16.msra.mxu0 %v1028
        %1094 = vmatpush.bf16.msra.mxu0 %v1027
        %1095 = vmatmul.bf16.gmra.mxu0 %v911
        %v1096 = vpop.f32.mrf.mxu0
        %v1097 = vadd.f32 %v1083, %v1096
        %v1098 = vpop.f32.mrf.mxu0
        %v1099 = vadd.f32 %v1085, %v1098
        %1100 = vdwg.mxu0
        %1101 = vadd.xlane.f32.xlu0 %v1097
        %v1102 = vpop.xlane.xlu0 %1101
        %1103 = vadd.xlane.f32.xlu0 %v1099
        %v1104 = vpop.xlane.xlu0 %1103
        %v1105 = vmul.f32 %v1102, 0.03125
        %v1106 = vmul.f32 %v1104, 0.03125
        %v1107 = vmul.f32 %v1097, %v1097
        %v1108 = vmul.f32 %v1099, %v1099
        %1109 = vadd.xlane.f32.xlu0 %v1107
        %v1110 = vpop.xlane.xlu0 %1109
        %1111 = vadd.xlane.f32.xlu0 %v1108
        %v1112 = vpop.xlane.xlu0 %1111
        %v1113 = vmul.f32 %v1110, 0.03125
        %v1114 = vmul.f32 %v1112, 0.03125
        %v1115 = vmul.f32 %v1105, %v1105
        %v1116 = vmul.f32 %v1106, %v1106
        %v1117 = vsub.f32 %v1113, %v1115
        %v1118 = vsub.f32 %v1114, %v1116
        %v1119 = vmax.f32 %v1117, 0.0
        %v1120 = vmax.f32 %v1118, 0.0
        %v1121 = vsub.f32 %v1097, %v1105
        %v1122 = vsub.f32 %v1099, %v1106
        %v1123 = vadd.f32 %v1119, 1e-05
        %v1124 = vadd.f32 %v1120, 1e-05
        %v1125 = vrsqrt.pop %v1123
        %v1126 = vmul.f32 %v1125, %v1123
        %v1127 = vmul.f32 %v1126, %v1125
        %v1128 = vmul.f32 0.5, %v1127
        %v1129 = vsub.f32 1.5, %v1128
        %v1130 = vmul.f32 %v1125, %v1129
        %vm1131 = vweird.f32 %v1123
        %vm1132 = vweird.f32 %v1125
        %vm1133 = vmor %vm1131, %vm1132
        %v1134 = vsel %vm1133, %v1125, %v1130
        %v1135 = vrsqrt.pop %v1124
        %v1136 = vmul.f32 %v1135, %v1124
        %v1137 = vmul.f32 %v1136, %v1135
        %v1138 = vmul.f32 0.5, %v1137
        %v1139 = vsub.f32 1.5, %v1138
        %v1140 = vmul.f32 %v1135, %v1139
        %vm1141 = vweird.f32 %v1124
        %vm1142 = vweird.f32 %v1135
        %vm1143 = vmor %vm1141, %vm1142
        %v1144 = vsel %vm1143, %v1135, %v1140
        %v1145 = vmul.f32 %v1121, %v1134
        %v1146 = vmul.f32 %v1122, %v1144
        %v1147 = vld [vmem:[%s7] sm:$0x1]
        %v1149 = vperm.slane %v1147, 0
        %v1151 = vmul.f32 %v1145, %v1149
        %v1152 = vmul.f32 %v1146, %v1149
        %v1153 = vld [vmem:[#allocation12] sm:$0x1]
        %v1155 = vperm.slane %v1153, 0
        %v1157 = vadd.f32 %v1151, %v1155
        %v1158 = vadd.f32 %v1152, %v1155
        %v1159 = vadd.f32 %v1157, %v521
        %v1160 = vadd.f32 %v1158, %v523
        %v1161 = vmax.f32 %v1159, 0.0
        %v1162 = vmax.f32 %v1160, 0.0
        %s1163 = scalar_lea.vmem [#allocation9], 192
        %v1164 = vld [vmem:[%s1163] sm:$0xf]
        %v1165 = vld [vmem:[%s1163 + $0x4] sm:$0xf]
        %v1166 = vld [vmem:[%s1163 + $0x8] sm:$0xf]
        %v1167 = vld [vmem:[%s1163 + $0xc] sm:$0xf]
        %v1168 = vld [vmem:[%s1163 + $0x10] sm:$0xf]
        %v1169 = vld [vmem:[%s1163 + $0x14] sm:$0xf]
        %v1170 = vld [vmem:[%s1163 + $0x18] sm:$0xf]
        %v1171 = vld [vmem:[%s1163 + $0x1c] sm:$0xf]
        %v1172 = vld [vmem:[%s1163 + $0x20] sm:$0xf]
        %v1173 = vld [vmem:[%s1163 + $0x24] sm:$0xf]
        %v1174 = vld [vmem:[%s1163 + $0x28] sm:$0xf]
        %v1175 = vld [vmem:[%s1163 + $0x2c] sm:$0xf]
        %v1176 = vld [vmem:[%s1163 + $0x30] sm:$0xf]
        %v1177 = vld [vmem:[%s1163 + $0x34] sm:$0xf]
        %v1178 = vld [vmem:[%s1163 + $0x38] sm:$0xf]
        %v1179 = vld [vmem:[%s1163 + $0x3c] sm:$0xf]
        %v1180 = vld [vmem:[%s1163 + $0x40] sm:$0xf]
        %v1181 = vld [vmem:[%s1163 + $0x44] sm:$0xf]
        %v1182 = vld [vmem:[%s1163 + $0x48] sm:$0xf]
        %v1183 = vld [vmem:[%s1163 + $0x4c] sm:$0xf]
        %v1184 = vld [vmem:[%s1163 + $0x50] sm:$0xf]
        %v1185 = vld [vmem:[%s1163 + $0x54] sm:$0xf]
        %v1186 = vld [vmem:[%s1163 + $0x58] sm:$0xf]
        %v1187 = vld [vmem:[%s1163 + $0x5c] sm:$0xf]
        %v1188 = vld [vmem:[%s1163 + $0x60] sm:$0xf]
        %v1189 = vld [vmem:[%s1163 + $0x64] sm:$0xf]
        %v1190 = vld [vmem:[%s1163 + $0x68] sm:$0xf]
        %v1191 = vld [vmem:[%s1163 + $0x6c] sm:$0xf]
        %v1192 = vld [vmem:[%s1163 + $0x70] sm:$0xf]
        %v1193 = vld [vmem:[%s1163 + $0x74] sm:$0xf]
        %v1194 = vld [vmem:[%s1163 + $0x78] sm:$0xf]
        %v1195 = vld [vmem:[%s1163 + $0x7c] sm:$0xf]
        %v1196 = vld [vmem:[%s1163 + $0x80] sm:$0xf]
        %v1197 = vld [vmem:[%s1163 + $0x84] sm:$0xf]
        %v1198 = vld [vmem:[%s1163 + $0x88] sm:$0xf]
        %v1199 = vld [vmem:[%s1163 + $0x8c] sm:$0xf]
        %v1200 = vld [vmem:[%s1163 + $0x90] sm:$0xf]
        %v1201 = vld [vmem:[%s1163 + $0x94] sm:$0xf]
        %v1202 = vld [vmem:[%s1163 + $0x98] sm:$0xf]
        %v1203 = vld [vmem:[%s1163 + $0x9c] sm:$0xf]
        %v1204 = vld [vmem:[%s1163 + $0xa0] sm:$0xf]
        %v1205 = vld [vmem:[%s1163 + $0xa4] sm:$0xf]
        %v1206 = vld [vmem:[%s1163 + $0xa8] sm:$0xf]
        %v1207 = vld [vmem:[%s1163 + $0xac] sm:$0xf]
        %v1208 = vld [vmem:[%s1163 + $0xb0] sm:$0xf]
        %v1209 = vld [vmem:[%s1163 + $0xb4] sm:$0xf]
        %v1210 = vld [vmem:[%s1163 + $0xb8] sm:$0xf]
        %v1211 = vld [vmem:[%s1163 + $0xbc] sm:$0xf]
        %s1212 = scalar_lea.vmem %s4, 1
        %v1213 = vld [vmem:[%s1212] sm:$0x1]
        %v1214 = vpack.c.bf16 %v1161, %v1161
        %v1215 = vpack.c.bf16 %v1162, %v1162
        %1216 = vst [vmem:[#allocation2 + $0x8] sm:$0xf] %v1214
        %1217 = vst [vmem:[#allocation2 + $0xc] sm:$0xf] %v1215
        %v1218 = vld [vmem:[#allocation2 + $0x4] sm:$0xc]
        %v1219 = vld [vmem:[#allocation2 + $0x8] sm:$0xf]
        %v1220 = vld [vmem:[#allocation2 + $0xc] sm:$0x3]
        %v1221 = vld [vmem:[#allocation2 + $0x4] sm:$0x8]
        %v1222 = vld [vmem:[#allocation2 + $0xc] sm:$0x7]
        %v1223 = vld [vmem:[#allocation2 + $0xc] sm:$0xf]
        %v1227 = vunpack.c.l.b16 %v1218
        %v1228 = vunpack.c.l.b16 %v1219
        %v1229 = vunpack.c.l.b16 %v1220
        %v1230 = vpack.c.b16 %v1228, %v1227
        %v1231 = vpack.c.b16 %v1229, %v1229
        %v1234 = vunpack.c.l.b16 %v1221
        %v1235 = vunpack.c.l.b16 %v1222
        %v1236 = vpack.c.b16 %v1228, %v1234
        %v1237 = vpack.c.b16 %v1235, %v1235
        %vm1238 = vcmask 1046528
        %v1239 = vrot.slane %v1236, 1
        %v1240 = vrot.slane %v1237, 1
        %v1241 = vsel %vm1238, %v1239, %v1240
        %v1243 = vunpack.c.l.b16 %v1223
        %v1244 = vpack.c.b16 %v1243, %v1228
        %v1245 = vrot.slane %v1244, 6
        %v1247 = vperm.slane %v1213, 0
        %vm1249 = vcmask 1045504
        %v1250 = vrot.slane %v1230, 2
        %v1251 = vrot.slane %v1231, 2
        %v1252 = vsel %vm1249, %v1250, %v1251
        %v1253 = vrot.slane %v1241, 2
        %v1254 = vrot.slane %v1240, 2
        %v1255 = vsel %vm1249, %v1253, %v1254
        %v1256 = vrot.slane %v1245, 2
        %v1257 = vsel %vm1249, %v1256, %v1256
        %v1309 = vunpack.c.l.b16 %v1164
        %v1310 = vunpack.c.l.b16 %v1165
        %v1311 = vunpack.c.l.b16 %v1166
        %v1312 = vunpack.c.l.b16 %v1167
        %v1313 = vunpack.c.l.b16 %v1168
        %v1314 = vunpack.c.l.b16 %v1169
        %v1315 = vunpack.c.l.b16 %v1170
        %v1316 = vunpack.c.l.b16 %v1171
        %v1317 = vunpack.c.l.b16 %v1172
        %v1318 = vunpack.c.l.b16 %v1173
        %v1319 = vunpack.c.l.b16 %v1174
        %v1320 = vunpack.c.l.b16 %v1175
        %v1321 = vunpack.c.l.b16 %v1176
        %v1322 = vunpack.c.l.b16 %v1177
        %v1323 = vunpack.c.l.b16 %v1178
        %v1324 = vunpack.c.l.b16 %v1179
        %v1325 = vunpack.c.l.b16 %v1180
        %v1326 = vunpack.c.l.b16 %v1181
        %v1327 = vunpack.c.l.b16 %v1182
        %v1328 = vunpack.c.l.b16 %v1183
        %v1329 = vunpack.c.l.b16 %v1184
        %v1330 = vunpack.c.l.b16 %v1185
        %v1331 = vunpack.c.l.b16 %v1186
        %v1332 = vunpack.c.l.b16 %v1187
        %v1333 = vunpack.c.l.b16 %v1188
        %v1334 = vunpack.c.l.b16 %v1189
        %v1335 = vunpack.c.l.b16 %v1190
        %v1336 = vunpack.c.l.b16 %v1191
        %v1337 = vunpack.c.l.b16 %v1192
        %v1338 = vunpack.c.l.b16 %v1193
        %v1339 = vunpack.c.l.b16 %v1194
        %v1340 = vunpack.c.l.b16 %v1195
        %v1341 = vunpack.c.l.b16 %v1196
        %v1342 = vunpack.c.l.b16 %v1197
        %v1343 = vunpack.c.l.b16 %v1198
        %v1344 = vunpack.c.l.b16 %v1199
        %v1345 = vunpack.c.l.b16 %v1200
        %v1346 = vunpack.c.l.b16 %v1201
        %v1347 = vunpack.c.l.b16 %v1202
        %v1348 = vunpack.c.l.b16 %v1203
        %v1349 = vunpack.c.l.b16 %v1204
        %v1350 = vunpack.c.l.b16 %v1205
        %v1351 = vunpack.c.l.b16 %v1206
        %v1352 = vunpack.c.l.b16 %v1207
        %v1353 = vunpack.c.l.b16 %v1208
        %v1354 = vunpack.c.l.b16 %v1209
        %v1355 = vunpack.c.l.b16 %v1210
        %v1356 = vunpack.c.l.b16 %v1211
        %v1357 = vpack.c.b16 %v1310, %v1309
        %v1358 = vpack.c.b16 %v1312, %v1311
        %v1359 = vpack.c.b16 %v1314, %v1313
        %v1360 = vpack.c.b16 %v1316, %v1315
        %v1361 = vpack.c.b16 %v1318, %v1317
        %v1362 = vpack.c.b16 %v1320, %v1319
        %v1363 = vpack.c.b16 %v1322, %v1321
        %v1364 = vpack.c.b16 %v1324, %v1323
        %v1365 = vpack.c.b16 %v1326, %v1325
        %v1366 = vpack.c.b16 %v1328, %v1327
        %v1367 = vpack.c.b16 %v1330, %v1329
        %v1368 = vpack.c.b16 %v1332, %v1331
        %v1369 = vpack.c.b16 %v1334, %v1333
        %v1370 = vpack.c.b16 %v1336, %v1335
        %v1371 = vpack.c.b16 %v1338, %v1337
        %v1372 = vpack.c.b16 %v1340, %v1339
        %v1373 = vpack.c.b16 %v1342, %v1341
        %v1374 = vpack.c.b16 %v1344, %v1343
        %v1375 = vpack.c.b16 %v1346, %v1345
        %v1376 = vpack.c.b16 %v1348, %v1347
        %v1377 = vpack.c.b16 %v1350, %v1349
        %v1378 = vpack.c.b16 %v1352, %v1351
        %v1379 = vpack.c.b16 %v1354, %v1353
        %v1380 = vpack.c.b16 %v1356, %v1355
        %1405 = vmatpush.bf16.msra.mxu0 %v1364
        %1406 = vmatpush.bf16.msra.mxu0 %v1363
        %1407 = vmatpush.bf16.msra.mxu0 %v1362
        %1408 = vmatpush.bf16.msra.mxu0 %v1361
        %1409 = vmatpush.bf16.msra.mxu0 %v1360
        %1410 = vmatpush.bf16.msra.mxu0 %v1359
        %1411 = vmatpush.bf16.msra.mxu0 %v1358
        %1412 = vmatpush.bf16.msra.mxu0 %v1357
        %1413 = vmatmul.bf16.gmra.mxu0 %v1252
        %v1414 = vpop.f32.mrf.mxu0
        %v1415 = vadd.f32 %v1247, %v1414
        %v1416 = vpop.f32.mrf.mxu0
        %v1417 = vadd.f32 %v1247, %v1416
        %1418 = vdwg.mxu0
        %1419 = vmatpush.bf16.msra.mxu0 %v1372
        %1420 = vmatpush.bf16.msra.mxu0 %v1371
        %1421 = vmatpush.bf16.msra.mxu0 %v1370
        %1422 = vmatpush.bf16.msra.mxu0 %v1369
        %1423 = vmatpush.bf16.msra.mxu0 %v1368
        %1424 = vmatpush.bf16.msra.mxu0 %v1367
        %1425 = vmatpush.bf16.msra.mxu0 %v1366
        %1426 = vmatpush.bf16.msra.mxu0 %v1365
        %1427 = vmatmul.bf16.gmra.mxu0 %v1255
        %v1428 = vpop.f32.mrf.mxu0
        %v1429 = vadd.f32 %v1415, %v1428
        %v1430 = vpop.f32.mrf.mxu0
        %v1431 = vadd.f32 %v1417, %v1430
        %1432 = vdwg.mxu0
        %1433 = vmatpush.bf16.msra.mxu0 %v1380
        %1434 = vmatpush.bf16.msra.mxu0 %v1379
        %1435 = vmatpush.bf16.msra.mxu0 %v1378
        %1436 = vmatpush.bf16.msra.mxu0 %v1377
        %1437 = vmatpush.bf16.msra.mxu0 %v1376
        %1438 = vmatpush.bf16.msra.mxu0 %v1375
        %1439 = vmatpush.bf16.msra.mxu0 %v1374
        %1440 = vmatpush.bf16.msra.mxu0 %v1373
        %1441 = vmatmul.bf16.gmra.mxu0 %v1257
        %v1442 = vpop.f32.mrf.mxu0
        %v1443 = vadd.f32 %v1429, %v1442
        %v1444 = vpop.f32.mrf.mxu0
        %v1445 = vadd.f32 %v1431, %v1444
        %1446 = vdwg.mxu0
        %v1447 = vmax.f32 %v1443, 0.0
        %v1448 = vmax.f32 %v1445, 0.0
        %s1449 = scalar_lea.vmem [#allocation11], 192
        %v1450 = vld [vmem:[%s1449] sm:$0xf]
        %v1451 = vld [vmem:[%s1449 + $0x4] sm:$0xf]
        %v1452 = vld [vmem:[%s1449 + $0x8] sm:$0xf]
        %v1453 = vld [vmem:[%s1449 + $0xc] sm:$0xf]
        %v1454 = vld [vmem:[%s1449 + $0x10] sm:$0xf]
        %v1455 = vld [vmem:[%s1449 + $0x14] sm:$0xf]
        %v1456 = vld [vmem:[%s1449 + $0x18] sm:$0xf]
        %v1457 = vld [vmem:[%s1449 + $0x1c] sm:$0xf]
        %v1458 = vld [vmem:[%s1449 + $0x20] sm:$0xf]
        %v1459 = vld [vmem:[%s1449 + $0x24] sm:$0xf]
        %v1460 = vld [vmem:[%s1449 + $0x28] sm:$0xf]
        %v1461 = vld [vmem:[%s1449 + $0x2c] sm:$0xf]
        %v1462 = vld [vmem:[%s1449 + $0x30] sm:$0xf]
        %v1463 = vld [vmem:[%s1449 + $0x34] sm:$0xf]
        %v1464 = vld [vmem:[%s1449 + $0x38] sm:$0xf]
        %v1465 = vld [vmem:[%s1449 + $0x3c] sm:$0xf]
        %v1466 = vld [vmem:[%s1449 + $0x40] sm:$0xf]
        %v1467 = vld [vmem:[%s1449 + $0x44] sm:$0xf]
        %v1468 = vld [vmem:[%s1449 + $0x48] sm:$0xf]
        %v1469 = vld [vmem:[%s1449 + $0x4c] sm:$0xf]
        %v1470 = vld [vmem:[%s1449 + $0x50] sm:$0xf]
        %v1471 = vld [vmem:[%s1449 + $0x54] sm:$0xf]
        %v1472 = vld [vmem:[%s1449 + $0x58] sm:$0xf]
        %v1473 = vld [vmem:[%s1449 + $0x5c] sm:$0xf]
        %v1474 = vld [vmem:[%s1449 + $0x60] sm:$0xf]
        %v1475 = vld [vmem:[%s1449 + $0x64] sm:$0xf]
        %v1476 = vld [vmem:[%s1449 + $0x68] sm:$0xf]
        %v1477 = vld [vmem:[%s1449 + $0x6c] sm:$0xf]
        %v1478 = vld [vmem:[%s1449 + $0x70] sm:$0xf]
        %v1479 = vld [vmem:[%s1449 + $0x74] sm:$0xf]
        %v1480 = vld [vmem:[%s1449 + $0x78] sm:$0xf]
        %v1481 = vld [vmem:[%s1449 + $0x7c] sm:$0xf]
        %v1482 = vld [vmem:[%s1449 + $0x80] sm:$0xf]
        %v1483 = vld [vmem:[%s1449 + $0x84] sm:$0xf]
        %v1484 = vld [vmem:[%s1449 + $0x88] sm:$0xf]
        %v1485 = vld [vmem:[%s1449 + $0x8c] sm:$0xf]
        %v1486 = vld [vmem:[%s1449 + $0x90] sm:$0xf]
        %v1487 = vld [vmem:[%s1449 + $0x94] sm:$0xf]
        %v1488 = vld [vmem:[%s1449 + $0x98] sm:$0xf]
        %v1489 = vld [vmem:[%s1449 + $0x9c] sm:$0xf]
        %v1490 = vld [vmem:[%s1449 + $0xa0] sm:$0xf]
        %v1491 = vld [vmem:[%s1449 + $0xa4] sm:$0xf]
        %v1492 = vld [vmem:[%s1449 + $0xa8] sm:$0xf]
        %v1493 = vld [vmem:[%s1449 + $0xac] sm:$0xf]
        %v1494 = vld [vmem:[%s1449 + $0xb0] sm:$0xf]
        %v1495 = vld [vmem:[%s1449 + $0xb4] sm:$0xf]
        %v1496 = vld [vmem:[%s1449 + $0xb8] sm:$0xf]
        %v1497 = vld [vmem:[%s1449 + $0xbc] sm:$0xf]
        %s1498 = scalar_lea.vmem %s6, 1
        %v1499 = vld [vmem:[%s1498] sm:$0x1]
        %v1500 = vpack.c.bf16 %v1447, %v1447
        %v1501 = vpack.c.bf16 %v1448, %v1448
        %1502 = vst [vmem:[#allocation2 + $0x8] sm:$0xf] %v1500
        %1503 = vst [vmem:[#allocation2 + $0xc] sm:$0xf] %v1501
        %v1504 = vld [vmem:[#allocation2 + $0x4] sm:$0xc]
        %v1505 = vld [vmem:[#allocation2 + $0x8] sm:$0xf]
        %v1506 = vld [vmem:[#allocation2 + $0xc] sm:$0x3]
        %v1507 = vld [vmem:[#allocation2 + $0x4] sm:$0x8]
        %v1508 = vld [vmem:[#allocation2 + $0xc] sm:$0x7]
        %v1509 = vld [vmem:[#allocation2 + $0xc] sm:$0xf]
        %v1513 = vunpack.c.l.b16 %v1504
        %v1514 = vunpack.c.l.b16 %v1505
        %v1515 = vunpack.c.l.b16 %v1506
        %v1516 = vpack.c.b16 %v1514, %v1513
        %v1517 = vpack.c.b16 %v1515, %v1515
        %v1520 = vunpack.c.l.b16 %v1507
        %v1521 = vunpack.c.l.b16 %v1508
        %v1522 = vpack.c.b16 %v1514, %v1520
        %v1523 = vpack.c.b16 %v1521, %v1521
        %v1524 = vrot.slane %v1522, 1
        %v1525 = vrot.slane %v1523, 1
        %v1526 = vsel %vm1238, %v1524, %v1525
        %v1528 = vunpack.c.l.b16 %v1509
        %v1529 = vpack.c.b16 %v1528, %v1514
        %v1530 = vrot.slane %v1529, 6
        %v1532 = vperm.slane %v1499, 0
        %v1534 = vrot.slane %v1516, 2
        %v1535 = vrot.slane %v1517, 2
        %v1536 = vsel %vm1249, %v1534, %v1535
        %v1537 = vrot.slane %v1526, 2
        %v1538 = vrot.slane %v1525, 2
        %v1539 = vsel %vm1249, %v1537, %v1538
        %v1540 = vrot.slane %v1530, 2
        %v1541 = vsel %vm1249, %v1540, %v1540
        %v1593 = vunpack.c.l.b16 %v1450
        %v1594 = vunpack.c.l.b16 %v1451
        %v1595 = vunpack.c.l.b16 %v1452
        %v1596 = vunpack.c.l.b16 %v1453
        %v1597 = vunpack.c.l.b16 %v1454
        %v1598 = vunpack.c.l.b16 %v1455
        %v1599 = vunpack.c.l.b16 %v1456
        %v1600 = vunpack.c.l.b16 %v1457
        %v1601 = vunpack.c.l.b16 %v1458
        %v1602 = vunpack.c.l.b16 %v1459
        %v1603 = vunpack.c.l.b16 %v1460
        %v1604 = vunpack.c.l.b16 %v1461
        %v1605 = vunpack.c.l.b16 %v1462
        %v1606 = vunpack.c.l.b16 %v1463
        %v1607 = vunpack.c.l.b16 %v1464
        %v1608 = vunpack.c.l.b16 %v1465
        %v1609 = vunpack.c.l.b16 %v1466
        %v1610 = vunpack.c.l.b16 %v1467
        %v1611 = vunpack.c.l.b16 %v1468
        %v1612 = vunpack.c.l.b16 %v1469
        %v1613 = vunpack.c.l.b16 %v1470
        %v1614 = vunpack.c.l.b16 %v1471
        %v1615 = vunpack.c.l.b16 %v1472
        %v1616 = vunpack.c.l.b16 %v1473
        %v1617 = vunpack.c.l.b16 %v1474
        %v1618 = vunpack.c.l.b16 %v1475
        %v1619 = vunpack.c.l.b16 %v1476
        %v1620 = vunpack.c.l.b16 %v1477
        %v1621 = vunpack.c.l.b16 %v1478
        %v1622 = vunpack.c.l.b16 %v1479
        %v1623 = vunpack.c.l.b16 %v1480
        %v1624 = vunpack.c.l.b16 %v1481
        %v1625 = vunpack.c.l.b16 %v1482
        %v1626 = vunpack.c.l.b16 %v1483
        %v1627 = vunpack.c.l.b16 %v1484
        %v1628 = vunpack.c.l.b16 %v1485
        %v1629 = vunpack.c.l.b16 %v1486
        %v1630 = vunpack.c.l.b16 %v1487
        %v1631 = vunpack.c.l.b16 %v1488
        %v1632 = vunpack.c.l.b16 %v1489
        %v1633 = vunpack.c.l.b16 %v1490
        %v1634 = vunpack.c.l.b16 %v1491
        %v1635 = vunpack.c.l.b16 %v1492
        %v1636 = vunpack.c.l.b16 %v1493
        %v1637 = vunpack.c.l.b16 %v1494
        %v1638 = vunpack.c.l.b16 %v1495
        %v1639 = vunpack.c.l.b16 %v1496
        %v1640 = vunpack.c.l.b16 %v1497
        %v1641 = vpack.c.b16 %v1594, %v1593
        %v1642 = vpack.c.b16 %v1596, %v1595
        %v1643 = vpack.c.b16 %v1598, %v1597
        %v1644 = vpack.c.b16 %v1600, %v1599
        %v1645 = vpack.c.b16 %v1602, %v1601
        %v1646 = vpack.c.b16 %v1604, %v1603
        %v1647 = vpack.c.b16 %v1606, %v1605
        %v1648 = vpack.c.b16 %v1608, %v1607
        %v1649 = vpack.c.b16 %v1610, %v1609
        %v1650 = vpack.c.b16 %v1612, %v1611
        %v1651 = vpack.c.b16 %v1614, %v1613
        %v1652 = vpack.c.b16 %v1616, %v1615
        %v1653 = vpack.c.b16 %v1618, %v1617
        %v1654 = vpack.c.b16 %v1620, %v1619
        %v1655 = vpack.c.b16 %v1622, %v1621
        %v1656 = vpack.c.b16 %v1624, %v1623
        %v1657 = vpack.c.b16 %v1626, %v1625
        %v1658 = vpack.c.b16 %v1628, %v1627
        %v1659 = vpack.c.b16 %v1630, %v1629
        %v1660 = vpack.c.b16 %v1632, %v1631
        %v1661 = vpack.c.b16 %v1634, %v1633
        %v1662 = vpack.c.b16 %v1636, %v1635
        %v1663 = vpack.c.b16 %v1638, %v1637
        %v1664 = vpack.c.b16 %v1640, %v1639
        %1689 = vmatpush.bf16.msra.mxu0 %v1648
        %1690 = vmatpush.bf16.msra.mxu0 %v1647
        %1691 = vmatpush.bf16.msra.mxu0 %v1646
        %1692 = vmatpush.bf16.msra.mxu0 %v1645
        %1693 = vmatpush.bf16.msra.mxu0 %v1644
        %1694 = vmatpush.bf16.msra.mxu0 %v1643
        %1695 = vmatpush.bf16.msra.mxu0 %v1642
        %1696 = vmatpush.bf16.msra.mxu0 %v1641
        %1697 = vmatmul.bf16.gmra.mxu0 %v1536
        %v1698 = vpop.f32.mrf.mxu0
        %v1699 = vadd.f32 %v1532, %v1698
        %v1700 = vpop.f32.mrf.mxu0
        %v1701 = vadd.f32 %v1532, %v1700
        %1702 = vdwg.mxu0
        %1703 = vmatpush.bf16.msra.mxu0 %v1656
        %1704 = vmatpush.bf16.msra.mxu0 %v1655
        %1705 = vmatpush.bf16.msra.mxu0 %v1654
        %1706 = vmatpush.bf16.msra.mxu0 %v1653
        %1707 = vmatpush.bf16.msra.mxu0 %v1652
        %1708 = vmatpush.bf16.msra.mxu0 %v1651
        %1709 = vmatpush.bf16.msra.mxu0 %v1650
        %1710 = vmatpush.bf16.msra.mxu0 %v1649
        %1711 = vmatmul.bf16.gmra.mxu0 %v1539
        %v1712 = vpop.f32.mrf.mxu0
        %v1713 = vadd.f32 %v1699, %v1712
        %v1714 = vpop.f32.mrf.mxu0
        %v1715 = vadd.f32 %v1701, %v1714
        %1716 = vdwg.mxu0
        %1717 = vmatpush.bf16.msra.mxu0 %v1664
        %1718 = vmatpush.bf16.msra.mxu0 %v1663
        %1719 = vmatpush.bf16.msra.mxu0 %v1662
        %1720 = vmatpush.bf16.msra.mxu0 %v1661
        %1721 = vmatpush.bf16.msra.mxu0 %v1660
        %1722 = vmatpush.bf16.msra.mxu0 %v1659
        %1723 = vmatpush.bf16.msra.mxu0 %v1658
        %1724 = vmatpush.bf16.msra.mxu0 %v1657
        %1725 = vmatmul.bf16.gmra.mxu0 %v1541
        %v1726 = vpop.f32.mrf.mxu0
        %v1727 = vadd.f32 %v1713, %v1726
        %v1728 = vpop.f32.mrf.mxu0
        %v1729 = vadd.f32 %v1715, %v1728
        %1730 = vdwg.mxu0
        %1731 = vadd.xlane.f32.xlu0 %v1727
        %v1732 = vpop.xlane.xlu0 %1731
        %1733 = vadd.xlane.f32.xlu0 %v1729
        %v1734 = vpop.xlane.xlu0 %1733
        %v1735 = vmul.f32 %v1732, 0.03125
        %v1736 = vmul.f32 %v1734, 0.03125
        %v1737 = vmul.f32 %v1727, %v1727
        %v1738 = vmul.f32 %v1729, %v1729
        %1739 = vadd.xlane.f32.xlu0 %v1737
        %v1740 = vpop.xlane.xlu0 %1739
        %1741 = vadd.xlane.f32.xlu0 %v1738
        %v1742 = vpop.xlane.xlu0 %1741
        %v1743 = vmul.f32 %v1740, 0.03125
        %v1744 = vmul.f32 %v1742, 0.03125
        %v1745 = vmul.f32 %v1735, %v1735
        %v1746 = vmul.f32 %v1736, %v1736
        %v1747 = vsub.f32 %v1743, %v1745
        %v1748 = vsub.f32 %v1744, %v1746
        %v1749 = vmax.f32 %v1747, 0.0
        %v1750 = vmax.f32 %v1748, 0.0
        %v1751 = vsub.f32 %v1727, %v1735
        %v1752 = vsub.f32 %v1729, %v1736
        %v1753 = vadd.f32 %v1749, 1e-05
        %v1754 = vadd.f32 %v1750, 1e-05
        %v1755 = vrsqrt.pop %v1753
        %v1756 = vmul.f32 %v1755, %v1753
        %v1757 = vmul.f32 %v1756, %v1755
        %v1758 = vmul.f32 0.5, %v1757
        %v1759 = vsub.f32 1.5, %v1758
        %v1760 = vmul.f32 %v1755, %v1759
        %vm1761 = vweird.f32 %v1753
        %vm1762 = vweird.f32 %v1755
        %vm1763 = vmor %vm1761, %vm1762
        %v1764 = vsel %vm1763, %v1755, %v1760
        %v1765 = vrsqrt.pop %v1754
        %v1766 = vmul.f32 %v1765, %v1754
        %v1767 = vmul.f32 %v1766, %v1765
        %v1768 = vmul.f32 0.5, %v1767
        %v1769 = vsub.f32 1.5, %v1768
        %v1770 = vmul.f32 %v1765, %v1769
        %vm1771 = vweird.f32 %v1754
        %vm1772 = vweird.f32 %v1765
        %vm1773 = vmor %vm1771, %vm1772
        %v1774 = vsel %vm1773, %v1765, %v1770
        %v1775 = vmul.f32 %v1751, %v1764
        %v1776 = vmul.f32 %v1752, %v1774
        %s1777 = scalar_lea.vmem %s7, 1
        %v1778 = vld [vmem:[%s1777] sm:$0x1]
        %v1780 = vperm.slane %v1778, 0
        %v1782 = vmul.f32 %v1775, %v1780
        %v1783 = vmul.f32 %v1776, %v1780
        %s1784 = scalar_lea.vmem [#allocation12], 1
        %v1785 = vld [vmem:[%s1784] sm:$0x1]
        %v1787 = vperm.slane %v1785, 0
        %v1789 = vadd.f32 %v1782, %v1787
        %v1790 = vadd.f32 %v1783, %v1787
        %v1791 = vadd.f32 %v1789, %v1161
        %v1792 = vadd.f32 %v1790, %v1162
        %v1793 = vmax.f32 %v1791, 0.0
        %v1794 = vmax.f32 %v1792, 0.0
        %1795 = vst [vmem:[%s433] sm:$0xff] %v1793
        %1796 = vst [vmem:[%s433 + $0x8] sm:$0xff] %v1794
        %s1797 = sand.u32 %s231, 1
        %s1798 = scalar_lea.sflag [#allocation5], %s1797
        %s1799 = sand.u32 %s231, 1
        %s1800 = smul.addr %s1799, 16
        %s1801 = scalar_lea.vmem [#allocation14], %s1800
        // Predicated region
        $region81: #{tpu_custom_call.1} parent=55 // pred_check
          %p1802 = pneg %p241
        $region82: #{tpu_custom_call.1} parent=55 // pred_check_branch
          %1804 = sbr.rel (%p1802) target = $region84
        $region83: #{tpu_custom_call.1} parent=55 // pred_region
          %1806 = vsyncadd %s1798, 0
          %s1807 = smul.addr %s29, 2
          %s1808 = smul.addr %s1807, 8
          %s1809 = scalar_lea.hbm %s9, %s1808
          %s1810 = sshll.u32 %s1801, 4
          %s1811 = int_to_ptr.vmem [resolvable:$true] %s1810
          %s1812 = sshll.u32 %s1809, 4
          %s1813 = int_to_ptr.hbm [resolvable:$true] %s1812
          %1818 = dma.vmem_to_hbm [thread:$0]  %s1811, 256, %s1813, %s1798, 128, 128, 8
        $region84: #{tpu_custom_call.1} parent=55 // pred_fallthru
          _
      $region56: #{tpu_custom_call.1} parent=5 // pred_fallthru
        _
      %p1819 = scmp.le.s32.totalorder 2, %s24
      // Predicated region
      $region85: #{tpu_custom_call.1} parent=5 // pred_check
        %p1820 = pneg %p1819
      $region86: #{tpu_custom_call.1} parent=5 // pred_check_branch
        %1822 = sbr.rel (%p1820) target = $region88
      $region87: #{tpu_custom_call.1} parent=5 // pred_region
        %s1823 = ssub.s32 %s24, 2
        // Predicated region
        $region89: #{tpu_custom_call.1} parent=87 // pred_check
          %p1824 = pneg %p247
        $region90: #{tpu_custom_call.1} parent=87 // pred_check_branch
          %1826 = sbr.rel (%p1824) target = $region92
        $region91: #{tpu_custom_call.1} parent=87 // pred_region
          %s1827 = sand.u32 %s232, 1
          %s1828 = scalar_lea.sflag [#allocation5], %s1827
          %s1829 = sand.u32 %s232, 1
          %s1830 = smul.addr %s1829, 16
          %s1831 = scalar_lea.vmem [#allocation14], %s1830
          %1833 = dma.done %s1828, 256
        $region92: #{tpu_custom_call.1} parent=87 // pred_fallthru
          _
      $region88: #{tpu_custom_call.1} parent=5 // pred_fallthru
        _
    $region6: #{tpu_custom_call.1} parent=1 // loop_footer
      %s28 = sadd.s32 1, %s24
    $region7: #{tpu_custom_call.1} parent=1 // loop_footer_branch
      %23 = sbr.rel target = $region3
    $region8: #{tpu_custom_call.1} parent=1 // loop_exit
      _
    %1834 = vsyncpa [#allocation4], 1
    %s1835 = scalar_lea.sflag [#allocation4], 1
    %1836 = vsyncpa %s1835, 1
    %1837 = vsyncpa [#allocation7], 1
    %1838 = vsyncpa [#allocation10], 1
    %1839 = vsyncpa [#allocation13], 1
    %1840 = vsyncpa [#allocation5], 1
    %s1841 = scalar_lea.sflag [#allocation5], 1
    %1842 = vsyncpa %s1841, 1

// kernel: tpu_custom_call.1
$region0: #{tpu_custom_call.1}
  #allocation0 [shape = 'u32[]', space=smem, size = 0x4, offset = 0x4, fixed_abs, tag = 'smem constant byte address 0x4 - core index']
  #allocation1 [shape = 'u32[72,128]{1,0:T(1,128)}', space=vmem, size = 0x9000, scoped, tag = 'internal scratch']
  #allocation2 [shape = 'bf16[32,128]{1,0:T(8,128)(2,1)}', space=vmem, size = 0x2000, scoped, tag = 'scratch operand']
  %s0 = inlined_call_operand.hbm [shape: bf16[2,16,128], index: 0, kind: input, shape index: {}]
  %s1 = inlined_call_operand.hbm [shape: bf16[128,128], index: 1, kind: input, shape index: {}]
  %s2 = inlined_call_operand.hbm [shape: f32[1,128], index: 2, kind: input, shape index: {}]
  %s3 = inlined_call_operand.hbm [shape: bf16[2,384,128], index: 3, kind: input, shape index: {}]
  %s4 = inlined_call_operand.vmem [shape: f32[2,1,128], index: 4, kind: input, shape index: {}]
  %s5 = inlined_call_operand.hbm [shape: bf16[2,384,128], index: 5, kind: input, shape index: {}]
  %s6 = inlined_call_operand.vmem [shape: f32[2,1,128], index: 6, kind: input, shape index: {}]
  %s7 = inlined_call_operand.vmem [shape: f32[2,1,128], index: 7, kind: input, shape index: {}]
  %s8 = inlined_call_operand.hbm [shape: f32[2,1,128], index: 8, kind: input, shape index: {}]
  %s9 = inlined_call_operand.hbm [shape: f32[2,16,128], index: 9, kind: output, shape index: {}]
  %s10 = sld [smem:[#allocation0]]
  $region93: #{tpu_custom_call.1} parent=0
    _
  %s12 = ssub.s32 1, %s10
  %s13 = scalar_select 0, %s12, %s10
  $region1: #{tpu_custom_call.1} parent=0
    #allocation3 [shape = 'u8[8192]{0}', space=vmem, size = 0x2000, scoped, tag = 'input window, operand 0']
    #allocation4 [shape = 's32[2]{0}', space=sflag, size = 0x8, scoped, tag = 'scoped memory for tpu_custom_call.1']
    #allocation5 [shape = 's32[2]{0}', space=sflag, size = 0x8, scoped, tag = 'scoped memory for tpu_custom_call.1']
    #allocation6 [shape = 'u8[32768]{0}', space=vmem, size = 0x8000, scoped, tag = 'input window, operand 1, single buffered']
    #allocation7 [shape = 's32[1]{0}', space=sflag, size = 0x4, scoped, tag = 'scoped memory for tpu_custom_call.1']
    #allocation8 [shape = 'u8[512]{0}', space=vmem, size = 0x400, scoped, tag = 'input window, operand 2, single buffered']
    #allocation9 [shape = 'u8[196608]{0}', space=vmem, size = 0x30000, scoped, tag = 'input window, operand 3, single buffered']
    #allocation10 [shape = 's32[1]{0}', space=sflag, size = 0x4, scoped, tag = 'scoped memory for tpu_custom_call.1']
    #allocation11 [shape = 'u8[196608]{0}', space=vmem, size = 0x30000, scoped, tag = 'input window, operand 5, single buffered']
    #allocation12 [shape = 'u8[1024]{0}', space=vmem, size = 0x400, scoped, tag = 'input window, operand 8, single buffered']
    #allocation13 [shape = 's32[1]{0}', space=sflag, size = 0x4, scoped, tag = 'scoped memory for tpu_custom_call.1']
    #allocation14 [shape = 'u8[16384]{0}', space=vmem, size = 0x4000, scoped, tag = 'output window, operand 0']
    %14 = vsyncpa [#allocation4], 0
    %s15 = scalar_lea.sflag [#allocation4], 1
    %16 = vsyncpa %s15, 0
    %17 = vsyncpa [#allocation7], 0
    %18 = vsyncpa [#allocation10], 0
    %19 = vsyncpa [#allocation13], 0
    %20 = vsyncpa [#allocation5], 0
    %s21 = scalar_lea.sflag [#allocation5], 1
    %22 = vsyncpa %s21, 0
    loop: start=0, step=1, limit=4
    $region2: #{tpu_custom_call.1} parent=1 // loop_pre_header
      _
    $region3: #{tpu_custom_call.1} parent=1 // loop_header
      %s24 = sphi 0, %s28
      %p25 = scmp.ge.s32.totalorder %s24, 4
      %s34 = sphi 0, %s36
      %s37 = sphi 0, %s34
      %s38 = sphi 0, %s37
      %s54 = sphi 0, %s38
      %s58 = sphi 0, %s58
      %s60 = sphi 0, %s58
      %s61 = sphi 0, %s60
      %s75 = sphi 0, %s61
      %s79 = sphi 0, %s79
      %s81 = sphi 0, %s79
      %s82 = sphi 0, %s81
      %s96 = sphi 0, %s82
      %s100 = sphi 0, %s100
      %s102 = sphi 0, %s100
      %s103 = sphi 0, %s102
      %s117 = sphi 0, %s103
      %s121 = sphi 0, %s121
      %s123 = sphi 0, %s121
      %s124 = sphi 0, %s123
      %s138 = sphi 0, %s124
      %s142 = sphi 0, %s142
      %s144 = sphi 0, %s142
      %s145 = sphi 0, %s144
      %s159 = sphi 0, %s145
      %s163 = sphi 0, %s163
      %s165 = sphi 0, %s163
      %s166 = sphi 0, %s165
      %s180 = sphi 0, %s166
      %s184 = sphi 0, %s184
      %s186 = sphi 0, %s184
      %s187 = sphi 0, %s186
      %s201 = sphi 0, %s187
      %s205 = sphi 0, %s205
      %s207 = sphi 0, %s205
      %s208 = sphi 0, %s207
      %s222 = sphi 0, %s208
      %s228 = sphi 0, %s230
      %s231 = sphi 0, %s228
      %s232 = sphi 0, %s231
      %s248 = sphi 0, %s232
    $region4: #{tpu_custom_call.1} parent=1 // loop_header_branch
      %27 = sbr.rel (%p25) target = $region8
    $region5: #{tpu_custom_call.1} parent=1 // loop_body
      %s29 = ssub.s32 %s24, 1
      %s30 = ssub.s32 %s24, 2
      %s31 = sadd.s32 %s24, 1
      %s32 = ssub.s32 %s24, %s31
      %p33 = scmp.eq.s32.totalorder %s32, 0
      %s35 = sadd.s32 %s34, 1
      %s36 = scalar_select %p33, %s34, %s35
      %p39 = pneg %p33
      %p40 = scmp.eq.s32.totalorder %s24, 1
      %p41 = por %p39, %p40
      %p42 = scmp.ne.s32.totalorder %s34, %s37
      %p43 = scmp.eq.s32.totalorder %s24, 0
      %p44 = por %p42, %p43
      %p45 = scmp.ne.s32.totalorder %s34, %s37
      %p46 = scmp.eq.s32.totalorder %s29, 1
      %p47 = por %p45, %p46
      %p48 = scmp.ne.s32.totalorder %s37, %s38
      %p49 = scmp.eq.s32.totalorder %s29, 0
      %p50 = por %p48, %p49
      %p51 = scmp.ne.s32.totalorder %s37, %s38
      %p52 = scmp.eq.s32.totalorder %s30, 1
      %p53 = por %p51, %p52
      %p55 = scmp.ne.s32.totalorder %s38, %s54
      %p56 = scmp.eq.s32.totalorder %s30, 0
      %p57 = por %p55, %p56
      %s59 = sadd.s32 %s58, 1
      %p62 = scmp.eq.s32.totalorder %s24, 1
      %p63 = scmp.ne.s32.totalorder %s58, %s60
      %p64 = scmp.eq.s32.totalorder %s24, 0
      %p65 = por %p63, %p64
      %p66 = scmp.ne.s32.totalorder %s58, %s60
      %p67 = scmp.eq.s32.totalorder %s29, 1
      %p68 = por %p66, %p67
      %p69 = scmp.ne.s32.totalorder %s60, %s61
      %p70 = scmp.eq.s32.totalorder %s29, 0
      %p71 = por %p69, %p70
      %p72 = scmp.ne.s32.totalorder %s60, %s61
      %p73 = scmp.eq.s32.totalorder %s30, 1
      %p74 = por %p72, %p73
      %p76 = scmp.ne.s32.totalorder %s61, %s75
      %p77 = scmp.eq.s32.totalorder %s30, 0
      %p78 = por %p76, %p77
      %s80 = sadd.s32 %s79, 1
      %p83 = scmp.eq.s32.totalorder %s24, 1
      %p84 = scmp.ne.s32.totalorder %s79, %s81
      %p85 = scmp.eq.s32.totalorder %s24, 0
      %p86 = por %p84, %p85
      %p87 = scmp.ne.s32.totalorder %s79, %s81
      %p88 = scmp.eq.s32.totalorder %s29, 1
      %p89 = por %p87, %p88
      %p90 = scmp.ne.s32.totalorder %s81, %s82
      %p91 = scmp.eq.s32.totalorder %s29, 0
      %p92 = por %p90, %p91
      %p93 = scmp.ne.s32.totalorder %s81, %s82
      %p94 = scmp.eq.s32.totalorder %s30, 1
      %p95 = por %p93, %p94
      %p97 = scmp.ne.s32.totalorder %s82, %s96
      %p98 = scmp.eq.s32.totalorder %s30, 0
      %p99 = por %p97, %p98
      %s101 = sadd.s32 %s100, 1
      %p104 = scmp.eq.s32.totalorder %s24, 1
      %p105 = scmp.ne.s32.totalorder %s100, %s102
      %p106 = scmp.eq.s32.totalorder %s24, 0
      %p107 = por %p105, %p106
      %p108 = scmp.ne.s32.totalorder %s100, %s102
      %p109 = scmp.eq.s32.totalorder %s29, 1
      %p110 = por %p108, %p109
      %p111 = scmp.ne.s32.totalorder %s102, %s103
      %p112 = scmp.eq.s32.totalorder %s29, 0
      %p113 = por %p111, %p112
      %p114 = scmp.ne.s32.totalorder %s102, %s103
      %p115 = scmp.eq.s32.totalorder %s30, 1
      %p116 = por %p114, %p115
      %p118 = scmp.ne.s32.totalorder %s103, %s117
      %p119 = scmp.eq.s32.totalorder %s30, 0
      %p120 = por %p118, %p119
      %s122 = sadd.s32 %s121, 1
      %p125 = scmp.eq.s32.totalorder %s24, 1
      %p126 = scmp.ne.s32.totalorder %s121, %s123
      %p127 = scmp.eq.s32.totalorder %s24, 0
      %p128 = por %p126, %p127
      %p129 = scmp.ne.s32.totalorder %s121, %s123
      %p130 = scmp.eq.s32.totalorder %s29, 1
      %p131 = por %p129, %p130
      %p132 = scmp.ne.s32.totalorder %s123, %s124
      %p133 = scmp.eq.s32.totalorder %s29, 0
      %p134 = por %p132, %p133
      %p135 = scmp.ne.s32.totalorder %s123, %s124
      %p136 = scmp.eq.s32.totalorder %s30, 1
      %p137 = por %p135, %p136
      %p139 = scmp.ne.s32.totalorder %s124, %s138
      %p140 = scmp.eq.s32.totalorder %s30, 0
      %p141 = por %p139, %p140
      %s143 = sadd.s32 %s142, 1
      %p146 = scmp.eq.s32.totalorder %s24, 1
      %p147 = scmp.ne.s32.totalorder %s142, %s144
      %p148 = scmp.eq.s32.totalorder %s24, 0
      %p149 = por %p147, %p148
      %p150 = scmp.ne.s32.totalorder %s142, %s144
      %p151 = scmp.eq.s32.totalorder %s29, 1
      %p152 = por %p150, %p151
      %p153 = scmp.ne.s32.totalorder %s144, %s145
      %p154 = scmp.eq.s32.totalorder %s29, 0
      %p155 = por %p153, %p154
      %p156 = scmp.ne.s32.totalorder %s144, %s145
      %p157 = scmp.eq.s32.totalorder %s30, 1
      %p158 = por %p156, %p157
      %p160 = scmp.ne.s32.totalorder %s145, %s159
      %p161 = scmp.eq.s32.totalorder %s30, 0
      %p162 = por %p160, %p161
      %s164 = sadd.s32 %s163, 1
      %p167 = scmp.eq.s32.totalorder %s24, 1
      %p168 = scmp.ne.s32.totalorder %s163, %s165
      %p169 = scmp.eq.s32.totalorder %s24, 0
      %p170 = por %p168, %p169
      %p171 = scmp.ne.s32.totalorder %s163, %s165
      %p172 = scmp.eq.s32.totalorder %s29, 1
      %p173 = por %p171, %p172
      %p174 = scmp.ne.s32.totalorder %s165, %s166
      %p175 = scmp.eq.s32.totalorder %s29, 0
      %p176 = por %p174, %p175
      %p177 = scmp.ne.s32.totalorder %s165, %s166
      %p178 = scmp.eq.s32.totalorder %s30, 1
      %p179 = por %p177, %p178
      %p181 = scmp.ne.s32.totalorder %s166, %s180
      %p182 = scmp.eq.s32.totalorder %s30, 0
      %p183 = por %p181, %p182
      %s185 = sadd.s32 %s184, 1
      %p188 = scmp.eq.s32.totalorder %s24, 1
      %p189 = scmp.ne.s32.totalorder %s184, %s186
      %p190 = scmp.eq.s32.totalorder %s24, 0
      %p191 = por %p189, %p190
      %p192 = scmp.ne.s32.totalorder %s184, %s186
      %p193 = scmp.eq.s32.totalorder %s29, 1
      %p194 = por %p192, %p193
      %p195 = scmp.ne.s32.totalorder %s186, %s187
      %p196 = scmp.eq.s32.totalorder %s29, 0
      %p197 = por %p195, %p196
      %p198 = scmp.ne.s32.totalorder %s186, %s187
      %p199 = scmp.eq.s32.totalorder %s30, 1
      %p200 = por %p198, %p199
      %p202 = scmp.ne.s32.totalorder %s187, %s201
      %p203 = scmp.eq.s32.totalorder %s30, 0
      %p204 = por %p202, %p203
      %s206 = sadd.s32 %s205, 1
      %p209 = scmp.eq.s32.totalorder %s24, 1
      %p210 = scmp.ne.s32.totalorder %s205, %s207
      %p211 = scmp.eq.s32.totalorder %s24, 0
      %p212 = por %p210, %p211
      %p213 = scmp.ne.s32.totalorder %s205, %s207
      %p214 = scmp.eq.s32.totalorder %s29, 1
      %p215 = por %p213, %p214
      %p216 = scmp.ne.s32.totalorder %s207, %s208
      %p217 = scmp.eq.s32.totalorder %s29, 0
      %p218 = por %p216, %p217
      %p219 = scmp.ne.s32.totalorder %s207, %s208
      %p220 = scmp.eq.s32.totalorder %s30, 1
      %p221 = por %p219, %p220
      %p223 = scmp.ne.s32.totalorder %s208, %s222
      %p224 = scmp.eq.s32.totalorder %s30, 0
      %p225 = por %p223, %p224
      %s226 = ssub.s32 %s24, %s31
      %p227 = scmp.eq.s32.totalorder %s226, 0
      %s229 = sadd.s32 %s228, 1
      %s230 = scalar_select %p227, %s228, %s229
      %p233 = pneg %p227
      %p234 = scmp.eq.s32.totalorder %s24, 1
      %p235 = por %p233, %p234
      %p236 = scmp.ne.s32.totalorder %s228, %s231
      %p237 = scmp.eq.s32.totalorder %s24, 0
      %p238 = por %p236, %p237
      %p239 = scmp.ne.s32.totalorder %s228, %s231
      %p240 = scmp.eq.s32.totalorder %s29, 1
      %p241 = por %p239, %p240
      %p242 = scmp.ne.s32.totalorder %s231, %s232
      %p243 = scmp.eq.s32.totalorder %s29, 0
      %p244 = por %p242, %p243
      %p245 = scmp.ne.s32.totalorder %s231, %s232
      %p246 = scmp.eq.s32.totalorder %s30, 1
      %p247 = por %p245, %p246
      %p249 = scmp.ne.s32.totalorder %s232, %s248
      %p250 = scmp.eq.s32.totalorder %s30, 0
      %p251 = por %p249, %p250
      %p252 = scmp.le.s32.totalorder 1, %s24
      %p253 = scmp.lt.s32.totalorder %s24, 3
      %p254 = pnand %p252, %p253
      %p255 = pneg %p254
      // Predicated region
      $region9: #{tpu_custom_call.1} parent=5 // pred_check
        _
      $region10: #{tpu_custom_call.1} parent=5 // pred_check_branch
        %257 = sbr.rel (%p254) target = $region12
      $region11: #{tpu_custom_call.1} parent=5 // pred_region
        %s258 = ssub.s32 %s24, 1
        // Predicated region
        $region13: #{tpu_custom_call.1} parent=11 // pred_check
          %p259 = pneg %p71
        $region14: #{tpu_custom_call.1} parent=11 // pred_check_branch
          %261 = sbr.rel (%p259) target = $region16
        $region15: #{tpu_custom_call.1} parent=11 // pred_region
          %263 = vsyncadd [#allocation7], 0
          %s264 = sshll.u32 %s1, 4
          %s265 = int_to_ptr.hbm [resolvable:$true] %s264
          %s266 = sshll.u32 [#allocation6], 4
          %s267 = int_to_ptr.vmem [resolvable:$true] %s266
          %272 = dma.hbm_to_vmem [thread:$0]  %s265, 1024, %s267, [#allocation7], 64, 64, 4
        $region16: #{tpu_custom_call.1} parent=11 // pred_fallthru
          _
        // Predicated region
        $region17: #{tpu_custom_call.1} parent=11 // pred_check
          %p273 = pneg %p92
        $region18: #{tpu_custom_call.1} parent=11 // pred_check_branch
          %275 = sbr.rel (%p273) target = $region20
        $region19: #{tpu_custom_call.1} parent=11 // pred_region
          %277 = vsyncadd [#allocation7], 0
          %s279 = sshll.u32 %s2, 4
          %s280 = int_to_ptr.hbm [resolvable:$true] %s279
          %s281 = sshll.u32 [#allocation8], 4
          %s282 = int_to_ptr.vmem [resolvable:$true] %s281
          %284 = dma.hbm_to_vmem [thread:$0]  %s280, 16, %s282, [#allocation7]
        $region20: #{tpu_custom_call.1} parent=11 // pred_fallthru
          _
        // Predicated region
        $region21: #{tpu_custom_call.1} parent=11 // pred_check
          %p285 = pneg %p113
        $region22: #{tpu_custom_call.1} parent=11 // pred_check_branch
          %287 = sbr.rel (%p285) target = $region24
        $region23: #{tpu_custom_call.1} parent=11 // pred_region
          %289 = vsyncadd [#allocation10], 0
          %s290 = sshll.u32 %s3, 4
          %s291 = int_to_ptr.hbm [resolvable:$true] %s290
          %s292 = sshll.u32 [#allocation9], 4
          %s293 = int_to_ptr.vmem [resolvable:$true] %s292
          %298 = dma.hbm_to_vmem [thread:$0]  %s291, 6144, %s293, [#allocation10], 64, 64, 4
        $region24: #{tpu_custom_call.1} parent=11 // pred_fallthru
          _
        // Predicated region
        $region25: #{tpu_custom_call.1} parent=11 // pred_check
          %p299 = pneg %p134
        $region26: #{tpu_custom_call.1} parent=11 // pred_check_branch
          %301 = sbr.rel (%p299) target = $region28
        $region27: #{tpu_custom_call.1} parent=11 // pred_region
          _
        $region28: #{tpu_custom_call.1} parent=11 // pred_fallthru
          _
        // Predicated region
        $region29: #{tpu_custom_call.1} parent=11 // pred_check
          %p302 = pneg %p155
        $region30: #{tpu_custom_call.1} parent=11 // pred_check_branch
          %304 = sbr.rel (%p302) target = $region32
        $region31: #{tpu_custom_call.1} parent=11 // pred_region
          %306 = vsyncadd [#allocation10], 0
          %s307 = sshll.u32 %s5, 4
          %s308 = int_to_ptr.hbm [resolvable:$true] %s307
          %s309 = sshll.u32 [#allocation11], 4
          %s310 = int_to_ptr.vmem [resolvable:$true] %s309
          %315 = dma.hbm_to_vmem [thread:$0]  %s308, 6144, %s310, [#allocation10], 64, 64, 4
        $region32: #{tpu_custom_call.1} parent=11 // pred_fallthru
          _
        // Predicated region
        $region33: #{tpu_custom_call.1} parent=11 // pred_check
          %p316 = pneg %p176
        $region34: #{tpu_custom_call.1} parent=11 // pred_check_branch
          %318 = sbr.rel (%p316) target = $region36
        $region35: #{tpu_custom_call.1} parent=11 // pred_region
          _
        $region36: #{tpu_custom_call.1} parent=11 // pred_fallthru
          _
        // Predicated region
        $region37: #{tpu_custom_call.1} parent=11 // pred_check
          %p319 = pneg %p197
        $region38: #{tpu_custom_call.1} parent=11 // pred_check_branch
          %321 = sbr.rel (%p319) target = $region40
        $region39: #{tpu_custom_call.1} parent=11 // pred_region
          _
        $region40: #{tpu_custom_call.1} parent=11 // pred_fallthru
          _
        // Predicated region
        $region41: #{tpu_custom_call.1} parent=11 // pred_check
          %p322 = pneg %p218
        $region42: #{tpu_custom_call.1} parent=11 // pred_check_branch
          %324 = sbr.rel (%p322) target = $region44
        $region43: #{tpu_custom_call.1} parent=11 // pred_region
          %326 = vsyncadd [#allocation13], 0
          %s327 = sshll.u32 %s8, 4
          %s328 = int_to_ptr.hbm [resolvable:$true] %s327
          %s329 = sshll.u32 [#allocation12], 4
          %s330 = int_to_ptr.vmem [resolvable:$true] %s329
          %335 = dma.hbm_to_vmem [thread:$0]  %s328, 32, %s330, [#allocation13], 16, 16, 1
        $region44: #{tpu_custom_call.1} parent=11 // pred_fallthru
          _
      $region12: #{tpu_custom_call.1} parent=5 // pred_fallthru
        _
      %p336 = scmp.lt.s32.totalorder %s24, 2
      // Predicated region
      $region45: #{tpu_custom_call.1} parent=5 // pred_check
        %p337 = pneg %p336
      $region46: #{tpu_custom_call.1} parent=5 // pred_check_branch
        %339 = sbr.rel (%p337) target = $region48
      $region47: #{tpu_custom_call.1} parent=5 // pred_region
        // Predicated region
        $region49: #{tpu_custom_call.1} parent=47 // pred_check
          %p340 = pneg %p44
        $region50: #{tpu_custom_call.1} parent=47 // pred_check_branch
          %342 = sbr.rel (%p340) target = $region52
        $region51: #{tpu_custom_call.1} parent=47 // pred_region
          %s343 = sand.u32 %s34, 1
          %s344 = scalar_lea.sflag [#allocation4], %s343
          %s345 = sand.u32 %s34, 1
          %s346 = smul.addr %s345, 8
          %s347 = scalar_lea.vmem [#allocation3], %s346
          %349 = vsyncadd %s344, 0
          %s350 = smul.addr %s24, 2
          %s351 = smul.addr %s350, 4
          %s352 = scalar_lea.hbm %s0, %s351
          %s353 = sshll.u32 %s352, 4
          %s354 = int_to_ptr.hbm [resolvable:$true] %s353
          %s355 = sshll.u32 %s347, 4
          %s356 = int_to_ptr.vmem [resolvable:$true] %s355
          %361 = dma.hbm_to_vmem [thread:$0]  %s354, 128, %s356, %s344, 64, 64, 4
        $region52: #{tpu_custom_call.1} parent=47 // pred_fallthru
          _
      $region48: #{tpu_custom_call.1} parent=5 // pred_fallthru
        _
      %p362 = scmp.le.s32.totalorder 1, %s24
      %p363 = scmp.lt.s32.totalorder %s24, 3
      %p364 = pnand %p362, %p363
      %p365 = pneg %p364
      // Predicated region
      $region53: #{tpu_custom_call.1} parent=5 // pred_check
        _
      $region54: #{tpu_custom_call.1} parent=5 // pred_check_branch
        %367 = sbr.rel (%p364) target = $region56
      $region55: #{tpu_custom_call.1} parent=5 // pred_region
        %s368 = ssub.s32 %s24, 1
        %s369 = sand.u32 %s37, 1
        %s370 = scalar_lea.sflag [#allocation4], %s369
        %s371 = sand.u32 %s37, 1
        %s372 = smul.addr %s371, 8
        %s373 = scalar_lea.vmem [#allocation3], %s372
        // Predicated region
        $region57: #{tpu_custom_call.1} parent=55 // pred_check
          %p374 = pneg %p50
        $region58: #{tpu_custom_call.1} parent=55 // pred_check_branch
          %376 = sbr.rel (%p374) target = $region60
        $region59: #{tpu_custom_call.1} parent=55 // pred_region
          %378 = dma.done %s370, 128
        $region60: #{tpu_custom_call.1} parent=55 // pred_fallthru
          _
        // Predicated region
        $region61: #{tpu_custom_call.1} parent=55 // pred_check
          %p379 = pneg %p71
        $region62: #{tpu_custom_call.1} parent=55 // pred_check_branch
          %381 = sbr.rel (%p379) target = $region64
        $region63: #{tpu_custom_call.1} parent=55 // pred_region
          %383 = dma.done [#allocation7], 1024
        $region64: #{tpu_custom_call.1} parent=55 // pred_fallthru
          _
        // Predicated region
        $region65: #{tpu_custom_call.1} parent=55 // pred_check
          %p384 = pneg %p92
        $region66: #{tpu_custom_call.1} parent=55 // pred_check_branch
          %386 = sbr.rel (%p384) target = $region68
        $region67: #{tpu_custom_call.1} parent=55 // pred_region
          %388 = dma.done [#allocation7], 16
        $region68: #{tpu_custom_call.1} parent=55 // pred_fallthru
          _
        // Predicated region
        $region69: #{tpu_custom_call.1} parent=55 // pred_check
          %p389 = pneg %p113
        $region70: #{tpu_custom_call.1} parent=55 // pred_check_branch
          %391 = sbr.rel (%p389) target = $region72
        $region71: #{tpu_custom_call.1} parent=55 // pred_region
          %393 = dma.done [#allocation10], 6144
        $region72: #{tpu_custom_call.1} parent=55 // pred_fallthru
          _
        // Predicated region
        $region73: #{tpu_custom_call.1} parent=55 // pred_check
          %p394 = pneg %p155
        $region74: #{tpu_custom_call.1} parent=55 // pred_check_branch
          %396 = sbr.rel (%p394) target = $region76
        $region75: #{tpu_custom_call.1} parent=55 // pred_region
          %398 = dma.done [#allocation10], 6144
        $region76: #{tpu_custom_call.1} parent=55 // pred_fallthru
          _
        // Predicated region
        $region77: #{tpu_custom_call.1} parent=55 // pred_check
          %p399 = pneg %p218
        $region78: #{tpu_custom_call.1} parent=55 // pred_check_branch
          %401 = sbr.rel (%p399) target = $region80
        $region79: #{tpu_custom_call.1} parent=55 // pred_region
          %403 = dma.done [#allocation13], 32
        $region80: #{tpu_custom_call.1} parent=55 // pred_fallthru
          _
        %s404 = sand.u32 %s37, 1
        %s405 = scalar_lea.sflag [#allocation4], %s404
        %s406 = sand.u32 %s37, 1
        %s407 = smul.addr %s406, 8
        %s408 = scalar_lea.vmem [#allocation3], %s407
        %p409 = pneg %p50
        %p410 = pneg %p47
        %p411 = pneg %p71
        %p412 = pneg %p68
        %p413 = pneg %p92
        %p414 = pneg %p89
        %p415 = pneg %p113
        %p416 = pneg %p110
        %p417 = pneg %p134
        %p418 = pneg %p131
        %p419 = pneg %p155
        %p420 = pneg %p152
        %p421 = pneg %p176
        %p422 = pneg %p173
        %p423 = pneg %p197
        %p424 = pneg %p194
        %p425 = pneg %p218
        %p426 = pneg %p215
        %p427 = pneg %p244
        %p428 = pneg %p241
        %s429 = sand.u32 %s231, 1
        %s430 = scalar_lea.sflag [#allocation5], %s429
        %s431 = sand.u32 %s231, 1
        %s432 = smul.addr %s431, 16
        %s433 = scalar_lea.vmem [#allocation14], %s432
        %v435 = vld [vmem:[%s373] sm:$0xf]
        %v436 = vld [vmem:[%s373 + $0x4] sm:$0xf]
        %v437 = vld [vmem:[#allocation6] sm:$0xf]
        %v438 = vld [vmem:[#allocation6 + $0x4] sm:$0xf]
        %v439 = vld [vmem:[#allocation6 + $0x8] sm:$0xf]
        %v440 = vld [vmem:[#allocation6 + $0xc] sm:$0xf]
        %v441 = vld [vmem:[#allocation6 + $0x10] sm:$0xf]
        %v442 = vld [vmem:[#allocation6 + $0x14] sm:$0xf]
        %v443 = vld [vmem:[#allocation6 + $0x18] sm:$0xf]
        %v444 = vld [vmem:[#allocation6 + $0x1c] sm:$0xf]
        %v445 = vld [vmem:[#allocation6 + $0x20] sm:$0xf]
        %v446 = vld [vmem:[#allocation6 + $0x24] sm:$0xf]
        %v447 = vld [vmem:[#allocation6 + $0x28] sm:$0xf]
        %v448 = vld [vmem:[#allocation6 + $0x2c] sm:$0xf]
        %v449 = vld [vmem:[#allocation6 + $0x30] sm:$0xf]
        %v450 = vld [vmem:[#allocation6 + $0x34] sm:$0xf]
        %v451 = vld [vmem:[#allocation6 + $0x38] sm:$0xf]
        %v452 = vld [vmem:[#allocation6 + $0x3c] sm:$0xf]
        %v453 = vld [vmem:[#allocation8] sm:$0x1]
        %v455 = vperm.slane %v453, 0
        %v459 = vunpack.c.l.b16 %v435
        %v460 = vunpack.c.l.b16 %v436
        %v461 = vpack.c.b16 %v460, %v459
        %v479 = vunpack.c.l.b16 %v437
        %v480 = vunpack.c.l.b16 %v438
        %v481 = vunpack.c.l.b16 %v439
        %v482 = vunpack.c.l.b16 %v440
        %v483 = vunpack.c.l.b16 %v441
        %v484 = vunpack.c.l.b16 %v442
        %v485 = vunpack.c.l.b16 %v443
        %v486 = vunpack.c.l.b16 %v444
        %v487 = vunpack.c.l.b16 %v445
        %v488 = vunpack.c.l.b16 %v446
        %v489 = vunpack.c.l.b16 %v447
        %v490 = vunpack.c.l.b16 %v448
        %v491 = vunpack.c.l.b16 %v449
        %v492 = vunpack.c.l.b16 %v450
        %v493 = vunpack.c.l.b16 %v451
        %v494 = vunpack.c.l.b16 %v452
        %v495 = vpack.c.b16 %v480, %v479
        %v496 = vpack.c.b16 %v482, %v481
        %v497 = vpack.c.b16 %v484, %v483
        %v498 = vpack.c.b16 %v486, %v485
        %v499 = vpack.c.b16 %v488, %v487
        %v500 = vpack.c.b16 %v490, %v489
        %v501 = vpack.c.b16 %v492, %v491
        %v502 = vpack.c.b16 %v494, %v493
        %511 = vmatpush.bf16.msra.mxu0 %v502
        %512 = vmatpush.bf16.msra.mxu0 %v501
        %513 = vmatpush.bf16.msra.mxu0 %v500
        %514 = vmatpush.bf16.msra.mxu0 %v499
        %515 = vmatpush.bf16.msra.mxu0 %v498
        %516 = vmatpush.bf16.msra.mxu0 %v497
        %517 = vmatpush.bf16.msra.mxu0 %v496
        %518 = vmatpush.bf16.msra.mxu0 %v495
        %519 = vmatmul.bf16.gmra.mxu0 %v461
        %v520 = vpop.f32.mrf.mxu0
        %v521 = vadd.f32 %v455, %v520
        %v522 = vpop.f32.mrf.mxu0
        %v523 = vadd.f32 %v455, %v522
        %524 = vdwg.mxu0
        %525 = vst [vmem:[#allocation2] sm:$0xf] 0
        %526 = vst [vmem:[#allocation2 + $0x4] sm:$0xf] 0
        %v527 = vld [vmem:[#allocation9] sm:$0xf]
        %v528 = vld [vmem:[#allocation9 + $0x4] sm:$0xf]
        %v529 = vld [vmem:[#allocation9 + $0x8] sm:$0xf]
        %v530 = vld [vmem:[#allocation9 + $0xc] sm:$0xf]
        %v531 = vld [vmem:[#allocation9 + $0x10] sm:$0xf]
        %v532 = vld [vmem:[#allocation9 + $0x14] sm:$0xf]
        %v533 = vld [vmem:[#allocation9 + $0x18] sm:$0xf]
        %v534 = vld [vmem:[#allocation9 + $0x1c] sm:$0xf]
        %v535 = vld [vmem:[#allocation9 + $0x20] sm:$0xf]
        %v536 = vld [vmem:[#allocation9 + $0x24] sm:$0xf]
        %v537 = vld [vmem:[#allocation9 + $0x28] sm:$0xf]
        %v538 = vld [vmem:[#allocation9 + $0x2c] sm:$0xf]
        %v539 = vld [vmem:[#allocation9 + $0x30] sm:$0xf]
        %v540 = vld [vmem:[#allocation9 + $0x34] sm:$0xf]
        %v541 = vld [vmem:[#allocation9 + $0x38] sm:$0xf]
        %v542 = vld [vmem:[#allocation9 + $0x3c] sm:$0xf]
        %v543 = vld [vmem:[#allocation9 + $0x40] sm:$0xf]
        %v544 = vld [vmem:[#allocation9 + $0x44] sm:$0xf]
        %v545 = vld [vmem:[#allocation9 + $0x48] sm:$0xf]
        %v546 = vld [vmem:[#allocation9 + $0x4c] sm:$0xf]
        %v547 = vld [vmem:[#allocation9 + $0x50] sm:$0xf]
        %v548 = vld [vmem:[#allocation9 + $0x54] sm:$0xf]
        %v549 = vld [vmem:[#allocation9 + $0x58] sm:$0xf]
        %v550 = vld [vmem:[#allocation9 + $0x5c] sm:$0xf]
        %v551 = vld [vmem:[#allocation9 + $0x60] sm:$0xf]
        %v552 = vld [vmem:[#allocation9 + $0x64] sm:$0xf]
        %v553 = vld [vmem:[#allocation9 + $0x68] sm:$0xf]
        %v554 = vld [vmem:[#allocation9 + $0x6c] sm:$0xf]
        %v555 = vld [vmem:[#allocation9 + $0x70] sm:$0xf]
        %v556 = vld [vmem:[#allocation9 + $0x74] sm:$0xf]
        %v557 = vld [vmem:[#allocation9 + $0x78] sm:$0xf]
        %v558 = vld [vmem:[#allocation9 + $0x7c] sm:$0xf]
        %v559 = vld [vmem:[#allocation9 + $0x80] sm:$0xf]
        %v560 = vld [vmem:[#allocation9 + $0x84] sm:$0xf]
        %v561 = vld [vmem:[#allocation9 + $0x88] sm:$0xf]
        %v562 = vld [vmem:[#allocation9 + $0x8c] sm:$0xf]
        %v563 = vld [vmem:[#allocation9 + $0x90] sm:$0xf]
        %v564 = vld [vmem:[#allocation9 + $0x94] sm:$0xf]
        %v565 = vld [vmem:[#allocation9 + $0x98] sm:$0xf]
        %v566 = vld [vmem:[#allocation9 + $0x9c] sm:$0xf]
        %v567 = vld [vmem:[#allocation9 + $0xa0] sm:$0xf]
        %v568 = vld [vmem:[#allocation9 + $0xa4] sm:$0xf]
        %v569 = vld [vmem:[#allocation9 + $0xa8] sm:$0xf]
        %v570 = vld [vmem:[#allocation9 + $0xac] sm:$0xf]
        %v571 = vld [vmem:[#allocation9 + $0xb0] sm:$0xf]
        %v572 = vld [vmem:[#allocation9 + $0xb4] sm:$0xf]
        %v573 = vld [vmem:[#allocation9 + $0xb8] sm:$0xf]
        %v574 = vld [vmem:[#allocation9 + $0xbc] sm:$0xf]
        %v575 = vld [vmem:[%s4] sm:$0x1]
        %v576 = vpack.c.bf16 %v521, %v521
        %v577 = vpack.c.bf16 %v523, %v523
        %578 = vst [vmem:[#allocation2 + $0x8] sm:$0xf] %v576
        %579 = vst [vmem:[#allocation2 + $0xc] sm:$0xf] %v577
        %v580 = vld [vmem:[#allocation2 + $0x4] sm:$0x8]
        %v581 = vld [vmem:[#allocation2 + $0x8] sm:$0xf]
        %v582 = vld [vmem:[#allocation2 + $0xc] sm:$0x7]
        %v583 = vld [vmem:[#allocation2 + $0xc] sm:$0xf]
        %v587 = vunpack.c.l.b16 %v580
        %v588 = vunpack.c.l.b16 %v581
        %v589 = vunpack.c.l.b16 %v582
        %v590 = vpack.c.b16 %v588, %v587
        %v591 = vpack.c.b16 %v589, %v589
        %v593 = vunpack.c.l.b16 %v583
        %v594 = vpack.c.b16 %v593, %v593
        %vm595 = vsmask.f32 7424
        %v597 = vshrl.u32 %v590, 16
        %v599 = vshll.u32 %v590, 16
        %v601 = vrot.slane %v599, 1
        %v602 = vor.u32 %v597, %v601
        %v604 = vshll.u32 %v594, 16
        %v606 = vrot.slane %v604, 1
        %v607 = vsel %vm595, %v602, %v606
        %v608 = vshrl.u32 %v594, 16
        %v610 = vor.u32 %v608, %v606
        %v611 = vpack.c.b16 %v593, %v588
        %v612 = vrot.slane %v611, 5
        %v614 = vperm.slane %v575, 0
        %vm616 = vcmask 1044480
        %v617 = vrot.slane %v590, 3
        %v618 = vrot.slane %v591, 3
        %v619 = vsel %vm616, %v617, %v618
        %v620 = vrot.slane %v607, 3
        %v621 = vrot.slane %v610, 3
        %v622 = vsel %vm616, %v620, %v621
        %v623 = vrot.slane %v612, 3
        %v624 = vsel %vm616, %v623, %v623
        %v676 = vunpack.c.l.b16 %v527
        %v677 = vunpack.c.l.b16 %v528
        %v678 = vunpack.c.l.b16 %v529
        %v679 = vunpack.c.l.b16 %v530
        %v680 = vunpack.c.l.b16 %v531
        %v681 = vunpack.c.l.b16 %v532
        %v682 = vunpack.c.l.b16 %v533
        %v683 = vunpack.c.l.b16 %v534
        %v684 = vunpack.c.l.b16 %v535
        %v685 = vunpack.c.l.b16 %v536
        %v686 = vunpack.c.l.b16 %v537
        %v687 = vunpack.c.l.b16 %v538
        %v688 = vunpack.c.l.b16 %v539
        %v689 = vunpack.c.l.b16 %v540
        %v690 = vunpack.c.l.b16 %v541
        %v691 = vunpack.c.l.b16 %v542
        %v692 = vunpack.c.l.b16 %v543
        %v693 = vunpack.c.l.b16 %v544
        %v694 = vunpack.c.l.b16 %v545
        %v695 = vunpack.c.l.b16 %v546
        %v696 = vunpack.c.l.b16 %v547
        %v697 = vunpack.c.l.b16 %v548
        %v698 = vunpack.c.l.b16 %v549
        %v699 = vunpack.c.l.b16 %v550
        %v700 = vunpack.c.l.b16 %v551
        %v701 = vunpack.c.l.b16 %v552
        %v702 = vunpack.c.l.b16 %v553
        %v703 = vunpack.c.l.b16 %v554
        %v704 = vunpack.c.l.b16 %v555
        %v705 = vunpack.c.l.b16 %v556
        %v706 = vunpack.c.l.b16 %v557
        %v707 = vunpack.c.l.b16 %v558
        %v708 = vunpack.c.l.b16 %v559
        %v709 = vunpack.c.l.b16 %v560
        %v710 = vunpack.c.l.b16 %v561
        %v711 = vunpack.c.l.b16 %v562
        %v712 = vunpack.c.l.b16 %v563
        %v713 = vunpack.c.l.b16 %v564
        %v714 = vunpack.c.l.b16 %v565
        %v715 = vunpack.c.l.b16 %v566
        %v716 = vunpack.c.l.b16 %v567
        %v717 = vunpack.c.l.b16 %v568
        %v718 = vunpack.c.l.b16 %v569
        %v719 = vunpack.c.l.b16 %v570
        %v720 = vunpack.c.l.b16 %v571
        %v721 = vunpack.c.l.b16 %v572
        %v722 = vunpack.c.l.b16 %v573
        %v723 = vunpack.c.l.b16 %v574
        %v724 = vpack.c.b16 %v677, %v676
        %v725 = vpack.c.b16 %v679, %v678
        %v726 = vpack.c.b16 %v681, %v680
        %v727 = vpack.c.b16 %v683, %v682
        %v728 = vpack.c.b16 %v685, %v684
        %v729 = vpack.c.b16 %v687, %v686
        %v730 = vpack.c.b16 %v689, %v688
        %v731 = vpack.c.b16 %v691, %v690
        %v732 = vpack.c.b16 %v693, %v692
        %v733 = vpack.c.b16 %v695, %v694
        %v734 = vpack.c.b16 %v697, %v696
        %v735 = vpack.c.b16 %v699, %v698
        %v736 = vpack.c.b16 %v701, %v700
        %v737 = vpack.c.b16 %v703, %v702
        %v738 = vpack.c.b16 %v705, %v704
        %v739 = vpack.c.b16 %v707, %v706
        %v740 = vpack.c.b16 %v709, %v708
        %v741 = vpack.c.b16 %v711, %v710
        %v742 = vpack.c.b16 %v713, %v712
        %v743 = vpack.c.b16 %v715, %v714
        %v744 = vpack.c.b16 %v717, %v716
        %v745 = vpack.c.b16 %v719, %v718
        %v746 = vpack.c.b16 %v721, %v720
        %v747 = vpack.c.b16 %v723, %v722
        %772 = vmatpush.bf16.msra.mxu0 %v731
        %773 = vmatpush.bf16.msra.mxu0 %v730
        %774 = vmatpush.bf16.msra.mxu0 %v729
        %775 = vmatpush.bf16.msra.mxu0 %v728
        %776 = vmatpush.bf16.msra.mxu0 %v727
        %777 = vmatpush.bf16.msra.mxu0 %v726
        %778 = vmatpush.bf16.msra.mxu0 %v725
        %779 = vmatpush.bf16.msra.mxu0 %v724
        %780 = vmatmul.bf16.gmra.mxu0 %v619
        %v781 = vpop.f32.mrf.mxu0
        %v782 = vadd.f32 %v614, %v781
        %v783 = vpop.f32.mrf.mxu0
        %v784 = vadd.f32 %v614, %v783
        %785 = vdwg.mxu0
        %786 = vmatpush.bf16.msra.mxu0 %v739
        %787 = vmatpush.bf16.msra.mxu0 %v738
        %788 = vmatpush.bf16.msra.mxu0 %v737
        %789 = vmatpush.bf16.msra.mxu0 %v736
        %790 = vmatpush.bf16.msra.mxu0 %v735
        %791 = vmatpush.bf16.msra.mxu0 %v734
        %792 = vmatpush.bf16.msra.mxu0 %v733
        %793 = vmatpush.bf16.msra.mxu0 %v732
        %794 = vmatmul.bf16.gmra.mxu0 %v622
        %v795 = vpop.f32.mrf.mxu0
        %v796 = vadd.f32 %v782, %v795
        %v797 = vpop.f32.mrf.mxu0
        %v798 = vadd.f32 %v784, %v797
        %799 = vdwg.mxu0
        %800 = vmatpush.bf16.msra.mxu0 %v747
        %801 = vmatpush.bf16.msra.mxu0 %v746
        %802 = vmatpush.bf16.msra.mxu0 %v745
        %803 = vmatpush.bf16.msra.mxu0 %v744
        %804 = vmatpush.bf16.msra.mxu0 %v743
        %805 = vmatpush.bf16.msra.mxu0 %v742
        %806 = vmatpush.bf16.msra.mxu0 %v741
        %807 = vmatpush.bf16.msra.mxu0 %v740
        %808 = vmatmul.bf16.gmra.mxu0 %v624
        %v809 = vpop.f32.mrf.mxu0
        %v810 = vadd.f32 %v796, %v809
        %v811 = vpop.f32.mrf.mxu0
        %v812 = vadd.f32 %v798, %v811
        %813 = vdwg.mxu0
        %v814 = vmax.f32 %v810, 0.0
        %v815 = vmax.f32 %v812, 0.0
        %v816 = vld [vmem:[#allocation11] sm:$0xf]
        %v817 = vld [vmem:[#allocation11 + $0x4] sm:$0xf]
        %v818 = vld [vmem:[#allocation11 + $0x8] sm:$0xf]
        %v819 = vld [vmem:[#allocation11 + $0xc] sm:$0xf]
        %v820 = vld [vmem:[#allocation11 + $0x10] sm:$0xf]
        %v821 = vld [vmem:[#allocation11 + $0x14] sm:$0xf]
        %v822 = vld [vmem:[#allocation11 + $0x18] sm:$0xf]
        %v823 = vld [vmem:[#allocation11 + $0x1c] sm:$0xf]
        %v824 = vld [vmem:[#allocation11 + $0x20] sm:$0xf]
        %v825 = vld [vmem:[#allocation11 + $0x24] sm:$0xf]
        %v826 = vld [vmem:[#allocation11 + $0x28] sm:$0xf]
        %v827 = vld [vmem:[#allocation11 + $0x2c] sm:$0xf]
        %v828 = vld [vmem:[#allocation11 + $0x30] sm:$0xf]
        %v829 = vld [vmem:[#allocation11 + $0x34] sm:$0xf]
        %v830 = vld [vmem:[#allocation11 + $0x38] sm:$0xf]
        %v831 = vld [vmem:[#allocation11 + $0x3c] sm:$0xf]
        %v832 = vld [vmem:[#allocation11 + $0x40] sm:$0xf]
        %v833 = vld [vmem:[#allocation11 + $0x44] sm:$0xf]
        %v834 = vld [vmem:[#allocation11 + $0x48] sm:$0xf]
        %v835 = vld [vmem:[#allocation11 + $0x4c] sm:$0xf]
        %v836 = vld [vmem:[#allocation11 + $0x50] sm:$0xf]
        %v837 = vld [vmem:[#allocation11 + $0x54] sm:$0xf]
        %v838 = vld [vmem:[#allocation11 + $0x58] sm:$0xf]
        %v839 = vld [vmem:[#allocation11 + $0x5c] sm:$0xf]
        %v840 = vld [vmem:[#allocation11 + $0x60] sm:$0xf]
        %v841 = vld [vmem:[#allocation11 + $0x64] sm:$0xf]
        %v842 = vld [vmem:[#allocation11 + $0x68] sm:$0xf]
        %v843 = vld [vmem:[#allocation11 + $0x6c] sm:$0xf]
        %v844 = vld [vmem:[#allocation11 + $0x70] sm:$0xf]
        %v845 = vld [vmem:[#allocation11 + $0x74] sm:$0xf]
        %v846 = vld [vmem:[#allocation11 + $0x78] sm:$0xf]
        %v847 = vld [vmem:[#allocation11 + $0x7c] sm:$0xf]
        %v848 = vld [vmem:[#allocation11 + $0x80] sm:$0xf]
        %v849 = vld [vmem:[#allocation11 + $0x84] sm:$0xf]
        %v850 = vld [vmem:[#allocation11 + $0x88] sm:$0xf]
        %v851 = vld [vmem:[#allocation11 + $0x8c] sm:$0xf]
        %v852 = vld [vmem:[#allocation11 + $0x90] sm:$0xf]
        %v853 = vld [vmem:[#allocation11 + $0x94] sm:$0xf]
        %v854 = vld [vmem:[#allocation11 + $0x98] sm:$0xf]
        %v855 = vld [vmem:[#allocation11 + $0x9c] sm:$0xf]
        %v856 = vld [vmem:[#allocation11 + $0xa0] sm:$0xf]
        %v857 = vld [vmem:[#allocation11 + $0xa4] sm:$0xf]
        %v858 = vld [vmem:[#allocation11 + $0xa8] sm:$0xf]
        %v859 = vld [vmem:[#allocation11 + $0xac] sm:$0xf]
        %v860 = vld [vmem:[#allocation11 + $0xb0] sm:$0xf]
        %v861 = vld [vmem:[#allocation11 + $0xb4] sm:$0xf]
        %v862 = vld [vmem:[#allocation11 + $0xb8] sm:$0xf]
        %v863 = vld [vmem:[#allocation11 + $0xbc] sm:$0xf]
        %v864 = vld [vmem:[%s6] sm:$0x1]
        %v865 = vpack.c.bf16 %v814, %v814
        %v866 = vpack.c.bf16 %v815, %v815
        %867 = vst [vmem:[#allocation2 + $0x8] sm:$0xf] %v865
        %868 = vst [vmem:[#allocation2 + $0xc] sm:$0xf] %v866
        %v869 = vld [vmem:[#allocation2 + $0x4] sm:$0x8]
        %v870 = vld [vmem:[#allocation2 + $0x8] sm:$0xf]
        %v871 = vld [vmem:[#allocation2 + $0xc] sm:$0x7]
        %v872 = vld [vmem:[#allocation2 + $0xc] sm:$0xf]
        %v876 = vunpack.c.l.b16 %v869
        %v877 = vunpack.c.l.b16 %v870
        %v878 = vunpack.c.l.b16 %v871
        %v879 = vpack.c.b16 %v877, %v876
        %v880 = vpack.c.b16 %v878, %v878
        %v882 = vunpack.c.l.b16 %v872
        %v883 = vpack.c.b16 %v882, %v882
        %v885 = vshrl.u32 %v879, 16
        %v887 = vshll.u32 %v879, 16
        %v889 = vrot.slane %v887, 1
        %v890 = vor.u32 %v885, %v889
        %v892 = vshll.u32 %v883, 16
        %v894 = vrot.slane %v892, 1
        %v895 = vsel %vm595, %v890, %v894
        %v896 = vshrl.u32 %v883, 16
        %v898 = vor.u32 %v896, %v894
        %v899 = vpack.c.b16 %v882, %v877
        %v900 = vrot.slane %v899, 5
        %v902 = vperm.slane %v864, 0
        %v904 = vrot.slane %v879, 3
        %v905 = vrot.slane %v880, 3
        %v906 = vsel %vm616, %v904, %v905
        %v907 = vrot.slane %v895, 3
        %v908 = vrot.slane %v898, 3
        %v909 = vsel %vm616, %v907, %v908
        %v910 = vrot.slane %v900, 3
        %v911 = vsel %vm616, %v910, %v910
        %v963 = vunpack.c.l.b16 %v816
        %v964 = vunpack.c.l.b16 %v817
        %v965 = vunpack.c.l.b16 %v818
        %v966 = vunpack.c.l.b16 %v819
        %v967 = vunpack.c.l.b16 %v820
        %v968 = vunpack.c.l.b16 %v821
        %v969 = vunpack.c.l.b16 %v822
        %v970 = vunpack.c.l.b16 %v823
        %v971 = vunpack.c.l.b16 %v824
        %v972 = vunpack.c.l.b16 %v825
        %v973 = vunpack.c.l.b16 %v826
        %v974 = vunpack.c.l.b16 %v827
        %v975 = vunpack.c.l.b16 %v828
        %v976 = vunpack.c.l.b16 %v829
        %v977 = vunpack.c.l.b16 %v830
        %v978 = vunpack.c.l.b16 %v831
        %v979 = vunpack.c.l.b16 %v832
        %v980 = vunpack.c.l.b16 %v833
        %v981 = vunpack.c.l.b16 %v834
        %v982 = vunpack.c.l.b16 %v835
        %v983 = vunpack.c.l.b16 %v836
        %v984 = vunpack.c.l.b16 %v837
        %v985 = vunpack.c.l.b16 %v838
        %v986 = vunpack.c.l.b16 %v839
        %v987 = vunpack.c.l.b16 %v840
        %v988 = vunpack.c.l.b16 %v841
        %v989 = vunpack.c.l.b16 %v842
        %v990 = vunpack.c.l.b16 %v843
        %v991 = vunpack.c.l.b16 %v844
        %v992 = vunpack.c.l.b16 %v845
        %v993 = vunpack.c.l.b16 %v846
        %v994 = vunpack.c.l.b16 %v847
        %v995 = vunpack.c.l.b16 %v848
        %v996 = vunpack.c.l.b16 %v849
        %v997 = vunpack.c.l.b16 %v850
        %v998 = vunpack.c.l.b16 %v851
        %v999 = vunpack.c.l.b16 %v852
        %v1000 = vunpack.c.l.b16 %v853
        %v1001 = vunpack.c.l.b16 %v854
        %v1002 = vunpack.c.l.b16 %v855
        %v1003 = vunpack.c.l.b16 %v856
        %v1004 = vunpack.c.l.b16 %v857
        %v1005 = vunpack.c.l.b16 %v858
        %v1006 = vunpack.c.l.b16 %v859
        %v1007 = vunpack.c.l.b16 %v860
        %v1008 = vunpack.c.l.b16 %v861
        %v1009 = vunpack.c.l.b16 %v862
        %v1010 = vunpack.c.l.b16 %v863
        %v1011 = vpack.c.b16 %v964, %v963
        %v1012 = vpack.c.b16 %v966, %v965
        %v1013 = vpack.c.b16 %v968, %v967
        %v1014 = vpack.c.b16 %v970, %v969
        %v1015 = vpack.c.b16 %v972, %v971
        %v1016 = vpack.c.b16 %v974, %v973
        %v1017 = vpack.c.b16 %v976, %v975
        %v1018 = vpack.c.b16 %v978, %v977
        %v1019 = vpack.c.b16 %v980, %v979
        %v1020 = vpack.c.b16 %v982, %v981
        %v1021 = vpack.c.b16 %v984, %v983
        %v1022 = vpack.c.b16 %v986, %v985
        %v1023 = vpack.c.b16 %v988, %v987
        %v1024 = vpack.c.b16 %v990, %v989
        %v1025 = vpack.c.b16 %v992, %v991
        %v1026 = vpack.c.b16 %v994, %v993
        %v1027 = vpack.c.b16 %v996, %v995
        %v1028 = vpack.c.b16 %v998, %v997
        %v1029 = vpack.c.b16 %v1000, %v999
        %v1030 = vpack.c.b16 %v1002, %v1001
        %v1031 = vpack.c.b16 %v1004, %v1003
        %v1032 = vpack.c.b16 %v1006, %v1005
        %v1033 = vpack.c.b16 %v1008, %v1007
        %v1034 = vpack.c.b16 %v1010, %v1009
        %1059 = vmatpush.bf16.msra.mxu0 %v1018
        %1060 = vmatpush.bf16.msra.mxu0 %v1017
        %1061 = vmatpush.bf16.msra.mxu0 %v1016
        %1062 = vmatpush.bf16.msra.mxu0 %v1015
        %1063 = vmatpush.bf16.msra.mxu0 %v1014
        %1064 = vmatpush.bf16.msra.mxu0 %v1013
        %1065 = vmatpush.bf16.msra.mxu0 %v1012
        %1066 = vmatpush.bf16.msra.mxu0 %v1011
        %1067 = vmatmul.bf16.gmra.mxu0 %v906
        %v1068 = vpop.f32.mrf.mxu0
        %v1069 = vadd.f32 %v902, %v1068
        %v1070 = vpop.f32.mrf.mxu0
        %v1071 = vadd.f32 %v902, %v1070
        %1072 = vdwg.mxu0
        %1073 = vmatpush.bf16.msra.mxu0 %v1026
        %1074 = vmatpush.bf16.msra.mxu0 %v1025
        %1075 = vmatpush.bf16.msra.mxu0 %v1024
        %1076 = vmatpush.bf16.msra.mxu0 %v1023
        %1077 = vmatpush.bf16.msra.mxu0 %v1022
        %1078 = vmatpush.bf16.msra.mxu0 %v1021
        %1079 = vmatpush.bf16.msra.mxu0 %v1020
        %1080 = vmatpush.bf16.msra.mxu0 %v1019
        %1081 = vmatmul.bf16.gmra.mxu0 %v909
        %v1082 = vpop.f32.mrf.mxu0
        %v1083 = vadd.f32 %v1069, %v1082
        %v1084 = vpop.f32.mrf.mxu0
        %v1085 = vadd.f32 %v1071, %v1084
        %1086 = vdwg.mxu0
        %1087 = vmatpush.bf16.msra.mxu0 %v1034
        %1088 = vmatpush.bf16.msra.mxu0 %v1033
        %1089 = vmatpush.bf16.msra.mxu0 %v1032
        %1090 = vmatpush.bf16.msra.mxu0 %v1031
        %1091 = vmatpush.bf16.msra.mxu0 %v1030
        %1092 = vmatpush.bf16.msra.mxu0 %v1029
        %1093 = vmatpush.bf16.msra.mxu0 %v1028
        %1094 = vmatpush.bf16.msra.mxu0 %v1027
        %1095 = vmatmul.bf16.gmra.mxu0 %v911
        %v1096 = vpop.f32.mrf.mxu0
        %v1097 = vadd.f32 %v1083, %v1096
        %v1098 = vpop.f32.mrf.mxu0
        %v1099 = vadd.f32 %v1085, %v1098
        %1100 = vdwg.mxu0
        %1101 = vadd.xlane.f32.xlu0 %v1097
        %v1102 = vpop.xlane.xlu0 %1101
        %1103 = vadd.xlane.f32.xlu0 %v1099
        %v1104 = vpop.xlane.xlu0 %1103
        %v1105 = vmul.f32 %v1102, 0.03125
        %v1106 = vmul.f32 %v1104, 0.03125
        %v1107 = vmul.f32 %v1097, %v1097
        %v1108 = vmul.f32 %v1099, %v1099
        %1109 = vadd.xlane.f32.xlu0 %v1107
        %v1110 = vpop.xlane.xlu0 %1109
        %1111 = vadd.xlane.f32.xlu0 %v1108
        %v1112 = vpop.xlane.xlu0 %1111
        %v1113 = vmul.f32 %v1110, 0.03125
        %v1114 = vmul.f32 %v1112, 0.03125
        %v1115 = vmul.f32 %v1105, %v1105
        %v1116 = vmul.f32 %v1106, %v1106
        %v1117 = vsub.f32 %v1113, %v1115
        %v1118 = vsub.f32 %v1114, %v1116
        %v1119 = vmax.f32 %v1117, 0.0
        %v1120 = vmax.f32 %v1118, 0.0
        %v1121 = vsub.f32 %v1097, %v1105
        %v1122 = vsub.f32 %v1099, %v1106
        %v1123 = vadd.f32 %v1119, 1e-05
        %v1124 = vadd.f32 %v1120, 1e-05
        %v1125 = vrsqrt.pop %v1123
        %v1126 = vmul.f32 %v1125, %v1123
        %v1127 = vmul.f32 %v1126, %v1125
        %v1128 = vmul.f32 0.5, %v1127
        %v1129 = vsub.f32 1.5, %v1128
        %v1130 = vmul.f32 %v1125, %v1129
        %vm1131 = vweird.f32 %v1123
        %vm1132 = vweird.f32 %v1125
        %vm1133 = vmor %vm1131, %vm1132
        %v1134 = vsel %vm1133, %v1125, %v1130
        %v1135 = vrsqrt.pop %v1124
        %v1136 = vmul.f32 %v1135, %v1124
        %v1137 = vmul.f32 %v1136, %v1135
        %v1138 = vmul.f32 0.5, %v1137
        %v1139 = vsub.f32 1.5, %v1138
        %v1140 = vmul.f32 %v1135, %v1139
        %vm1141 = vweird.f32 %v1124
        %vm1142 = vweird.f32 %v1135
        %vm1143 = vmor %vm1141, %vm1142
        %v1144 = vsel %vm1143, %v1135, %v1140
        %v1145 = vmul.f32 %v1121, %v1134
        %v1146 = vmul.f32 %v1122, %v1144
        %v1147 = vld [vmem:[%s7] sm:$0x1]
        %v1149 = vperm.slane %v1147, 0
        %v1151 = vmul.f32 %v1145, %v1149
        %v1152 = vmul.f32 %v1146, %v1149
        %v1153 = vld [vmem:[#allocation12] sm:$0x1]
        %v1155 = vperm.slane %v1153, 0
        %v1157 = vadd.f32 %v1151, %v1155
        %v1158 = vadd.f32 %v1152, %v1155
        %v1159 = vadd.f32 %v1157, %v521
        %v1160 = vadd.f32 %v1158, %v523
        %v1161 = vmax.f32 %v1159, 0.0
        %v1162 = vmax.f32 %v1160, 0.0
        %s1163 = scalar_lea.vmem [#allocation9], 192
        %v1164 = vld [vmem:[%s1163] sm:$0xf]
        %v1165 = vld [vmem:[%s1163 + $0x4] sm:$0xf]
        %v1166 = vld [vmem:[%s1163 + $0x8] sm:$0xf]
        %v1167 = vld [vmem:[%s1163 + $0xc] sm:$0xf]
        %v1168 = vld [vmem:[%s1163 + $0x10] sm:$0xf]
        %v1169 = vld [vmem:[%s1163 + $0x14] sm:$0xf]
        %v1170 = vld [vmem:[%s1163 + $0x18] sm:$0xf]
        %v1171 = vld [vmem:[%s1163 + $0x1c] sm:$0xf]
        %v1172 = vld [vmem:[%s1163 + $0x20] sm:$0xf]
        %v1173 = vld [vmem:[%s1163 + $0x24] sm:$0xf]
        %v1174 = vld [vmem:[%s1163 + $0x28] sm:$0xf]
        %v1175 = vld [vmem:[%s1163 + $0x2c] sm:$0xf]
        %v1176 = vld [vmem:[%s1163 + $0x30] sm:$0xf]
        %v1177 = vld [vmem:[%s1163 + $0x34] sm:$0xf]
        %v1178 = vld [vmem:[%s1163 + $0x38] sm:$0xf]
        %v1179 = vld [vmem:[%s1163 + $0x3c] sm:$0xf]
        %v1180 = vld [vmem:[%s1163 + $0x40] sm:$0xf]
        %v1181 = vld [vmem:[%s1163 + $0x44] sm:$0xf]
        %v1182 = vld [vmem:[%s1163 + $0x48] sm:$0xf]
        %v1183 = vld [vmem:[%s1163 + $0x4c] sm:$0xf]
        %v1184 = vld [vmem:[%s1163 + $0x50] sm:$0xf]
        %v1185 = vld [vmem:[%s1163 + $0x54] sm:$0xf]
        %v1186 = vld [vmem:[%s1163 + $0x58] sm:$0xf]
        %v1187 = vld [vmem:[%s1163 + $0x5c] sm:$0xf]
        %v1188 = vld [vmem:[%s1163 + $0x60] sm:$0xf]
        %v1189 = vld [vmem:[%s1163 + $0x64] sm:$0xf]
        %v1190 = vld [vmem:[%s1163 + $0x68] sm:$0xf]
        %v1191 = vld [vmem:[%s1163 + $0x6c] sm:$0xf]
        %v1192 = vld [vmem:[%s1163 + $0x70] sm:$0xf]
        %v1193 = vld [vmem:[%s1163 + $0x74] sm:$0xf]
        %v1194 = vld [vmem:[%s1163 + $0x78] sm:$0xf]
        %v1195 = vld [vmem:[%s1163 + $0x7c] sm:$0xf]
        %v1196 = vld [vmem:[%s1163 + $0x80] sm:$0xf]
        %v1197 = vld [vmem:[%s1163 + $0x84] sm:$0xf]
        %v1198 = vld [vmem:[%s1163 + $0x88] sm:$0xf]
        %v1199 = vld [vmem:[%s1163 + $0x8c] sm:$0xf]
        %v1200 = vld [vmem:[%s1163 + $0x90] sm:$0xf]
        %v1201 = vld [vmem:[%s1163 + $0x94] sm:$0xf]
        %v1202 = vld [vmem:[%s1163 + $0x98] sm:$0xf]
        %v1203 = vld [vmem:[%s1163 + $0x9c] sm:$0xf]
        %v1204 = vld [vmem:[%s1163 + $0xa0] sm:$0xf]
        %v1205 = vld [vmem:[%s1163 + $0xa4] sm:$0xf]
        %v1206 = vld [vmem:[%s1163 + $0xa8] sm:$0xf]
        %v1207 = vld [vmem:[%s1163 + $0xac] sm:$0xf]
        %v1208 = vld [vmem:[%s1163 + $0xb0] sm:$0xf]
        %v1209 = vld [vmem:[%s1163 + $0xb4] sm:$0xf]
        %v1210 = vld [vmem:[%s1163 + $0xb8] sm:$0xf]
        %v1211 = vld [vmem:[%s1163 + $0xbc] sm:$0xf]
        %s1212 = scalar_lea.vmem %s4, 1
        %v1213 = vld [vmem:[%s1212] sm:$0x1]
        %v1214 = vpack.c.bf16 %v1161, %v1161
        %v1215 = vpack.c.bf16 %v1162, %v1162
        %1216 = vst [vmem:[#allocation2 + $0x8] sm:$0xf] %v1214
        %1217 = vst [vmem:[#allocation2 + $0xc] sm:$0xf] %v1215
        %v1218 = vld [vmem:[#allocation2 + $0x4] sm:$0xc]
        %v1219 = vld [vmem:[#allocation2 + $0x8] sm:$0xf]
        %v1220 = vld [vmem:[#allocation2 + $0xc] sm:$0x3]
        %v1221 = vld [vmem:[#allocation2 + $0x4] sm:$0x8]
        %v1222 = vld [vmem:[#allocation2 + $0xc] sm:$0x7]
        %v1223 = vld [vmem:[#allocation2 + $0xc] sm:$0xf]
        %v1227 = vunpack.c.l.b16 %v1218
        %v1228 = vunpack.c.l.b16 %v1219
        %v1229 = vunpack.c.l.b16 %v1220
        %v1230 = vpack.c.b16 %v1228, %v1227
        %v1231 = vpack.c.b16 %v1229, %v1229
        %v1234 = vunpack.c.l.b16 %v1221
        %v1235 = vunpack.c.l.b16 %v1222
        %v1236 = vpack.c.b16 %v1228, %v1234
        %v1237 = vpack.c.b16 %v1235, %v1235
        %vm1238 = vcmask 1046528
        %v1239 = vrot.slane %v1236, 1
        %v1240 = vrot.slane %v1237, 1
        %v1241 = vsel %vm1238, %v1239, %v1240
        %v1243 = vunpack.c.l.b16 %v1223
        %v1244 = vpack.c.b16 %v1243, %v1228
        %v1245 = vrot.slane %v1244, 6
        %v1247 = vperm.slane %v1213, 0
        %vm1249 = vcmask 1045504
        %v1250 = vrot.slane %v1230, 2
        %v1251 = vrot.slane %v1231, 2
        %v1252 = vsel %vm1249, %v1250, %v1251
        %v1253 = vrot.slane %v1241, 2
        %v1254 = vrot.slane %v1240, 2
        %v1255 = vsel %vm1249, %v1253, %v1254
        %v1256 = vrot.slane %v1245, 2
        %v1257 = vsel %vm1249, %v1256, %v1256
        %v1309 = vunpack.c.l.b16 %v1164
        %v1310 = vunpack.c.l.b16 %v1165
        %v1311 = vunpack.c.l.b16 %v1166
        %v1312 = vunpack.c.l.b16 %v1167
        %v1313 = vunpack.c.l.b16 %v1168
        %v1314 = vunpack.c.l.b16 %v1169
        %v1315 = vunpack.c.l.b16 %v1170
        %v1316 = vunpack.c.l.b16 %v1171
        %v1317 = vunpack.c.l.b16 %v1172
        %v1318 = vunpack.c.l.b16 %v1173
        %v1319 = vunpack.c.l.b16 %v1174
        %v1320 = vunpack.c.l.b16 %v1175
        %v1321 = vunpack.c.l.b16 %v1176
        %v1322 = vunpack.c.l.b16 %v1177
        %v1323 = vunpack.c.l.b16 %v1178
        %v1324 = vunpack.c.l.b16 %v1179
        %v1325 = vunpack.c.l.b16 %v1180
        %v1326 = vunpack.c.l.b16 %v1181
        %v1327 = vunpack.c.l.b16 %v1182
        %v1328 = vunpack.c.l.b16 %v1183
        %v1329 = vunpack.c.l.b16 %v1184
        %v1330 = vunpack.c.l.b16 %v1185
        %v1331 = vunpack.c.l.b16 %v1186
        %v1332 = vunpack.c.l.b16 %v1187
        %v1333 = vunpack.c.l.b16 %v1188
        %v1334 = vunpack.c.l.b16 %v1189
        %v1335 = vunpack.c.l.b16 %v1190
        %v1336 = vunpack.c.l.b16 %v1191
        %v1337 = vunpack.c.l.b16 %v1192
        %v1338 = vunpack.c.l.b16 %v1193
        %v1339 = vunpack.c.l.b16 %v1194
        %v1340 = vunpack.c.l.b16 %v1195
        %v1341 = vunpack.c.l.b16 %v1196
        %v1342 = vunpack.c.l.b16 %v1197
        %v1343 = vunpack.c.l.b16 %v1198
        %v1344 = vunpack.c.l.b16 %v1199
        %v1345 = vunpack.c.l.b16 %v1200
        %v1346 = vunpack.c.l.b16 %v1201
        %v1347 = vunpack.c.l.b16 %v1202
        %v1348 = vunpack.c.l.b16 %v1203
        %v1349 = vunpack.c.l.b16 %v1204
        %v1350 = vunpack.c.l.b16 %v1205
        %v1351 = vunpack.c.l.b16 %v1206
        %v1352 = vunpack.c.l.b16 %v1207
        %v1353 = vunpack.c.l.b16 %v1208
        %v1354 = vunpack.c.l.b16 %v1209
        %v1355 = vunpack.c.l.b16 %v1210
        %v1356 = vunpack.c.l.b16 %v1211
        %v1357 = vpack.c.b16 %v1310, %v1309
        %v1358 = vpack.c.b16 %v1312, %v1311
        %v1359 = vpack.c.b16 %v1314, %v1313
        %v1360 = vpack.c.b16 %v1316, %v1315
        %v1361 = vpack.c.b16 %v1318, %v1317
        %v1362 = vpack.c.b16 %v1320, %v1319
        %v1363 = vpack.c.b16 %v1322, %v1321
        %v1364 = vpack.c.b16 %v1324, %v1323
        %v1365 = vpack.c.b16 %v1326, %v1325
        %v1366 = vpack.c.b16 %v1328, %v1327
        %v1367 = vpack.c.b16 %v1330, %v1329
        %v1368 = vpack.c.b16 %v1332, %v1331
        %v1369 = vpack.c.b16 %v1334, %v1333
        %v1370 = vpack.c.b16 %v1336, %v1335
        %v1371 = vpack.c.b16 %v1338, %v1337
        %v1372 = vpack.c.b16 %v1340, %v1339
        %v1373 = vpack.c.b16 %v1342, %v1341
        %v1374 = vpack.c.b16 %v1344, %v1343
        %v1375 = vpack.c.b16 %v1346, %v1345
        %v1376 = vpack.c.b16 %v1348, %v1347
        %v1377 = vpack.c.b16 %v1350, %v1349
        %v1378 = vpack.c.b16 %v1352, %v1351
        %v1379 = vpack.c.b16 %v1354, %v1353
        %v1380 = vpack.c.b16 %v1356, %v1355
        %1405 = vmatpush.bf16.msra.mxu0 %v1364
        %1406 = vmatpush.bf16.msra.mxu0 %v1363
        %1407 = vmatpush.bf16.msra.mxu0 %v1362
        %1408 = vmatpush.bf16.msra.mxu0 %v1361
        %1409 = vmatpush.bf16.msra.mxu0 %v1360
        %1410 = vmatpush.bf16.msra.mxu0 %v1359
        %1411 = vmatpush.bf16.msra.mxu0 %v1358
        %1412 = vmatpush.bf16.msra.mxu0 %v1357
        %1413 = vmatmul.bf16.gmra.mxu0 %v1252
        %v1414 = vpop.f32.mrf.mxu0
        %v1415 = vadd.f32 %v1247, %v1414
        %v1416 = vpop.f32.mrf.mxu0
        %v1417 = vadd.f32 %v1247, %v1416
        %1418 = vdwg.mxu0
        %1419 = vmatpush.bf16.msra.mxu0 %v1372
        %1420 = vmatpush.bf16.msra.mxu0 %v1371
        %1421 = vmatpush.bf16.msra.mxu0 %v1370
        %1422 = vmatpush.bf16.msra.mxu0 %v1369
        %1423 = vmatpush.bf16.msra.mxu0 %v1368
        %1424 = vmatpush.bf16.msra.mxu0 %v1367
        %1425 = vmatpush.bf16.msra.mxu0 %v1366
        %1426 = vmatpush.bf16.msra.mxu0 %v1365
        %1427 = vmatmul.bf16.gmra.mxu0 %v1255
        %v1428 = vpop.f32.mrf.mxu0
        %v1429 = vadd.f32 %v1415, %v1428
        %v1430 = vpop.f32.mrf.mxu0
        %v1431 = vadd.f32 %v1417, %v1430
        %1432 = vdwg.mxu0
        %1433 = vmatpush.bf16.msra.mxu0 %v1380
        %1434 = vmatpush.bf16.msra.mxu0 %v1379
        %1435 = vmatpush.bf16.msra.mxu0 %v1378
        %1436 = vmatpush.bf16.msra.mxu0 %v1377
        %1437 = vmatpush.bf16.msra.mxu0 %v1376
        %1438 = vmatpush.bf16.msra.mxu0 %v1375
        %1439 = vmatpush.bf16.msra.mxu0 %v1374
        %1440 = vmatpush.bf16.msra.mxu0 %v1373
        %1441 = vmatmul.bf16.gmra.mxu0 %v1257
        %v1442 = vpop.f32.mrf.mxu0
        %v1443 = vadd.f32 %v1429, %v1442
        %v1444 = vpop.f32.mrf.mxu0
        %v1445 = vadd.f32 %v1431, %v1444
        %1446 = vdwg.mxu0
        %v1447 = vmax.f32 %v1443, 0.0
        %v1448 = vmax.f32 %v1445, 0.0
        %s1449 = scalar_lea.vmem [#allocation11], 192
        %v1450 = vld [vmem:[%s1449] sm:$0xf]
        %v1451 = vld [vmem:[%s1449 + $0x4] sm:$0xf]
        %v1452 = vld [vmem:[%s1449 + $0x8] sm:$0xf]
        %v1453 = vld [vmem:[%s1449 + $0xc] sm:$0xf]
        %v1454 = vld [vmem:[%s1449 + $0x10] sm:$0xf]
        %v1455 = vld [vmem:[%s1449 + $0x14] sm:$0xf]
        %v1456 = vld [vmem:[%s1449 + $0x18] sm:$0xf]
        %v1457 = vld [vmem:[%s1449 + $0x1c] sm:$0xf]
        %v1458 = vld [vmem:[%s1449 + $0x20] sm:$0xf]
        %v1459 = vld [vmem:[%s1449 + $0x24] sm:$0xf]
        %v1460 = vld [vmem:[%s1449 + $0x28] sm:$0xf]
        %v1461 = vld [vmem:[%s1449 + $0x2c] sm:$0xf]
        %v1462 = vld [vmem:[%s1449 + $0x30] sm:$0xf]
        %v1463 = vld [vmem:[%s1449 + $0x34] sm:$0xf]
        %v1464 = vld [vmem:[%s1449 + $0x38] sm:$0xf]
        %v1465 = vld [vmem:[%s1449 + $0x3c] sm:$0xf]
        %v1466 = vld [vmem:[%s1449 + $0x40] sm:$0xf]
        %v1467 = vld [vmem:[%s1449 + $0x44] sm:$0xf]
        %v1468 = vld [vmem:[%s1449 + $0x48] sm:$0xf]
        %v1469 = vld [vmem:[%s1449 + $0x4c] sm:$0xf]
        %v1470 = vld [vmem:[%s1449 + $0x50] sm:$0xf]
        %v1471 = vld [vmem:[%s1449 + $0x54] sm:$0xf]
        %v1472 = vld [vmem:[%s1449 + $0x58] sm:$0xf]
        %v1473 = vld [vmem:[%s1449 + $0x5c] sm:$0xf]
        %v1474 = vld [vmem:[%s1449 + $0x60] sm:$0xf]
        %v1475 = vld [vmem:[%s1449 + $0x64] sm:$0xf]
        %v1476 = vld [vmem:[%s1449 + $0x68] sm:$0xf]
        %v1477 = vld [vmem:[%s1449 + $0x6c] sm:$0xf]
        %v1478 = vld [vmem:[%s1449 + $0x70] sm:$0xf]
        %v1479 = vld [vmem:[%s1449 + $0x74] sm:$0xf]
        %v1480 = vld [vmem:[%s1449 + $0x78] sm:$0xf]
        %v1481 = vld [vmem:[%s1449 + $0x7c] sm:$0xf]
        %v1482 = vld [vmem:[%s1449 + $0x80] sm:$0xf]
        %v1483 = vld [vmem:[%s1449 + $0x84] sm:$0xf]
        %v1484 = vld [vmem:[%s1449 + $0x88] sm:$0xf]
        %v1485 = vld [vmem:[%s1449 + $0x8c] sm:$0xf]
        %v1486 = vld [vmem:[%s1449 + $0x90] sm:$0xf]
        %v1487 = vld [vmem:[%s1449 + $0x94] sm:$0xf]
        %v1488 = vld [vmem:[%s1449 + $0x98] sm:$0xf]
        %v1489 = vld [vmem:[%s1449 + $0x9c] sm:$0xf]
        %v1490 = vld [vmem:[%s1449 + $0xa0] sm:$0xf]
        %v1491 = vld [vmem:[%s1449 + $0xa4] sm:$0xf]
        %v1492 = vld [vmem:[%s1449 + $0xa8] sm:$0xf]
        %v1493 = vld [vmem:[%s1449 + $0xac] sm:$0xf]
        %v1494 = vld [vmem:[%s1449 + $0xb0] sm:$0xf]
        %v1495 = vld [vmem:[%s1449 + $0xb4] sm:$0xf]
        %v1496 = vld [vmem:[%s1449 + $0xb8] sm:$0xf]
        %v1497 = vld [vmem:[%s1449 + $0xbc] sm:$0xf]
        %s1498 = scalar_lea.vmem %s6, 1
        %v1499 = vld [vmem:[%s1498] sm:$0x1]
        %v1500 = vpack.c.bf16 %v1447, %v1447
        %v1501 = vpack.c.bf16 %v1448, %v1448
        %1502 = vst [vmem:[#allocation2 + $0x8] sm:$0xf] %v1500
        %1503 = vst [vmem:[#allocation2 + $0xc] sm:$0xf] %v1501
        %v1504 = vld [vmem:[#allocation2 + $0x4] sm:$0xc]
        %v1505 = vld [vmem:[#allocation2 + $0x8] sm:$0xf]
        %v1506 = vld [vmem:[#allocation2 + $0xc] sm:$0x3]
        %v1507 = vld [vmem:[#allocation2 + $0x4] sm:$0x8]
        %v1508 = vld [vmem:[#allocation2 + $0xc] sm:$0x7]
        %v1509 = vld [vmem:[#allocation2 + $0xc] sm:$0xf]
        %v1513 = vunpack.c.l.b16 %v1504
        %v1514 = vunpack.c.l.b16 %v1505
        %v1515 = vunpack.c.l.b16 %v1506
        %v1516 = vpack.c.b16 %v1514, %v1513
        %v1517 = vpack.c.b16 %v1515, %v1515
        %v1520 = vunpack.c.l.b16 %v1507
        %v1521 = vunpack.c.l.b16 %v1508
        %v1522 = vpack.c.b16 %v1514, %v1520
        %v1523 = vpack.c.b16 %v1521, %v1521
        %v1524 = vrot.slane %v1522, 1
        %v1525 = vrot.slane %v1523, 1
        %v1526 = vsel %vm1238, %v1524, %v1525
        %v1528 = vunpack.c.l.b16 %v1509
        %v1529 = vpack.c.b16 %v1528, %v1514
        %v1530 = vrot.slane %v1529, 6
        %v1532 = vperm.slane %v1499, 0
        %v1534 = vrot.slane %v1516, 2
        %v1535 = vrot.slane %v1517, 2
        %v1536 = vsel %vm1249, %v1534, %v1535
        %v1537 = vrot.slane %v1526, 2
        %v1538 = vrot.slane %v1525, 2
        %v1539 = vsel %vm1249, %v1537, %v1538
        %v1540 = vrot.slane %v1530, 2
        %v1541 = vsel %vm1249, %v1540, %v1540
        %v1593 = vunpack.c.l.b16 %v1450
        %v1594 = vunpack.c.l.b16 %v1451
        %v1595 = vunpack.c.l.b16 %v1452
        %v1596 = vunpack.c.l.b16 %v1453
        %v1597 = vunpack.c.l.b16 %v1454
        %v1598 = vunpack.c.l.b16 %v1455
        %v1599 = vunpack.c.l.b16 %v1456
        %v1600 = vunpack.c.l.b16 %v1457
        %v1601 = vunpack.c.l.b16 %v1458
        %v1602 = vunpack.c.l.b16 %v1459
        %v1603 = vunpack.c.l.b16 %v1460
        %v1604 = vunpack.c.l.b16 %v1461
        %v1605 = vunpack.c.l.b16 %v1462
        %v1606 = vunpack.c.l.b16 %v1463
        %v1607 = vunpack.c.l.b16 %v1464
        %v1608 = vunpack.c.l.b16 %v1465
        %v1609 = vunpack.c.l.b16 %v1466
        %v1610 = vunpack.c.l.b16 %v1467
        %v1611 = vunpack.c.l.b16 %v1468
        %v1612 = vunpack.c.l.b16 %v1469
        %v1613 = vunpack.c.l.b16 %v1470
        %v1614 = vunpack.c.l.b16 %v1471
        %v1615 = vunpack.c.l.b16 %v1472
        %v1616 = vunpack.c.l.b16 %v1473
        %v1617 = vunpack.c.l.b16 %v1474
        %v1618 = vunpack.c.l.b16 %v1475
        %v1619 = vunpack.c.l.b16 %v1476
        %v1620 = vunpack.c.l.b16 %v1477
        %v1621 = vunpack.c.l.b16 %v1478
        %v1622 = vunpack.c.l.b16 %v1479
        %v1623 = vunpack.c.l.b16 %v1480
        %v1624 = vunpack.c.l.b16 %v1481
        %v1625 = vunpack.c.l.b16 %v1482
        %v1626 = vunpack.c.l.b16 %v1483
        %v1627 = vunpack.c.l.b16 %v1484
        %v1628 = vunpack.c.l.b16 %v1485
        %v1629 = vunpack.c.l.b16 %v1486
        %v1630 = vunpack.c.l.b16 %v1487
        %v1631 = vunpack.c.l.b16 %v1488
        %v1632 = vunpack.c.l.b16 %v1489
        %v1633 = vunpack.c.l.b16 %v1490
        %v1634 = vunpack.c.l.b16 %v1491
        %v1635 = vunpack.c.l.b16 %v1492
        %v1636 = vunpack.c.l.b16 %v1493
        %v1637 = vunpack.c.l.b16 %v1494
        %v1638 = vunpack.c.l.b16 %v1495
        %v1639 = vunpack.c.l.b16 %v1496
        %v1640 = vunpack.c.l.b16 %v1497
        %v1641 = vpack.c.b16 %v1594, %v1593
        %v1642 = vpack.c.b16 %v1596, %v1595
        %v1643 = vpack.c.b16 %v1598, %v1597
        %v1644 = vpack.c.b16 %v1600, %v1599
        %v1645 = vpack.c.b16 %v1602, %v1601
        %v1646 = vpack.c.b16 %v1604, %v1603
        %v1647 = vpack.c.b16 %v1606, %v1605
        %v1648 = vpack.c.b16 %v1608, %v1607
        %v1649 = vpack.c.b16 %v1610, %v1609
        %v1650 = vpack.c.b16 %v1612, %v1611
        %v1651 = vpack.c.b16 %v1614, %v1613
        %v1652 = vpack.c.b16 %v1616, %v1615
        %v1653 = vpack.c.b16 %v1618, %v1617
        %v1654 = vpack.c.b16 %v1620, %v1619
        %v1655 = vpack.c.b16 %v1622, %v1621
        %v1656 = vpack.c.b16 %v1624, %v1623
        %v1657 = vpack.c.b16 %v1626, %v1625
        %v1658 = vpack.c.b16 %v1628, %v1627
        %v1659 = vpack.c.b16 %v1630, %v1629
        %v1660 = vpack.c.b16 %v1632, %v1631
        %v1661 = vpack.c.b16 %v1634, %v1633
        %v1662 = vpack.c.b16 %v1636, %v1635
        %v1663 = vpack.c.b16 %v1638, %v1637
        %v1664 = vpack.c.b16 %v1640, %v1639
        %1689 = vmatpush.bf16.msra.mxu0 %v1648
        %1690 = vmatpush.bf16.msra.mxu0 %v1647
        %1691 = vmatpush.bf16.msra.mxu0 %v1646
        %1692 = vmatpush.bf16.msra.mxu0 %v1645
        %1693 = vmatpush.bf16.msra.mxu0 %v1644
        %1694 = vmatpush.bf16.msra.mxu0 %v1643
        %1695 = vmatpush.bf16.msra.mxu0 %v1642
        %1696 = vmatpush.bf16.msra.mxu0 %v1641
        %1697 = vmatmul.bf16.gmra.mxu0 %v1536
        %v1698 = vpop.f32.mrf.mxu0
        %v1699 = vadd.f32 %v1532, %v1698
        %v1700 = vpop.f32.mrf.mxu0
        %v1701 = vadd.f32 %v1532, %v1700
        %1702 = vdwg.mxu0
        %1703 = vmatpush.bf16.msra.mxu0 %v1656
        %1704 = vmatpush.bf16.msra.mxu0 %v1655
        %1705 = vmatpush.bf16.msra.mxu0 %v1654
        %1706 = vmatpush.bf16.msra.mxu0 %v1653
        %1707 = vmatpush.bf16.msra.mxu0 %v1652
        %1708 = vmatpush.bf16.msra.mxu0 %v1651
        %1709 = vmatpush.bf16.msra.mxu0 %v1650
        %1710 = vmatpush.bf16.msra.mxu0 %v1649
        %1711 = vmatmul.bf16.gmra.mxu0 %v1539
        %v1712 = vpop.f32.mrf.mxu0
        %v1713 = vadd.f32 %v1699, %v1712
        %v1714 = vpop.f32.mrf.mxu0
        %v1715 = vadd.f32 %v1701, %v1714
        %1716 = vdwg.mxu0
        %1717 = vmatpush.bf16.msra.mxu0 %v1664
        %1718 = vmatpush.bf16.msra.mxu0 %v1663
        %1719 = vmatpush.bf16.msra.mxu0 %v1662
        %1720 = vmatpush.bf16.msra.mxu0 %v1661
        %1721 = vmatpush.bf16.msra.mxu0 %v1660
        %1722 = vmatpush.bf16.msra.mxu0 %v1659
        %1723 = vmatpush.bf16.msra.mxu0 %v1658
        %1724 = vmatpush.bf16.msra.mxu0 %v1657
        %1725 = vmatmul.bf16.gmra.mxu0 %v1541
        %v1726 = vpop.f32.mrf.mxu0
        %v1727 = vadd.f32 %v1713, %v1726
        %v1728 = vpop.f32.mrf.mxu0
        %v1729 = vadd.f32 %v1715, %v1728
        %1730 = vdwg.mxu0
        %1731 = vadd.xlane.f32.xlu0 %v1727
        %v1732 = vpop.xlane.xlu0 %1731
        %1733 = vadd.xlane.f32.xlu0 %v1729
        %v1734 = vpop.xlane.xlu0 %1733
        %v1735 = vmul.f32 %v1732, 0.03125
        %v1736 = vmul.f32 %v1734, 0.03125
        %v1737 = vmul.f32 %v1727, %v1727
        %v1738 = vmul.f32 %v1729, %v1729
        %1739 = vadd.xlane.f32.xlu0 %v1737
        %v1740 = vpop.xlane.xlu0 %1739
        %1741 = vadd.xlane.f32.xlu0 %v1738
        %v1742 = vpop.xlane.xlu0 %1741
        %v1743 = vmul.f32 %v1740, 0.03125
        %v1744 = vmul.f32 %v1742, 0.03125
        %v1745 = vmul.f32 %v1735, %v1735
        %v1746 = vmul.f32 %v1736, %v1736
        %v1747 = vsub.f32 %v1743, %v1745
        %v1748 = vsub.f32 %v1744, %v1746
        %v1749 = vmax.f32 %v1747, 0.0
        %v1750 = vmax.f32 %v1748, 0.0
        %v1751 = vsub.f32 %v1727, %v1735
        %v1752 = vsub.f32 %v1729, %v1736
        %v1753 = vadd.f32 %v1749, 1e-05
        %v1754 = vadd.f32 %v1750, 1e-05
        %v1755 = vrsqrt.pop %v1753
        %v1756 = vmul.f32 %v1755, %v1753
        %v1757 = vmul.f32 %v1756, %v1755
        %v1758 = vmul.f32 0.5, %v1757
        %v1759 = vsub.f32 1.5, %v1758
        %v1760 = vmul.f32 %v1755, %v1759
        %vm1761 = vweird.f32 %v1753
        %vm1762 = vweird.f32 %v1755
        %vm1763 = vmor %vm1761, %vm1762
        %v1764 = vsel %vm1763, %v1755, %v1760
        %v1765 = vrsqrt.pop %v1754
        %v1766 = vmul.f32 %v1765, %v1754
        %v1767 = vmul.f32 %v1766, %v1765
        %v1768 = vmul.f32 0.5, %v1767
        %v1769 = vsub.f32 1.5, %v1768
        %v1770 = vmul.f32 %v1765, %v1769
        %vm1771 = vweird.f32 %v1754
        %vm1772 = vweird.f32 %v1765
        %vm1773 = vmor %vm1771, %vm1772
        %v1774 = vsel %vm1773, %v1765, %v1770
        %v1775 = vmul.f32 %v1751, %v1764
        %v1776 = vmul.f32 %v1752, %v1774
        %s1777 = scalar_lea.vmem %s7, 1
        %v1778 = vld [vmem:[%s1777] sm:$0x1]
        %v1780 = vperm.slane %v1778, 0
        %v1782 = vmul.f32 %v1775, %v1780
        %v1783 = vmul.f32 %v1776, %v1780
        %s1784 = scalar_lea.vmem [#allocation12], 1
        %v1785 = vld [vmem:[%s1784] sm:$0x1]
        %v1787 = vperm.slane %v1785, 0
        %v1789 = vadd.f32 %v1782, %v1787
        %v1790 = vadd.f32 %v1783, %v1787
        %v1791 = vadd.f32 %v1789, %v1161
        %v1792 = vadd.f32 %v1790, %v1162
        %v1793 = vmax.f32 %v1791, 0.0
        %v1794 = vmax.f32 %v1792, 0.0
        %1795 = vst [vmem:[%s433] sm:$0xff] %v1793
        %1796 = vst [vmem:[%s433 + $0x8] sm:$0xff] %v1794
        %s1797 = sand.u32 %s231, 1
        %s1798 = scalar_lea.sflag [#allocation5], %s1797
        %s1799 = sand.u32 %s231, 1
        %s1800 = smul.addr %s1799, 16
        %s1801 = scalar_lea.vmem [#allocation14], %s1800
        // Predicated region
        $region81: #{tpu_custom_call.1} parent=55 // pred_check
          %p1802 = pneg %p241
        $region82: #{tpu_custom_call.1} parent=55 // pred_check_branch
          %1804 = sbr.rel (%p1802) target = $region84
        $region83: #{tpu_custom_call.1} parent=55 // pred_region
          %1806 = vsyncadd %s1798, 0
          %s1807 = smul.addr %s29, 2
          %s1808 = smul.addr %s1807, 8
          %s1809 = scalar_lea.hbm %s9, %s1808
          %s1810 = sshll.u32 %s1801, 4
          %s1811 = int_to_ptr.vmem [resolvable:$true] %s1810
          %s1812 = sshll.u32 %s1809, 4
          %s1813 = int_to_ptr.hbm [resolvable:$true] %s1812
          %1818 = dma.vmem_to_hbm [thread:$0]  %s1811, 256, %s1813, %s1798, 128, 128, 8
        $region84: #{tpu_custom_call.1} parent=55 // pred_fallthru
          _
      $region56: #{tpu_custom_call.1} parent=5 // pred_fallthru
        _
      %p1819 = scmp.le.s32.totalorder 2, %s24
      // Predicated region
      $region85: #{tpu_custom_call.1} parent=5 // pred_check
        %p1820 = pneg %p1819
      $region86: #{tpu_custom_call.1} parent=5 // pred_check_branch
        %1822 = sbr.rel (%p1820) target = $region88
      $region87: #{tpu_custom_call.1} parent=5 // pred_region
        %s1823 = ssub.s32 %s24, 2
        // Predicated region
        $region89: #{tpu_custom_call.1} parent=87 // pred_check
          %p1824 = pneg %p247
        $region90: #{tpu_custom_call.1} parent=87 // pred_check_branch
          %1826 = sbr.rel (%p1824) target = $region92
        $region91: #{tpu_custom_call.1} parent=87 // pred_region
          %s1827 = sand.u32 %s232, 1
          %s1828 = scalar_lea.sflag [#allocation5], %s1827
          %s1829 = sand.u32 %s232, 1
          %s1830 = smul.addr %s1829, 16
          %s1831 = scalar_lea.vmem [#allocation14], %s1830
          %1833 = dma.done %s1828, 256
        $region92: #{tpu_custom_call.1} parent=87 // pred_fallthru
          _
      $region88: #{tpu_custom_call.1} parent=5 // pred_fallthru
        _
    $region6: #{tpu_custom_call.1} parent=1 // loop_footer
      %s28 = sadd.s32 1, %s24
    $region7: #{tpu_custom_call.1} parent=1 // loop_footer_branch
      %23 = sbr.rel target = $region3
    $region8: #{tpu_custom_call.1} parent=1 // loop_exit
      _
    %1834 = vsyncpa [#allocation4], 1
    %s1835 = scalar_lea.sflag [#allocation4], 1
    %1836 = vsyncpa %s1835, 1
    %1837 = vsyncpa [#allocation7], 1
    %1838 = vsyncpa [#allocation10], 1
    %1839 = vsyncpa [#allocation13], 1
    %1840 = vsyncpa [#allocation5], 1
    %s1841 = scalar_lea.sflag [#allocation5], 1
    %1842 = vsyncpa %s1841, 1

</llo_original>
